<compile_context>
chip_gen: v7x
topology: tpu7x:2x2x1
jax: 0.10.0
libtpu: 0.0.40
codegen_flags: <defaults>
</compile_context>

<pallas_src>
import jax
import jax.numpy as jnp
from jax import lax
from jax.experimental import pallas as pl
from jax.experimental.pallas import tpu as pltpu
import numpy as np


# ----------------------------- host-side weight folding -----------------------------

def _bilinear_matrix(out_size: int, in_size: int) -> np.ndarray:
    """(out, in) interpolation matrix: bilinear, align_corners=True."""
    o = np.arange(out_size, dtype=np.float64)
    if out_size > 1:
        src = o * (in_size - 1) / (out_size - 1)
    else:
        src = np.zeros_like(o)
    i0 = np.clip(np.floor(src).astype(np.int64), 0, max(in_size - 2, 0))
    frac = src - i0
    A = np.zeros((out_size, in_size), np.float64)
    A[np.arange(out_size), i0] += 1.0 - frac
    A[np.arange(out_size), np.minimum(i0 + 1, in_size - 1)] += frac
    return A.astype(np.float32)


def _block_diag(A: np.ndarray, reps: int) -> np.ndarray:
    """A (a, b) -> (reps*a, reps*b) block-diagonal."""
    a, b = A.shape
    out = np.zeros((reps * a, reps * b), np.float32)
    for i in range(reps):
        out[i * a:(i + 1) * a, i * b:(i + 1) * b] = A
    return out


def _conv3x3_rowshift_weight(w_hwio, width: int):
    """HWIO (3,3,Ci,Co) conv weight -> (3, width*Ci, width*Co) bf16 folded weight.

    Slice k (k = 0,1,2) multiplies the row-shifted activation x[r + (k-1), :]; within a
    slice the matrix is block-banded: entry [(w+dx)*Ci+ci, w*Co+co] = w[k, dx+1, ci, co]
    for dx in {-1,0,1}, folding the horizontal taps and the channel contraction into the
    same matmul.  (At production F one would fold per width group gw = 128//F or 256//F
    instead of the full `width`; at these demo shapes that target already >= width*F.)
    """
    w = np.asarray(w_hwio, np.float32)
    _, _, ci, co = w.shape
    out = np.zeros((3, width * ci, width * co), np.float32)
    for ky in range(3):
        for kx in range(3):
            dx = kx - 1
            for wc in range(width):
                wp = wc + dx
                if 0 <= wp < width:
                    out[ky, wp * ci:(wp + 1) * ci, wc * co:(wc + 1) * co] = w[ky, kx]
    return jnp.asarray(out, jnp.bfloat16)


def _upsample_col_weight(aw: np.ndarray, c: int) -> np.ndarray:
    """aw (OW, W) -> (W*c, OW*c): aw[ow, w] * I_c blocks (column pass, folded layout)."""
    ow_n, w_n = aw.shape
    eye = np.eye(c, dtype=np.float32)
    out = np.zeros((w_n * c, ow_n * c), np.float32)
    for ow in range(ow_n):
        for w in range(w_n):
            out[w * c:(w + 1) * c, ow * c:(ow + 1) * c] = aw[ow, w] * eye
    return out


def _bias_tile(b, width: int):
    return jnp.asarray(np.tile(np.asarray(b, np.float32), width)[None, :])


def _pick_group_width(n_cols: int, c: int, lane_target: int = 256) -> int:
    """Largest gw dividing n_cols with gw*c a multiple of 128 and <= lane_target.

    Falls back to n_cols (full-width fold) if no such gw exists.
    """
    best = n_cols
    for gw in range(1, n_cols + 1):
        if n_cols % gw:
            continue
        k = gw * c
        if k % 128 == 0 and k <= lane_target:
            best = gw
    return best


# ----------------------------------- kernel body ------------------------------------

def _conv3x3_folded(x, w3_ref, b_ref):
    """'SAME' 3x3 conv in folded (rows, width*C) layout.

    Three accumulating bf16 matmuls against the row-shift blocks of the folded weight;
    the +-1 row shifts are XLU sublane rolls with a boundary mask (no zero-row concat).
    """
    R = x.shape[0]
    rows = lax.broadcasted_iota(jnp.int32, x.shape, 0)
    x_up = jnp.where(rows >= 1, pltpu.roll(x, 1, 0), 0.0)          # row r holds x[r-1]
    x_dn = jnp.where(rows < R - 1, pltpu.roll(x, R - 1, 0), 0.0)   # row r holds x[r+1]
    acc = jnp.dot(x_up.astype(jnp.bfloat16), w3_ref[0],
                  preferred_element_type=jnp.float32)
    acc = acc + jnp.dot(x.astype(jnp.bfloat16), w3_ref[1],
                        preferred_element_type=jnp.float32)
    acc = acc + jnp.dot(x_dn.astype(jnp.bfloat16), w3_ref[2],
                        preferred_element_type=jnp.float32)
    return acc + b_ref[...]


def _rcu_folded(x, wa_ref, ba_ref, wb_ref, bb_ref):
    """ResidualConvUnit: conv2(relu(conv1(relu(x)))) + x, folded layout, f32 carry."""
    h = _conv3x3_folded(jnp.maximum(x, 0.0), wa_ref, ba_ref)
    h = _conv3x3_folded(jnp.maximum(h, 0.0), wb_ref, bb_ref)
    return h + x


def _djf_kernel(x1_ref, x2_ref, g_ref,
                w1a_ref, b1a_ref, w1b_ref, b1b_ref,
                ah_ref, mcol_ref, wiu_ref, wig_ref, bi_ref,
                w2a_ref, b2a_ref, w2b_ref, b2b_ref,
                out_ref):
    x1 = x1_ref[0].astype(jnp.float32)      # (H,  W*F)   folded
    x2 = x2_ref[0].astype(jnp.float32)      # (H,  W*F)

    # output = xs[1] + resConfUnit1(xs[2])
    s = x1 + _rcu_folded(x2, w1a_ref, b1a_ref, w1b_ref, b1b_ref)

    # x2 bilinear upsample (align_corners=True): row pass (per-row gather+blend as one
    # small matmul) then lane-dense folded column pass.
    t = jnp.dot(ah_ref[...], s.astype(jnp.bfloat16),
                preferred_element_type=jnp.float32)                  # (OH, W*F)
    u = jnp.dot(t.astype(jnp.bfloat16), mcol_ref[...],
                preferred_element_type=jnp.float32)                  # (OH, OW*F)

    # inter = Conv1x1(ReLU(concat([up, guidance], ch))): up-part matmul + width-grouped
    # guidance matmuls with one dense (gw*G, gw*F) weight reused across groups.
    z = jnp.dot(jnp.maximum(u, 0.0).astype(jnp.bfloat16), wiu_ref[...],
                preferred_element_type=jnp.float32)                  # (OH, OW*F)
    gl, _ = wig_ref.shape                                            # gw*G lanes / group
    ngrp = g_ref.shape[2] // gl
    parts = []
    for j in range(ngrp):                                            # static trip count
        gj = g_ref[0, :, j * gl:(j + 1) * gl]                        # 128-aligned slice
        parts.append(jnp.dot(jnp.maximum(gj, 0).astype(jnp.bfloat16), wig_ref[...],
                             preferred_element_type=jnp.float32))    # (OH, gw*F)
    zg = parts[0] if ngrp == 1 else jnp.concatenate(parts, axis=1)   # (OH, OW*F)
    z = z + zg + bi_ref[...]

    # res = resConfUnit2(inter)  -> lane-dense store (1, OH, OW*F)
    out_ref[0] = _rcu_folded(z, w2a_ref, b2a_ref, w2b_ref, b2b_ref)


# ------------------------------------- wrapper --------------------------------------

def djf_feature_fusion_block(guidance, x_out, x_skip, params):
    """DJFFeatureFusionBlock forward (3-input path). NHWC activations, HWIO weights."""
    N, H, W, F = x_out.shape
    Ng, OH, OW, G = guidance.shape
    assert Ng == N and OH == 2 * H and OW == 2 * W

    bf16 = jnp.bfloat16

    # Fold conv weights / biases / interp matrices on the host (bf16 matmul operands).
    w1a = _conv3x3_rowshift_weight(params["w1a"], W)        # (3, W*F,  W*F)
    w1b = _conv3x3_rowshift_weight(params["w1b"], W)
    w2a = _conv3x3_rowshift_weight(params["w2a"], OW)       # (3, OW*F, OW*F)
    w2b = _conv3x3_rowshift_weight(params["w2b"], OW)

    wi = np.asarray(params["wi"], np.float32)               # (F+G, F)
    wiu = jnp.asarray(_block_diag(wi[:F], OW), bf16)        # (OW*F, OW*F)
    gw = _pick_group_width(OW, G)                           # gw*G == 256 here
    wig = jnp.asarray(_block_diag(wi[F:], gw), bf16)        # (gw*G, gw*F) dense groups

    b1a = _bias_tile(params["b1a"], W)
    b1b = _bias_tile(params["b1b"], W)
    bi = _bias_tile(params["bi"], OW)
    b2a = _bias_tile(params["b2a"], OW)
    b2b = _bias_tile(params["b2b"], OW)

    ah = jnp.asarray(_bilinear_matrix(OH, H), bf16)                              # (OH, H)
    mcol = jnp.asarray(_upsample_col_weight(_bilinear_matrix(OW, W), F), bf16)   # (W*F, OW*F)

    # Lane-folded activations (contiguous reshapes), shipped as bf16.
    x1_f = x_out.reshape(N, H, W * F).astype(bf16)
    x2_f = x_skip.reshape(N, H, W * F).astype(bf16)
    g_f = guidance.reshape(N, OH, OW * G).astype(bf16)

    weights = (w1a, b1a, w1b, b1b, ah, mcol, wiu, wig, bi, w2a, b2a, w2b, b2b)

    def _const(a):
        # Constant block index across the grid -> the pipeline DMAs each weight once.
        return pl.BlockSpec(a.shape, lambda n, _k=a.ndim: (0,) * _k)

    out_flat = pl.pallas_call(
        _djf_kernel,
        out_shape=jax.ShapeDtypeStruct((N, OH, OW * F), jnp.float32),
        grid_spec=pltpu.PrefetchScalarGridSpec(
            num_scalar_prefetch=0,
            grid=(N,),
            in_specs=[
                pl.BlockSpec((1, H, W * F), lambda n: (n, 0, 0)),      # xs[1] folded
                pl.BlockSpec((1, H, W * F), lambda n: (n, 0, 0)),      # xs[2] folded
                pl.BlockSpec((1, OH, OW * G), lambda n: (n, 0, 0)),    # guidance folded
            ] + [_const(a) for a in weights],
            out_specs=pl.BlockSpec((1, OH, OW * F), lambda n: (n, 0, 0)),
        ),
        # Batch items are independent; "parallel" lets a multi-TC chip shard the grid.
        compiler_params=pltpu.CompilerParams(dimension_semantics=("parallel",)),
    )(x1_f, x2_f, g_f, *weights)

    return out_flat.reshape(N, OH, OW, F)


# --------------------------- pure-JAX reference (validation) ------------------------

def _rcu_ref(x, w1, b1, w2, b2):
    dn = ('NHWC', 'HWIO', 'NHWC')
    y = jax.nn.relu(x)
    y = lax.conv_general_dilated(y, w1, (1, 1), 'SAME', dimension_numbers=dn) + b1
    y = jax.nn.relu(y)
    y = lax.conv_general_dilated(y, w2, (1, 1), 'SAME', dimension_numbers=dn) + b2
    return y + x


def _reference(guidance, x_out, x_skip, params):
    N, H, W, F = x_out.shape
    ah = jnp.asarray(_bilinear_matrix(2 * H, H))
    aw = jnp.asarray(_bilinear_matrix(2 * W, W))
    out = x_out + _rcu_ref(x_skip, params["w1a"], params["b1a"],
                           params["w1b"], params["b1b"])
    out = jnp.einsum('oh,nhwc->nowc', ah, out)
    out = jnp.einsum('pw,nowc->nopc', aw, out)
    cat = jnp.concatenate([out, guidance], axis=-1)
    z = jnp.einsum('nhwc,cf->nhwf', jax.nn.relu(cat), params["wi"]) + params["bi"]
    return _rcu_ref(z, params["w2a"], params["b2a"], params["w2b"], params["b2b"])


# --------------------------------------- main ---------------------------------------

if __name__ == "__main__":
    N, H, W, F, G = 2, 16, 16, 4, 32   # features = 4, guidance channels = 32
    key = jax.random.PRNGKey(0)
    ks = jax.random.split(key, 13)
    scale = 0.3

    def snap(x):
        # Test data chosen bf16-representable so the kernel's bf16 operand casts of the
        # raw inputs/weights are lossless; remaining diff vs the f32 reference comes
        # only from bf16 rounding of intermediate activations.
        return jnp.asarray(x, jnp.bfloat16).astype(jnp.float32)

    params = {
        "w1a": snap(scale * jax.random.normal(ks[0], (3, 3, F, F), jnp.float32)),
        "b1a": snap(scale * jax.random.normal(ks[1], (F,), jnp.float32)),
        "w1b": snap(scale * jax.random.normal(ks[2], (3, 3, F, F), jnp.float32)),
        "b1b": snap(scale * jax.random.normal(ks[3], (F,), jnp.float32)),
        "wi":  snap(scale * jax.random.normal(ks[4], (F + G, F), jnp.float32)),
        "bi":  snap(scale * jax.random.normal(ks[5], (F,), jnp.float32)),
        "w2a": snap(scale * jax.random.normal(ks[6], (3, 3, F, F), jnp.float32)),
        "b2a": snap(scale * jax.random.normal(ks[7], (F,), jnp.float32)),
        "w2b": snap(scale * jax.random.normal(ks[8], (3, 3, F, F), jnp.float32)),
        "b2b": snap(scale * jax.random.normal(ks[9], (F,), jnp.float32)),
    }
    guidance = snap(jax.random.normal(ks[10], (N, 2 * H, 2 * W, G), jnp.float32))
    x_out = snap(jax.random.normal(ks[11], (N, H, W, F), jnp.float32))
    x_skip = snap(jax.random.normal(ks[12], (N, H, W, F), jnp.float32))

    out = jax.block_until_ready(djf_feature_fusion_block(guidance, x_out, x_skip, params))
    ref = jax.block_until_ready(_reference(guidance, x_out, x_skip, params))

    assert out.shape == (N, 2 * H, 2 * W, F), out.shape
    # bf16 MXU operands vs f32 reference: relaxed tolerance (review-sanctioned).
    np.testing.assert_allclose(np.asarray(out), np.asarray(ref), rtol=5e-2, atol=7.5e-2)
    print("KERNEL_OK")
</pallas_src>

<mosaic_0001>
module attributes {stable_mosaic.version = 11 : i64} {
  func.func @_djf_kernel(%arg0: i32, %arg1: memref<1x16x64xbf16, #tpu.memory_space<vmem>>, %arg2: memref<1x16x64xbf16, #tpu.memory_space<vmem>>, %arg3: memref<1x32x1024xbf16, #tpu.memory_space<vmem>>, %arg4: memref<3x64x64xbf16, #tpu.memory_space<vmem>>, %arg5: memref<1x64xf32, #tpu.memory_space<vmem>>, %arg6: memref<3x64x64xbf16, #tpu.memory_space<vmem>>, %arg7: memref<1x64xf32, #tpu.memory_space<vmem>>, %arg8: memref<32x16xbf16, #tpu.memory_space<vmem>>, %arg9: memref<64x128xbf16, #tpu.memory_space<vmem>>, %arg10: memref<128x128xbf16, #tpu.memory_space<vmem>>, %arg11: memref<256x32xbf16, #tpu.memory_space<vmem>>, %arg12: memref<1x128xf32, #tpu.memory_space<vmem>>, %arg13: memref<3x128x128xbf16, #tpu.memory_space<vmem>>, %arg14: memref<1x128xf32, #tpu.memory_space<vmem>>, %arg15: memref<3x128x128xbf16, #tpu.memory_space<vmem>>, %arg16: memref<1x128xf32, #tpu.memory_space<vmem>>, %arg17: memref<1x32x128xf32, #tpu.memory_space<vmem>>) attributes {dimension_semantics = [#tpu.dimension_semantics<parallel>], iteration_bounds = array<i64: 2>, scalar_prefetch = 0 : i64, scratch_operands = 0 : i64, tpu.core_type = #tpu.core_type<tc>, window_params = [{transform_indices = @transform_0, window_bounds = array<i64: 1, 16, 64>}, {transform_indices = @transform_1, window_bounds = array<i64: 1, 16, 64>}, {transform_indices = @transform_2, window_bounds = array<i64: 1, 32, 1024>}, {pipeline_mode = #tpu.pipeline_mode<synchronous>, transform_indices = @transform_3, window_bounds = array<i64: 3, 64, 64>}, {pipeline_mode = #tpu.pipeline_mode<synchronous>, transform_indices = @transform_4, window_bounds = array<i64: 1, 64>}, {pipeline_mode = #tpu.pipeline_mode<synchronous>, transform_indices = @transform_5, window_bounds = array<i64: 3, 64, 64>}, {pipeline_mode = #tpu.pipeline_mode<synchronous>, transform_indices = @transform_6, window_bounds = array<i64: 1, 64>}, {pipeline_mode = #tpu.pipeline_mode<synchronous>, transform_indices = @transform_7, window_bounds = array<i64: 32, 16>}, {pipeline_mode = #tpu.pipeline_mode<synchronous>, transform_indices = @transform_8, window_bounds = array<i64: 64, 128>}, {pipeline_mode = #tpu.pipeline_mode<synchronous>, transform_indices = @transform_9, window_bounds = array<i64: 128, 128>}, {pipeline_mode = #tpu.pipeline_mode<synchronous>, transform_indices = @transform_10, window_bounds = array<i64: 256, 32>}, {pipeline_mode = #tpu.pipeline_mode<synchronous>, transform_indices = @transform_11, window_bounds = array<i64: 1, 128>}, {pipeline_mode = #tpu.pipeline_mode<synchronous>, transform_indices = @transform_12, window_bounds = array<i64: 3, 128, 128>}, {pipeline_mode = #tpu.pipeline_mode<synchronous>, transform_indices = @transform_13, window_bounds = array<i64: 1, 128>}, {pipeline_mode = #tpu.pipeline_mode<synchronous>, transform_indices = @transform_14, window_bounds = array<i64: 3, 128, 128>}, {pipeline_mode = #tpu.pipeline_mode<synchronous>, transform_indices = @transform_15, window_bounds = array<i64: 1, 128>}, {transform_indices = @transform_16, window_bounds = array<i64: 1, 32, 128>}]} {
    %c0 = arith.constant 0 : index
    %c0_0 = arith.constant 0 : index
    %c0_1 = arith.constant 0 : index
    %0 = vector.load %arg1[%c0, %c0_0, %c0_1] : memref<1x16x64xbf16, #tpu.memory_space<vmem>>, vector<1x16x64xbf16>
    %1 = vector.shape_cast %0 : vector<1x16x64xbf16> to vector<16x64xbf16>
    %2 = arith.extf %1 : vector<16x64xbf16> to vector<16x64xf32>
    %c0_2 = arith.constant 0 : index
    %c0_3 = arith.constant 0 : index
    %c0_4 = arith.constant 0 : index
    %3 = vector.load %arg2[%c0_2, %c0_3, %c0_4] : memref<1x16x64xbf16, #tpu.memory_space<vmem>>, vector<1x16x64xbf16>
    %4 = vector.shape_cast %3 : vector<1x16x64xbf16> to vector<16x64xbf16>
    %5 = arith.extf %4 : vector<16x64xbf16> to vector<16x64xf32>
    %cst = arith.constant 0.000000e+00 : f32
    %6 = vector.broadcast %cst : f32 to vector<16x64xf32>
    %7 = arith.maximumf %5, %6 : vector<16x64xf32>
    %8 = tpu.iota {dimensions = array<i32: 0>} : vector<16x64xi32>
    %c1_i32 = arith.constant 1 : i32
    %9 = vector.broadcast %c1_i32 : i32 to vector<16x64xi32>
    %10 = arith.cmpi sge, %8, %9 : vector<16x64xi32>
    %c1_i32_5 = arith.constant 1 : i32
    %11 = tpu.dynamic_rotate %7 by %c1_i32_5 dim 0 : vector<16x64xf32>, i32 -> vector<16x64xf32>
    %cst_6 = arith.constant 0.000000e+00 : f32
    %12 = vector.broadcast %cst_6 : f32 to vector<16x64xf32>
    %13 = arith.select %10, %11, %12 : vector<16x64xi1>, vector<16x64xf32>
    %c15_i32 = arith.constant 15 : i32
    %14 = vector.broadcast %c15_i32 : i32 to vector<16x64xi32>
    %15 = arith.cmpi slt, %8, %14 : vector<16x64xi32>
    %c15_i32_7 = arith.constant 15 : i32
    %16 = tpu.dynamic_rotate %7 by %c15_i32_7 dim 0 : vector<16x64xf32>, i32 -> vector<16x64xf32>
    %cst_8 = arith.constant 0.000000e+00 : f32
    %17 = vector.broadcast %cst_8 : f32 to vector<16x64xf32>
    %18 = arith.select %15, %16, %17 : vector<16x64xi1>, vector<16x64xf32>
    %19 = arith.truncf %13 : vector<16x64xf32> to vector<16x64xbf16>
    %c0_9 = arith.constant 0 : index
    %c0_10 = arith.constant 0 : index
    %c0_11 = arith.constant 0 : index
    %20 = vector.load %arg4[%c0_9, %c0_10, %c0_11] : memref<3x64x64xbf16, #tpu.memory_space<vmem>>, vector<1x64x64xbf16>
    %21 = vector.shape_cast %20 : vector<1x64x64xbf16> to vector<64x64xbf16>
    %cst_12 = arith.constant dense<0.000000e+00> : vector<16x64xf32>
    %22 = tpu.matmul %19, %21, %cst_12 {dimension_numbers = #tpu.dot_dimension_numbers<[1], [0], [0], [1], [0, 0, 1, 1], [], []>} : vector<16x64xbf16>, vector<64x64xbf16>, vector<16x64xf32> -> vector<16x64xf32>
    %23 = arith.truncf %7 : vector<16x64xf32> to vector<16x64xbf16>
    %c1 = arith.constant 1 : index
    %c0_13 = arith.constant 0 : index
    %c0_14 = arith.constant 0 : index
    %24 = vector.load %arg4[%c1, %c0_13, %c0_14] : memref<3x64x64xbf16, #tpu.memory_space<vmem>>, vector<1x64x64xbf16>
    %25 = vector.shape_cast %24 : vector<1x64x64xbf16> to vector<64x64xbf16>
    %cst_15 = arith.constant dense<0.000000e+00> : vector<16x64xf32>
    %26 = tpu.matmul %23, %25, %cst_15 {dimension_numbers = #tpu.dot_dimension_numbers<[1], [0], [0], [1], [0, 0, 1, 1], [], []>} : vector<16x64xbf16>, vector<64x64xbf16>, vector<16x64xf32> -> vector<16x64xf32>
    %27 = arith.addf %22, %26 : vector<16x64xf32>
    %28 = arith.truncf %18 : vector<16x64xf32> to vector<16x64xbf16>
    %c2 = arith.constant 2 : index
    %c0_16 = arith.constant 0 : index
    %c0_17 = arith.constant 0 : index
    %29 = vector.load %arg4[%c2, %c0_16, %c0_17] : memref<3x64x64xbf16, #tpu.memory_space<vmem>>, vector<1x64x64xbf16>
    %30 = vector.shape_cast %29 : vector<1x64x64xbf16> to vector<64x64xbf16>
    %cst_18 = arith.constant dense<0.000000e+00> : vector<16x64xf32>
    %31 = tpu.matmul %28, %30, %cst_18 {dimension_numbers = #tpu.dot_dimension_numbers<[1], [0], [0], [1], [0, 0, 1, 1], [], []>} : vector<16x64xbf16>, vector<64x64xbf16>, vector<16x64xf32> -> vector<16x64xf32>
    %32 = arith.addf %27, %31 : vector<16x64xf32>
    %c0_19 = arith.constant 0 : index
    %c0_20 = arith.constant 0 : index
    %33 = vector.load %arg5[%c0_19, %c0_20] : memref<1x64xf32, #tpu.memory_space<vmem>>, vector<1x64xf32>
    %34 = vector.broadcast %33 : vector<1x64xf32> to vector<16x64xf32>
    %35 = arith.addf %32, %34 : vector<16x64xf32>
    %cst_21 = arith.constant 0.000000e+00 : f32
    %36 = vector.broadcast %cst_21 : f32 to vector<16x64xf32>
    %37 = arith.maximumf %35, %36 : vector<16x64xf32>
    %38 = tpu.iota {dimensions = array<i32: 0>} : vector<16x64xi32>
    %c1_i32_22 = arith.constant 1 : i32
    %39 = vector.broadcast %c1_i32_22 : i32 to vector<16x64xi32>
    %40 = arith.cmpi sge, %38, %39 : vector<16x64xi32>
    %c1_i32_23 = arith.constant 1 : i32
    %41 = tpu.dynamic_rotate %37 by %c1_i32_23 dim 0 : vector<16x64xf32>, i32 -> vector<16x64xf32>
    %cst_24 = arith.constant 0.000000e+00 : f32
    %42 = vector.broadcast %cst_24 : f32 to vector<16x64xf32>
    %43 = arith.select %40, %41, %42 : vector<16x64xi1>, vector<16x64xf32>
    %c15_i32_25 = arith.constant 15 : i32
    %44 = vector.broadcast %c15_i32_25 : i32 to vector<16x64xi32>
    %45 = arith.cmpi slt, %38, %44 : vector<16x64xi32>
    %c15_i32_26 = arith.constant 15 : i32
    %46 = tpu.dynamic_rotate %37 by %c15_i32_26 dim 0 : vector<16x64xf32>, i32 -> vector<16x64xf32>
    %cst_27 = arith.constant 0.000000e+00 : f32
    %47 = vector.broadcast %cst_27 : f32 to vector<16x64xf32>
    %48 = arith.select %45, %46, %47 : vector<16x64xi1>, vector<16x64xf32>
    %49 = arith.truncf %43 : vector<16x64xf32> to vector<16x64xbf16>
    %c0_28 = arith.constant 0 : index
    %c0_29 = arith.constant 0 : index
    %c0_30 = arith.constant 0 : index
    %50 = vector.load %arg6[%c0_28, %c0_29, %c0_30] : memref<3x64x64xbf16, #tpu.memory_space<vmem>>, vector<1x64x64xbf16>
    %51 = vector.shape_cast %50 : vector<1x64x64xbf16> to vector<64x64xbf16>
    %cst_31 = arith.constant dense<0.000000e+00> : vector<16x64xf32>
    %52 = tpu.matmul %49, %51, %cst_31 {dimension_numbers = #tpu.dot_dimension_numbers<[1], [0], [0], [1], [0, 0, 1, 1], [], []>} : vector<16x64xbf16>, vector<64x64xbf16>, vector<16x64xf32> -> vector<16x64xf32>
    %53 = arith.truncf %37 : vector<16x64xf32> to vector<16x64xbf16>
    %c1_32 = arith.constant 1 : index
    %c0_33 = arith.constant 0 : index
    %c0_34 = arith.constant 0 : index
    %54 = vector.load %arg6[%c1_32, %c0_33, %c0_34] : memref<3x64x64xbf16, #tpu.memory_space<vmem>>, vector<1x64x64xbf16>
    %55 = vector.shape_cast %54 : vector<1x64x64xbf16> to vector<64x64xbf16>
    %cst_35 = arith.constant dense<0.000000e+00> : vector<16x64xf32>
    %56 = tpu.matmul %53, %55, %cst_35 {dimension_numbers = #tpu.dot_dimension_numbers<[1], [0], [0], [1], [0, 0, 1, 1], [], []>} : vector<16x64xbf16>, vector<64x64xbf16>, vector<16x64xf32> -> vector<16x64xf32>
    %57 = arith.addf %52, %56 : vector<16x64xf32>
    %58 = arith.truncf %48 : vector<16x64xf32> to vector<16x64xbf16>
    %c2_36 = arith.constant 2 : index
    %c0_37 = arith.constant 0 : index
    %c0_38 = arith.constant 0 : index
    %59 = vector.load %arg6[%c2_36, %c0_37, %c0_38] : memref<3x64x64xbf16, #tpu.memory_space<vmem>>, vector<1x64x64xbf16>
    %60 = vector.shape_cast %59 : vector<1x64x64xbf16> to vector<64x64xbf16>
    %cst_39 = arith.constant dense<0.000000e+00> : vector<16x64xf32>
    %61 = tpu.matmul %58, %60, %cst_39 {dimension_numbers = #tpu.dot_dimension_numbers<[1], [0], [0], [1], [0, 0, 1, 1], [], []>} : vector<16x64xbf16>, vector<64x64xbf16>, vector<16x64xf32> -> vector<16x64xf32>
    %62 = arith.addf %57, %61 : vector<16x64xf32>
    %c0_40 = arith.constant 0 : index
    %c0_41 = arith.constant 0 : index
    %63 = vector.load %arg7[%c0_40, %c0_41] : memref<1x64xf32, #tpu.memory_space<vmem>>, vector<1x64xf32>
    %64 = vector.broadcast %63 : vector<1x64xf32> to vector<16x64xf32>
    %65 = arith.addf %62, %64 : vector<16x64xf32>
    %66 = arith.addf %65, %5 : vector<16x64xf32>
    %67 = arith.addf %2, %66 : vector<16x64xf32>
    %c0_42 = arith.constant 0 : index
    %c0_43 = arith.constant 0 : index
    %68 = vector.load %arg8[%c0_42, %c0_43] : memref<32x16xbf16, #tpu.memory_space<vmem>>, vector<32x16xbf16>
    %69 = arith.truncf %67 : vector<16x64xf32> to vector<16x64xbf16>
    %cst_44 = arith.constant dense<0.000000e+00> : vector<32x64xf32>
    %70 = tpu.matmul %68, %69, %cst_44 {dimension_numbers = #tpu.dot_dimension_numbers<[1], [0], [0], [1], [0, 0, 1, 1], [], []>} : vector<32x16xbf16>, vector<16x64xbf16>, vector<32x64xf32> -> vector<32x64xf32>
    %71 = arith.truncf %70 : vector<32x64xf32> to vector<32x64xbf16>
    %c0_45 = arith.constant 0 : index
    %c0_46 = arith.constant 0 : index
    %72 = vector.load %arg9[%c0_45, %c0_46] : memref<64x128xbf16, #tpu.memory_space<vmem>>, vector<64x128xbf16>
    %cst_47 = arith.constant dense<0.000000e+00> : vector<32x128xf32>
    %73 = tpu.matmul %71, %72, %cst_47 {dimension_numbers = #tpu.dot_dimension_numbers<[1], [0], [0], [1], [0, 0, 1, 1], [], []>} : vector<32x64xbf16>, vector<64x128xbf16>, vector<32x128xf32> -> vector<32x128xf32>
    %cst_48 = arith.constant 0.000000e+00 : f32
    %74 = vector.broadcast %cst_48 : f32 to vector<32x128xf32>
    %75 = arith.maximumf %73, %74 : vector<32x128xf32>
    %76 = arith.truncf %75 : vector<32x128xf32> to vector<32x128xbf16>
    %c0_49 = arith.constant 0 : index
    %c0_50 = arith.constant 0 : index
    %77 = vector.load %arg10[%c0_49, %c0_50] : memref<128x128xbf16, #tpu.memory_space<vmem>>, vector<128x128xbf16>
    %cst_51 = arith.constant dense<0.000000e+00> : vector<32x128xf32>
    %78 = tpu.matmul %76, %77, %cst_51 {dimension_numbers = #tpu.dot_dimension_numbers<[1], [0], [0], [1], [0, 0, 1, 1], [], []>} : vector<32x128xbf16>, vector<128x128xbf16>, vector<32x128xf32> -> vector<32x128xf32>
    %c0_52 = arith.constant 0 : index
    %c0_53 = arith.constant 0 : index
    %c0_54 = arith.constant 0 : index
    %79 = vector.load %arg3[%c0_52, %c0_53, %c0_54] : memref<1x32x1024xbf16, #tpu.memory_space<vmem>>, vector<1x32x256xbf16>
    %80 = vector.shape_cast %79 : vector<1x32x256xbf16> to vector<32x256xbf16>
    %cst_55 = arith.constant 0.000000e+00 : bf16
    %81 = vector.broadcast %cst_55 : bf16 to vector<32x256xbf16>
    %82 = arith.maximumf %80, %81 : vector<32x256xbf16>
    %c0_56 = arith.constant 0 : index
    %c0_57 = arith.constant 0 : index
    %83 = vector.load %arg11[%c0_56, %c0_57] : memref<256x32xbf16, #tpu.memory_space<vmem>>, vector<256x32xbf16>
    %cst_58 = arith.constant dense<0.000000e+00> : vector<32x32xf32>
    %84 = tpu.matmul %82, %83, %cst_58 {dimension_numbers = #tpu.dot_dimension_numbers<[1], [0], [0], [1], [0, 0, 1, 1], [], []>} : vector<32x256xbf16>, vector<256x32xbf16>, vector<32x32xf32> -> vector<32x32xf32>
    %c0_59 = arith.constant 0 : index
    %c0_60 = arith.constant 0 : index
    %c256 = arith.constant 256 : index
    %85 = vector.load %arg3[%c0_59, %c0_60, %c256] : memref<1x32x1024xbf16, #tpu.memory_space<vmem>>, vector<1x32x256xbf16>
    %86 = vector.shape_cast %85 : vector<1x32x256xbf16> to vector<32x256xbf16>
    %cst_61 = arith.constant 0.000000e+00 : bf16
    %87 = vector.broadcast %cst_61 : bf16 to vector<32x256xbf16>
    %88 = arith.maximumf %86, %87 : vector<32x256xbf16>
    %c0_62 = arith.constant 0 : index
    %c0_63 = arith.constant 0 : index
    %89 = vector.load %arg11[%c0_62, %c0_63] : memref<256x32xbf16, #tpu.memory_space<vmem>>, vector<256x32xbf16>
    %cst_64 = arith.constant dense<0.000000e+00> : vector<32x32xf32>
    %90 = tpu.matmul %88, %89, %cst_64 {dimension_numbers = #tpu.dot_dimension_numbers<[1], [0], [0], [1], [0, 0, 1, 1], [], []>} : vector<32x256xbf16>, vector<256x32xbf16>, vector<32x32xf32> -> vector<32x32xf32>
    %c0_65 = arith.constant 0 : index
    %c0_66 = arith.constant 0 : index
    %c512 = arith.constant 512 : index
    %91 = vector.load %arg3[%c0_65, %c0_66, %c512] : memref<1x32x1024xbf16, #tpu.memory_space<vmem>>, vector<1x32x256xbf16>
    %92 = vector.shape_cast %91 : vector<1x32x256xbf16> to vector<32x256xbf16>
    %cst_67 = arith.constant 0.000000e+00 : bf16
    %93 = vector.broadcast %cst_67 : bf16 to vector<32x256xbf16>
    %94 = arith.maximumf %92, %93 : vector<32x256xbf16>
    %c0_68 = arith.constant 0 : index
    %c0_69 = arith.constant 0 : index
    %95 = vector.load %arg11[%c0_68, %c0_69] : memref<256x32xbf16, #tpu.memory_space<vmem>>, vector<256x32xbf16>
    %cst_70 = arith.constant dense<0.000000e+00> : vector<32x32xf32>
    %96 = tpu.matmul %94, %95, %cst_70 {dimension_numbers = #tpu.dot_dimension_numbers<[1], [0], [0], [1], [0, 0, 1, 1], [], []>} : vector<32x256xbf16>, vector<256x32xbf16>, vector<32x32xf32> -> vector<32x32xf32>
    %c0_71 = arith.constant 0 : index
    %c0_72 = arith.constant 0 : index
    %c768 = arith.constant 768 : index
    %97 = vector.load %arg3[%c0_71, %c0_72, %c768] : memref<1x32x1024xbf16, #tpu.memory_space<vmem>>, vector<1x32x256xbf16>
    %98 = vector.shape_cast %97 : vector<1x32x256xbf16> to vector<32x256xbf16>
    %cst_73 = arith.constant 0.000000e+00 : bf16
    %99 = vector.broadcast %cst_73 : bf16 to vector<32x256xbf16>
    %100 = arith.maximumf %98, %99 : vector<32x256xbf16>
    %c0_74 = arith.constant 0 : index
    %c0_75 = arith.constant 0 : index
    %101 = vector.load %arg11[%c0_74, %c0_75] : memref<256x32xbf16, #tpu.memory_space<vmem>>, vector<256x32xbf16>
    %cst_76 = arith.constant dense<0.000000e+00> : vector<32x32xf32>
    %102 = tpu.matmul %100, %101, %cst_76 {dimension_numbers = #tpu.dot_dimension_numbers<[1], [0], [0], [1], [0, 0, 1, 1], [], []>} : vector<32x256xbf16>, vector<256x32xbf16>, vector<32x32xf32> -> vector<32x32xf32>
    %103 = tpu.concatenate %84, %90, %96, %102 in 1 : vector<32x32xf32>, vector<32x32xf32>, vector<32x32xf32>, vector<32x32xf32> -> vector<32x128xf32>
    %104 = arith.addf %78, %103 : vector<32x128xf32>
    %c0_77 = arith.constant 0 : index
    %c0_78 = arith.constant 0 : index
    %105 = vector.load %arg12[%c0_77, %c0_78] : memref<1x128xf32, #tpu.memory_space<vmem>>, vector<1x128xf32>
    %106 = vector.broadcast %105 : vector<1x128xf32> to vector<32x128xf32>
    %107 = arith.addf %104, %106 : vector<32x128xf32>
    %cst_79 = arith.constant 0.000000e+00 : f32
    %108 = vector.broadcast %cst_79 : f32 to vector<32x128xf32>
    %109 = arith.maximumf %107, %108 : vector<32x128xf32>
    %110 = tpu.iota {dimensions = array<i32: 0>} : vector<32x128xi32>
    %c1_i32_80 = arith.constant 1 : i32
    %111 = vector.broadcast %c1_i32_80 : i32 to vector<32x128xi32>
    %112 = arith.cmpi sge, %110, %111 : vector<32x128xi32>
    %c1_i32_81 = arith.constant 1 : i32
    %113 = tpu.dynamic_rotate %109 by %c1_i32_81 dim 0 : vector<32x128xf32>, i32 -> vector<32x128xf32>
    %cst_82 = arith.constant 0.000000e+00 : f32
    %114 = vector.broadcast %cst_82 : f32 to vector<32x128xf32>
    %115 = arith.select %112, %113, %114 : vector<32x128xi1>, vector<32x128xf32>
    %c31_i32 = arith.constant 31 : i32
    %116 = vector.broadcast %c31_i32 : i32 to vector<32x128xi32>
    %117 = arith.cmpi slt, %110, %116 : vector<32x128xi32>
    %c31_i32_83 = arith.constant 31 : i32
    %118 = tpu.dynamic_rotate %109 by %c31_i32_83 dim 0 : vector<32x128xf32>, i32 -> vector<32x128xf32>
    %cst_84 = arith.constant 0.000000e+00 : f32
    %119 = vector.broadcast %cst_84 : f32 to vector<32x128xf32>
    %120 = arith.select %117, %118, %119 : vector<32x128xi1>, vector<32x128xf32>
    %121 = arith.truncf %115 : vector<32x128xf32> to vector<32x128xbf16>
    %c0_85 = arith.constant 0 : index
    %c0_86 = arith.constant 0 : index
    %c0_87 = arith.constant 0 : index
    %122 = vector.load %arg13[%c0_85, %c0_86, %c0_87] : memref<3x128x128xbf16, #tpu.memory_space<vmem>>, vector<1x128x128xbf16>
    %123 = vector.shape_cast %122 : vector<1x128x128xbf16> to vector<128x128xbf16>
    %cst_88 = arith.constant dense<0.000000e+00> : vector<32x128xf32>
    %124 = tpu.matmul %121, %123, %cst_88 {dimension_numbers = #tpu.dot_dimension_numbers<[1], [0], [0], [1], [0, 0, 1, 1], [], []>} : vector<32x128xbf16>, vector<128x128xbf16>, vector<32x128xf32> -> vector<32x128xf32>
    %125 = arith.truncf %109 : vector<32x128xf32> to vector<32x128xbf16>
    %c1_89 = arith.constant 1 : index
    %c0_90 = arith.constant 0 : index
    %c0_91 = arith.constant 0 : index
    %126 = vector.load %arg13[%c1_89, %c0_90, %c0_91] : memref<3x128x128xbf16, #tpu.memory_space<vmem>>, vector<1x128x128xbf16>
    %127 = vector.shape_cast %126 : vector<1x128x128xbf16> to vector<128x128xbf16>
    %cst_92 = arith.constant dense<0.000000e+00> : vector<32x128xf32>
    %128 = tpu.matmul %125, %127, %cst_92 {dimension_numbers = #tpu.dot_dimension_numbers<[1], [0], [0], [1], [0, 0, 1, 1], [], []>} : vector<32x128xbf16>, vector<128x128xbf16>, vector<32x128xf32> -> vector<32x128xf32>
    %129 = arith.addf %124, %128 : vector<32x128xf32>
    %130 = arith.truncf %120 : vector<32x128xf32> to vector<32x128xbf16>
    %c2_93 = arith.constant 2 : index
    %c0_94 = arith.constant 0 : index
    %c0_95 = arith.constant 0 : index
    %131 = vector.load %arg13[%c2_93, %c0_94, %c0_95] : memref<3x128x128xbf16, #tpu.memory_space<vmem>>, vector<1x128x128xbf16>
    %132 = vector.shape_cast %131 : vector<1x128x128xbf16> to vector<128x128xbf16>
    %cst_96 = arith.constant dense<0.000000e+00> : vector<32x128xf32>
    %133 = tpu.matmul %130, %132, %cst_96 {dimension_numbers = #tpu.dot_dimension_numbers<[1], [0], [0], [1], [0, 0, 1, 1], [], []>} : vector<32x128xbf16>, vector<128x128xbf16>, vector<32x128xf32> -> vector<32x128xf32>
    %134 = arith.addf %129, %133 : vector<32x128xf32>
    %c0_97 = arith.constant 0 : index
    %c0_98 = arith.constant 0 : index
    %135 = vector.load %arg14[%c0_97, %c0_98] : memref<1x128xf32, #tpu.memory_space<vmem>>, vector<1x128xf32>
    %136 = vector.broadcast %135 : vector<1x128xf32> to vector<32x128xf32>
    %137 = arith.addf %134, %136 : vector<32x128xf32>
    %cst_99 = arith.constant 0.000000e+00 : f32
    %138 = vector.broadcast %cst_99 : f32 to vector<32x128xf32>
    %139 = arith.maximumf %137, %138 : vector<32x128xf32>
    %140 = tpu.iota {dimensions = array<i32: 0>} : vector<32x128xi32>
    %c1_i32_100 = arith.constant 1 : i32
    %141 = vector.broadcast %c1_i32_100 : i32 to vector<32x128xi32>
    %142 = arith.cmpi sge, %140, %141 : vector<32x128xi32>
    %c1_i32_101 = arith.constant 1 : i32
    %143 = tpu.dynamic_rotate %139 by %c1_i32_101 dim 0 : vector<32x128xf32>, i32 -> vector<32x128xf32>
    %cst_102 = arith.constant 0.000000e+00 : f32
    %144 = vector.broadcast %cst_102 : f32 to vector<32x128xf32>
    %145 = arith.select %142, %143, %144 : vector<32x128xi1>, vector<32x128xf32>
    %c31_i32_103 = arith.constant 31 : i32
    %146 = vector.broadcast %c31_i32_103 : i32 to vector<32x128xi32>
    %147 = arith.cmpi slt, %140, %146 : vector<32x128xi32>
    %c31_i32_104 = arith.constant 31 : i32
    %148 = tpu.dynamic_rotate %139 by %c31_i32_104 dim 0 : vector<32x128xf32>, i32 -> vector<32x128xf32>
    %cst_105 = arith.constant 0.000000e+00 : f32
    %149 = vector.broadcast %cst_105 : f32 to vector<32x128xf32>
    %150 = arith.select %147, %148, %149 : vector<32x128xi1>, vector<32x128xf32>
    %151 = arith.truncf %145 : vector<32x128xf32> to vector<32x128xbf16>
    %c0_106 = arith.constant 0 : index
    %c0_107 = arith.constant 0 : index
    %c0_108 = arith.constant 0 : index
    %152 = vector.load %arg15[%c0_106, %c0_107, %c0_108] : memref<3x128x128xbf16, #tpu.memory_space<vmem>>, vector<1x128x128xbf16>
    %153 = vector.shape_cast %152 : vector<1x128x128xbf16> to vector<128x128xbf16>
    %cst_109 = arith.constant dense<0.000000e+00> : vector<32x128xf32>
    %154 = tpu.matmul %151, %153, %cst_109 {dimension_numbers = #tpu.dot_dimension_numbers<[1], [0], [0], [1], [0, 0, 1, 1], [], []>} : vector<32x128xbf16>, vector<128x128xbf16>, vector<32x128xf32> -> vector<32x128xf32>
    %155 = arith.truncf %139 : vector<32x128xf32> to vector<32x128xbf16>
    %c1_110 = arith.constant 1 : index
    %c0_111 = arith.constant 0 : index
    %c0_112 = arith.constant 0 : index
    %156 = vector.load %arg15[%c1_110, %c0_111, %c0_112] : memref<3x128x128xbf16, #tpu.memory_space<vmem>>, vector<1x128x128xbf16>
    %157 = vector.shape_cast %156 : vector<1x128x128xbf16> to vector<128x128xbf16>
    %cst_113 = arith.constant dense<0.000000e+00> : vector<32x128xf32>
    %158 = tpu.matmul %155, %157, %cst_113 {dimension_numbers = #tpu.dot_dimension_numbers<[1], [0], [0], [1], [0, 0, 1, 1], [], []>} : vector<32x128xbf16>, vector<128x128xbf16>, vector<32x128xf32> -> vector<32x128xf32>
    %159 = arith.addf %154, %158 : vector<32x128xf32>
    %160 = arith.truncf %150 : vector<32x128xf32> to vector<32x128xbf16>
    %c2_114 = arith.constant 2 : index
    %c0_115 = arith.constant 0 : index
    %c0_116 = arith.constant 0 : index
    %161 = vector.load %arg15[%c2_114, %c0_115, %c0_116] : memref<3x128x128xbf16, #tpu.memory_space<vmem>>, vector<1x128x128xbf16>
    %162 = vector.shape_cast %161 : vector<1x128x128xbf16> to vector<128x128xbf16>
    %cst_117 = arith.constant dense<0.000000e+00> : vector<32x128xf32>
    %163 = tpu.matmul %160, %162, %cst_117 {dimension_numbers = #tpu.dot_dimension_numbers<[1], [0], [0], [1], [0, 0, 1, 1], [], []>} : vector<32x128xbf16>, vector<128x128xbf16>, vector<32x128xf32> -> vector<32x128xf32>
    %164 = arith.addf %159, %163 : vector<32x128xf32>
    %c0_118 = arith.constant 0 : index
    %c0_119 = arith.constant 0 : index
    %165 = vector.load %arg16[%c0_118, %c0_119] : memref<1x128xf32, #tpu.memory_space<vmem>>, vector<1x128xf32>
    %166 = vector.broadcast %165 : vector<1x128xf32> to vector<32x128xf32>
    %167 = arith.addf %164, %166 : vector<32x128xf32>
    %168 = arith.addf %167, %107 : vector<32x128xf32>
    %c0_120 = arith.constant 0 : index
    %c0_121 = arith.constant 0 : index
    %c0_122 = arith.constant 0 : index
    %169 = vector.load %arg17[%c0_120, %c0_121, %c0_122] : memref<1x32x128xf32, #tpu.memory_space<vmem>>, vector<1x32x128xf32>
    %170 = vector.shape_cast %169 : vector<1x32x128xf32> to vector<32x128xf32>
    %171 = vector.shape_cast %168 : vector<32x128xf32> to vector<1x32x128xf32>
    tpu.vector_store %arg17[%c0_120, %c0_121, %c0_122], %171 {strides = array<i32>} : memref<1x32x128xf32, #tpu.memory_space<vmem>>, vector<1x32x128xf32>,
    return
  }
  func.func @transform_0(%arg0: i32) -> (i32, i32, i32) {
    %c0_i32 = arith.constant 0 : i32
    %c0_i32_0 = arith.constant 0 : i32
    %c0_i32_1 = arith.constant 0 : i32
    return %arg0, %c0_i32, %c0_i32_0 : i32, i32, i32
  }
  func.func @transform_1(%arg0: i32) -> (i32, i32, i32) {
    %c0_i32 = arith.constant 0 : i32
    %c0_i32_0 = arith.constant 0 : i32
    %c0_i32_1 = arith.constant 0 : i32
    return %arg0, %c0_i32, %c0_i32_0 : i32, i32, i32
  }
  func.func @transform_2(%arg0: i32) -> (i32, i32, i32) {
    %c0_i32 = arith.constant 0 : i32
    %c0_i32_0 = arith.constant 0 : i32
    %c0_i32_1 = arith.constant 0 : i32
    return %arg0, %c0_i32, %c0_i32_0 : i32, i32, i32
  }
  func.func @transform_3(%arg0: i32) -> (i32, i32, i32) {
    %c0_i32 = arith.constant 0 : i32
    %c0_i32_0 = arith.constant 0 : i32
    %c0_i32_1 = arith.constant 0 : i32
    %c0_i32_2 = arith.constant 0 : i32
    return %c0_i32, %c0_i32_0, %c0_i32_1 : i32, i32, i32
  }
  func.func @transform_4(%arg0: i32) -> (i32, i32) {
    %c0_i32 = arith.constant 0 : i32
    %c0_i32_0 = arith.constant 0 : i32
    %c0_i32_1 = arith.constant 0 : i32
    return %c0_i32, %c0_i32_0 : i32, i32
  }
  func.func @transform_5(%arg0: i32) -> (i32, i32, i32) {
    %c0_i32 = arith.constant 0 : i32
    %c0_i32_0 = arith.constant 0 : i32
    %c0_i32_1 = arith.constant 0 : i32
    %c0_i32_2 = arith.constant 0 : i32
    return %c0_i32, %c0_i32_0, %c0_i32_1 : i32, i32, i32
  }
  func.func @transform_6(%arg0: i32) -> (i32, i32) {
    %c0_i32 = arith.constant 0 : i32
    %c0_i32_0 = arith.constant 0 : i32
    %c0_i32_1 = arith.constant 0 : i32
    return %c0_i32, %c0_i32_0 : i32, i32
  }
  func.func @transform_7(%arg0: i32) -> (i32, i32) {
    %c0_i32 = arith.constant 0 : i32
    %c0_i32_0 = arith.constant 0 : i32
    %c0_i32_1 = arith.constant 0 : i32
    return %c0_i32, %c0_i32_0 : i32, i32
  }
  func.func @transform_8(%arg0: i32) -> (i32, i32) {
    %c0_i32 = arith.constant 0 : i32
    %c0_i32_0 = arith.constant 0 : i32
    %c0_i32_1 = arith.constant 0 : i32
    return %c0_i32, %c0_i32_0 : i32, i32
  }
  func.func @transform_9(%arg0: i32) -> (i32, i32) {
    %c0_i32 = arith.constant 0 : i32
    %c0_i32_0 = arith.constant 0 : i32
    %c0_i32_1 = arith.constant 0 : i32
    return %c0_i32, %c0_i32_0 : i32, i32
  }
  func.func @transform_10(%arg0: i32) -> (i32, i32) {
    %c0_i32 = arith.constant 0 : i32
    %c0_i32_0 = arith.constant 0 : i32
    %c0_i32_1 = arith.constant 0 : i32
    return %c0_i32, %c0_i32_0 : i32, i32
  }
  func.func @transform_11(%arg0: i32) -> (i32, i32) {
    %c0_i32 = arith.constant 0 : i32
    %c0_i32_0 = arith.constant 0 : i32
    %c0_i32_1 = arith.constant 0 : i32
    return %c0_i32, %c0_i32_0 : i32, i32
  }
  func.func @transform_12(%arg0: i32) -> (i32, i32, i32) {
    %c0_i32 = arith.constant 0 : i32
    %c0_i32_0 = arith.constant 0 : i32
    %c0_i32_1 = arith.constant 0 : i32
    %c0_i32_2 = arith.constant 0 : i32
    return %c0_i32, %c0_i32_0, %c0_i32_1 : i32, i32, i32
  }
  func.func @transform_13(%arg0: i32) -> (i32, i32) {
    %c0_i32 = arith.constant 0 : i32
    %c0_i32_0 = arith.constant 0 : i32
    %c0_i32_1 = arith.constant 0 : i32
    return %c0_i32, %c0_i32_0 : i32, i32
  }
  func.func @transform_14(%arg0: i32) -> (i32, i32, i32) {
    %c0_i32 = arith.constant 0 : i32
    %c0_i32_0 = arith.constant 0 : i32
    %c0_i32_1 = arith.constant 0 : i32
    %c0_i32_2 = arith.constant 0 : i32
    return %c0_i32, %c0_i32_0, %c0_i32_1 : i32, i32, i32
  }
  func.func @transform_15(%arg0: i32) -> (i32, i32) {
    %c0_i32 = arith.constant 0 : i32
    %c0_i32_0 = arith.constant 0 : i32
    %c0_i32_1 = arith.constant 0 : i32
    return %c0_i32, %c0_i32_0 : i32, i32
  }
  func.func @transform_16(%arg0: i32) -> (i32, i32, i32) {
    %c0_i32 = arith.constant 0 : i32
    %c0_i32_0 = arith.constant 0 : i32
    %c0_i32_1 = arith.constant 0 : i32
    return %arg0, %c0_i32, %c0_i32_0 : i32, i32, i32
  }
}

</mosaic_0001>

<llo_original>
// kernel: tpu_custom_call.1
$region0: #{tpu_custom_call.1}
  #allocation0 [shape = 'u32[]', space=smem, size = 0x4, offset = 0x4, fixed_abs, tag = 'smem constant byte address 0x4 - core index']
  #allocation1 [shape = 'u32[144,128]{1,0:T(1,128)}', space=vmem, size = 0x12000, scoped, tag = 'internal scratch']
  %s0 = inlined_call_operand.hbm [shape: bf16[2,16,64], index: 0, kind: input, shape index: {}]
  %s1 = inlined_call_operand.hbm [shape: bf16[2,16,64], index: 1, kind: input, shape index: {}]
  %s2 = inlined_call_operand.hbm [shape: bf16[2,32,1024], index: 2, kind: input, shape index: {}]
  %s3 = inlined_call_operand.hbm [shape: bf16[3,64,64], index: 3, kind: input, shape index: {}]
  %s4 = inlined_call_operand.vmem [shape: f32[1,64], index: 4, kind: input, shape index: {}]
  %s5 = inlined_call_operand.hbm [shape: bf16[3,64,64], index: 5, kind: input, shape index: {}]
  %s6 = inlined_call_operand.vmem [shape: f32[1,64], index: 6, kind: input, shape index: {}]
  %s7 = inlined_call_operand.vmem [shape: bf16[32,16], index: 7, kind: input, shape index: {}]
  %s8 = inlined_call_operand.vmem [shape: bf16[64,128], index: 8, kind: input, shape index: {}]
  %s9 = inlined_call_operand.hbm [shape: bf16[128,128], index: 9, kind: input, shape index: {}]
  %s10 = inlined_call_operand.vmem [shape: bf16[256,32], index: 10, kind: input, shape index: {}]
  %s11 = inlined_call_operand.vmem [shape: f32[1,128], index: 11, kind: input, shape index: {}]
  %s12 = inlined_call_operand.vmem [shape: bf16[3,128,128], index: 12, kind: input, shape index: {}]
  %s13 = inlined_call_operand.vmem [shape: f32[1,128], index: 13, kind: input, shape index: {}]
  %s14 = inlined_call_operand.hbm [shape: bf16[3,128,128], index: 14, kind: input, shape index: {}]
  %s15 = inlined_call_operand.vmem [shape: f32[1,128], index: 15, kind: input, shape index: {}]
  %s16 = inlined_call_operand.hbm [shape: f32[2,32,128], index: 16, kind: output, shape index: {}]
  %s17 = sld [smem:[#allocation0]]
  $region125: #{tpu_custom_call.1} parent=0
    _
  %s19 = ssub.s32 1, %s17
  %s20 = scalar_select 0, %s19, %s17
  $region1: #{tpu_custom_call.1} parent=0
    #allocation2 [shape = 'u8[8192]{0}', space=vmem, size = 0x2000, scoped, tag = 'input window, operand 0']
    #allocation3 [shape = 's32[2]{0}', space=sflag, size = 0x8, scoped, tag = 'scoped memory for tpu_custom_call.1']
    #allocation4 [shape = 's32[2]{0}', space=sflag, size = 0x8, scoped, tag = 'scoped memory for tpu_custom_call.1']
    #allocation5 [shape = 'u8[8192]{0}', space=vmem, size = 0x2000, scoped, tag = 'input window, operand 1']
    #allocation6 [shape = 's32[2]{0}', space=sflag, size = 0x8, scoped, tag = 'scoped memory for tpu_custom_call.1']
    #allocation7 [shape = 'u8[131072]{0}', space=vmem, size = 0x20000, scoped, tag = 'input window, operand 2']
    #allocation8 [shape = 'u8[49152]{0}', space=vmem, size = 0xc000, scoped, tag = 'input window, operand 3, single buffered']
    #allocation9 [shape = 's32[1]{0}', space=sflag, size = 0x4, scoped, tag = 'scoped memory for tpu_custom_call.1']
    #allocation10 [shape = 'u8[49152]{0}', space=vmem, size = 0xc000, scoped, tag = 'input window, operand 5, single buffered']
    #allocation11 [shape = 'u8[32768]{0}', space=vmem, size = 0x8000, scoped, tag = 'input window, operand 9, single buffered']
    #allocation12 [shape = 's32[1]{0}', space=sflag, size = 0x4, scoped, tag = 'scoped memory for tpu_custom_call.1']
    #allocation13 [shape = 'u8[98304]{0}', space=vmem, size = 0x18000, scoped, tag = 'input window, operand 14, single buffered']
    #allocation14 [shape = 'u8[32768]{0}', space=vmem, size = 0x8000, scoped, tag = 'output window, operand 0']
    %21 = vsyncpa [#allocation3], 0
    %s22 = scalar_lea.sflag [#allocation3], 1
    %23 = vsyncpa %s22, 0
    %24 = vsyncpa [#allocation6], 0
    %s25 = scalar_lea.sflag [#allocation6], 1
    %26 = vsyncpa %s25, 0
    %27 = vsyncpa [#allocation9], 0
    %28 = vsyncpa [#allocation12], 0
    %29 = vsyncpa [#allocation4], 0
    %s30 = scalar_lea.sflag [#allocation4], 1
    %31 = vsyncpa %s30, 0
    loop: start=0, step=1, limit=4
    $region2: #{tpu_custom_call.1} parent=1 // loop_pre_header
      _
    $region3: #{tpu_custom_call.1} parent=1 // loop_header
      %s33 = sphi 0, %s37
      %p34 = scmp.ge.s32.totalorder %s33, 4
      %s43 = sphi 0, %s45
      %s46 = sphi 0, %s43
      %s47 = sphi 0, %s46
      %s63 = sphi 0, %s47
      %s69 = sphi 0, %s71
      %s72 = sphi 0, %s69
      %s73 = sphi 0, %s72
      %s89 = sphi 0, %s73
      %s95 = sphi 0, %s97
      %s98 = sphi 0, %s95
      %s99 = sphi 0, %s98
      %s115 = sphi 0, %s99
      %s119 = sphi 0, %s119
      %s121 = sphi 0, %s119
      %s122 = sphi 0, %s121
      %s136 = sphi 0, %s122
      %s140 = sphi 0, %s140
      %s142 = sphi 0, %s140
      %s143 = sphi 0, %s142
      %s157 = sphi 0, %s143
      %s161 = sphi 0, %s161
      %s163 = sphi 0, %s161
      %s164 = sphi 0, %s163
      %s178 = sphi 0, %s164
      %s182 = sphi 0, %s182
      %s184 = sphi 0, %s182
      %s185 = sphi 0, %s184
      %s199 = sphi 0, %s185
      %s203 = sphi 0, %s203
      %s205 = sphi 0, %s203
      %s206 = sphi 0, %s205
      %s220 = sphi 0, %s206
      %s224 = sphi 0, %s224
      %s226 = sphi 0, %s224
      %s227 = sphi 0, %s226
      %s241 = sphi 0, %s227
      %s245 = sphi 0, %s245
      %s247 = sphi 0, %s245
      %s248 = sphi 0, %s247
      %s262 = sphi 0, %s248
      %s266 = sphi 0, %s266
      %s268 = sphi 0, %s266
      %s269 = sphi 0, %s268
      %s283 = sphi 0, %s269
      %s287 = sphi 0, %s287
      %s289 = sphi 0, %s287
      %s290 = sphi 0, %s289
      %s304 = sphi 0, %s290
      %s308 = sphi 0, %s308
      %s310 = sphi 0, %s308
      %s311 = sphi 0, %s310
      %s325 = sphi 0, %s311
      %s329 = sphi 0, %s329
      %s331 = sphi 0, %s329
      %s332 = sphi 0, %s331
      %s346 = sphi 0, %s332
      %s350 = sphi 0, %s350
      %s352 = sphi 0, %s350
      %s353 = sphi 0, %s352
      %s367 = sphi 0, %s353
      %s371 = sphi 0, %s371
      %s373 = sphi 0, %s371
      %s374 = sphi 0, %s373
      %s388 = sphi 0, %s374
      %s394 = sphi 0, %s396
      %s397 = sphi 0, %s394
      %s398 = sphi 0, %s397
      %s414 = sphi 0, %s398
    $region4: #{tpu_custom_call.1} parent=1 // loop_header_branch
      %36 = sbr.rel (%p34) target = $region8
    $region5: #{tpu_custom_call.1} parent=1 // loop_body
      %s38 = ssub.s32 %s33, 1
      %s39 = ssub.s32 %s33, 2
      %s40 = sadd.s32 %s33, 1
      %s41 = ssub.s32 %s33, %s40
      %p42 = scmp.eq.s32.totalorder %s41, 0
      %s44 = sadd.s32 %s43, 1
      %s45 = scalar_select %p42, %s43, %s44
      %p48 = pneg %p42
      %p49 = scmp.eq.s32.totalorder %s33, 1
      %p50 = por %p48, %p49
      %p51 = scmp.ne.s32.totalorder %s43, %s46
      %p52 = scmp.eq.s32.totalorder %s33, 0
      %p53 = por %p51, %p52
      %p54 = scmp.ne.s32.totalorder %s43, %s46
      %p55 = scmp.eq.s32.totalorder %s38, 1
      %p56 = por %p54, %p55
      %p57 = scmp.ne.s32.totalorder %s46, %s47
      %p58 = scmp.eq.s32.totalorder %s38, 0
      %p59 = por %p57, %p58
      %p60 = scmp.ne.s32.totalorder %s46, %s47
      %p61 = scmp.eq.s32.totalorder %s39, 1
      %p62 = por %p60, %p61
      %p64 = scmp.ne.s32.totalorder %s47, %s63
      %p65 = scmp.eq.s32.totalorder %s39, 0
      %p66 = por %p64, %p65
      %s67 = ssub.s32 %s33, %s40
      %p68 = scmp.eq.s32.totalorder %s67, 0
      %s70 = sadd.s32 %s69, 1
      %s71 = scalar_select %p68, %s69, %s70
      %p74 = pneg %p68
      %p75 = scmp.eq.s32.totalorder %s33, 1
      %p76 = por %p74, %p75
      %p77 = scmp.ne.s32.totalorder %s69, %s72
      %p78 = scmp.eq.s32.totalorder %s33, 0
      %p79 = por %p77, %p78
      %p80 = scmp.ne.s32.totalorder %s69, %s72
      %p81 = scmp.eq.s32.totalorder %s38, 1
      %p82 = por %p80, %p81
      %p83 = scmp.ne.s32.totalorder %s72, %s73
      %p84 = scmp.eq.s32.totalorder %s38, 0
      %p85 = por %p83, %p84
      %p86 = scmp.ne.s32.totalorder %s72, %s73
      %p87 = scmp.eq.s32.totalorder %s39, 1
      %p88 = por %p86, %p87
      %p90 = scmp.ne.s32.totalorder %s73, %s89
      %p91 = scmp.eq.s32.totalorder %s39, 0
      %p92 = por %p90, %p91
      %s93 = ssub.s32 %s33, %s40
      %p94 = scmp.eq.s32.totalorder %s93, 0
      %s96 = sadd.s32 %s95, 1
      %s97 = scalar_select %p94, %s95, %s96
      %p100 = pneg %p94
      %p101 = scmp.eq.s32.totalorder %s33, 1
      %p102 = por %p100, %p101
      %p103 = scmp.ne.s32.totalorder %s95, %s98
      %p104 = scmp.eq.s32.totalorder %s33, 0
      %p105 = por %p103, %p104
      %p106 = scmp.ne.s32.totalorder %s95, %s98
      %p107 = scmp.eq.s32.totalorder %s38, 1
      %p108 = por %p106, %p107
      %p109 = scmp.ne.s32.totalorder %s98, %s99
      %p110 = scmp.eq.s32.totalorder %s38, 0
      %p111 = por %p109, %p110
      %p112 = scmp.ne.s32.totalorder %s98, %s99
      %p113 = scmp.eq.s32.totalorder %s39, 1
      %p114 = por %p112, %p113
      %p116 = scmp.ne.s32.totalorder %s99, %s115
      %p117 = scmp.eq.s32.totalorder %s39, 0
      %p118 = por %p116, %p117
      %s120 = sadd.s32 %s119, 1
      %p123 = scmp.eq.s32.totalorder %s33, 1
      %p124 = scmp.ne.s32.totalorder %s119, %s121
      %p125 = scmp.eq.s32.totalorder %s33, 0
      %p126 = por %p124, %p125
      %p127 = scmp.ne.s32.totalorder %s119, %s121
      %p128 = scmp.eq.s32.totalorder %s38, 1
      %p129 = por %p127, %p128
      %p130 = scmp.ne.s32.totalorder %s121, %s122
      %p131 = scmp.eq.s32.totalorder %s38, 0
      %p132 = por %p130, %p131
      %p133 = scmp.ne.s32.totalorder %s121, %s122
      %p134 = scmp.eq.s32.totalorder %s39, 1
      %p135 = por %p133, %p134
      %p137 = scmp.ne.s32.totalorder %s122, %s136
      %p138 = scmp.eq.s32.totalorder %s39, 0
      %p139 = por %p137, %p138
      %s141 = sadd.s32 %s140, 1
      %p144 = scmp.eq.s32.totalorder %s33, 1
      %p145 = scmp.ne.s32.totalorder %s140, %s142
      %p146 = scmp.eq.s32.totalorder %s33, 0
      %p147 = por %p145, %p146
      %p148 = scmp.ne.s32.totalorder %s140, %s142
      %p149 = scmp.eq.s32.totalorder %s38, 1
      %p150 = por %p148, %p149
      %p151 = scmp.ne.s32.totalorder %s142, %s143
      %p152 = scmp.eq.s32.totalorder %s38, 0
      %p153 = por %p151, %p152
      %p154 = scmp.ne.s32.totalorder %s142, %s143
      %p155 = scmp.eq.s32.totalorder %s39, 1
      %p156 = por %p154, %p155
      %p158 = scmp.ne.s32.totalorder %s143, %s157
      %p159 = scmp.eq.s32.totalorder %s39, 0
      %p160 = por %p158, %p159
      %s162 = sadd.s32 %s161, 1
      %p165 = scmp.eq.s32.totalorder %s33, 1
      %p166 = scmp.ne.s32.totalorder %s161, %s163
      %p167 = scmp.eq.s32.totalorder %s33, 0
      %p168 = por %p166, %p167
      %p169 = scmp.ne.s32.totalorder %s161, %s163
      %p170 = scmp.eq.s32.totalorder %s38, 1
      %p171 = por %p169, %p170
      %p172 = scmp.ne.s32.totalorder %s163, %s164
      %p173 = scmp.eq.s32.totalorder %s38, 0
      %p174 = por %p172, %p173
      %p175 = scmp.ne.s32.totalorder %s163, %s164
      %p176 = scmp.eq.s32.totalorder %s39, 1
      %p177 = por %p175, %p176
      %p179 = scmp.ne.s32.totalorder %s164, %s178
      %p180 = scmp.eq.s32.totalorder %s39, 0
      %p181 = por %p179, %p180
      %s183 = sadd.s32 %s182, 1
      %p186 = scmp.eq.s32.totalorder %s33, 1
      %p187 = scmp.ne.s32.totalorder %s182, %s184
      %p188 = scmp.eq.s32.totalorder %s33, 0
      %p189 = por %p187, %p188
      %p190 = scmp.ne.s32.totalorder %s182, %s184
      %p191 = scmp.eq.s32.totalorder %s38, 1
      %p192 = por %p190, %p191
      %p193 = scmp.ne.s32.totalorder %s184, %s185
      %p194 = scmp.eq.s32.totalorder %s38, 0
      %p195 = por %p193, %p194
      %p196 = scmp.ne.s32.totalorder %s184, %s185
      %p197 = scmp.eq.s32.totalorder %s39, 1
      %p198 = por %p196, %p197
      %p200 = scmp.ne.s32.totalorder %s185, %s199
      %p201 = scmp.eq.s32.totalorder %s39, 0
      %p202 = por %p200, %p201
      %s204 = sadd.s32 %s203, 1
      %p207 = scmp.eq.s32.totalorder %s33, 1
      %p208 = scmp.ne.s32.totalorder %s203, %s205
      %p209 = scmp.eq.s32.totalorder %s33, 0
      %p210 = por %p208, %p209
      %p211 = scmp.ne.s32.totalorder %s203, %s205
      %p212 = scmp.eq.s32.totalorder %s38, 1
      %p213 = por %p211, %p212
      %p214 = scmp.ne.s32.totalorder %s205, %s206
      %p215 = scmp.eq.s32.totalorder %s38, 0
      %p216 = por %p214, %p215
      %p217 = scmp.ne.s32.totalorder %s205, %s206
      %p218 = scmp.eq.s32.totalorder %s39, 1
      %p219 = por %p217, %p218
      %p221 = scmp.ne.s32.totalorder %s206, %s220
      %p222 = scmp.eq.s32.totalorder %s39, 0
      %p223 = por %p221, %p222
      %s225 = sadd.s32 %s224, 1
      %p228 = scmp.eq.s32.totalorder %s33, 1
      %p229 = scmp.ne.s32.totalorder %s224, %s226
      %p230 = scmp.eq.s32.totalorder %s33, 0
      %p231 = por %p229, %p230
      %p232 = scmp.ne.s32.totalorder %s224, %s226
      %p233 = scmp.eq.s32.totalorder %s38, 1
      %p234 = por %p232, %p233
      %p235 = scmp.ne.s32.totalorder %s226, %s227
      %p236 = scmp.eq.s32.totalorder %s38, 0
      %p237 = por %p235, %p236
      %p238 = scmp.ne.s32.totalorder %s226, %s227
      %p239 = scmp.eq.s32.totalorder %s39, 1
      %p240 = por %p238, %p239
      %p242 = scmp.ne.s32.totalorder %s227, %s241
      %p243 = scmp.eq.s32.totalorder %s39, 0
      %p244 = por %p242, %p243
      %s246 = sadd.s32 %s245, 1
      %p249 = scmp.eq.s32.totalorder %s33, 1
      %p250 = scmp.ne.s32.totalorder %s245, %s247
      %p251 = scmp.eq.s32.totalorder %s33, 0
      %p252 = por %p250, %p251
      %p253 = scmp.ne.s32.totalorder %s245, %s247
      %p254 = scmp.eq.s32.totalorder %s38, 1
      %p255 = por %p253, %p254
      %p256 = scmp.ne.s32.totalorder %s247, %s248
      %p257 = scmp.eq.s32.totalorder %s38, 0
      %p258 = por %p256, %p257
      %p259 = scmp.ne.s32.totalorder %s247, %s248
      %p260 = scmp.eq.s32.totalorder %s39, 1
      %p261 = por %p259, %p260
      %p263 = scmp.ne.s32.totalorder %s248, %s262
      %p264 = scmp.eq.s32.totalorder %s39, 0
      %p265 = por %p263, %p264
      %s267 = sadd.s32 %s266, 1
      %p270 = scmp.eq.s32.totalorder %s33, 1
      %p271 = scmp.ne.s32.totalorder %s266, %s268
      %p272 = scmp.eq.s32.totalorder %s33, 0
      %p273 = por %p271, %p272
      %p274 = scmp.ne.s32.totalorder %s266, %s268
      %p275 = scmp.eq.s32.totalorder %s38, 1
      %p276 = por %p274, %p275
      %p277 = scmp.ne.s32.totalorder %s268, %s269
      %p278 = scmp.eq.s32.totalorder %s38, 0
      %p279 = por %p277, %p278
      %p280 = scmp.ne.s32.totalorder %s268, %s269
      %p281 = scmp.eq.s32.totalorder %s39, 1
      %p282 = por %p280, %p281
      %p284 = scmp.ne.s32.totalorder %s269, %s283
      %p285 = scmp.eq.s32.totalorder %s39, 0
      %p286 = por %p284, %p285
      %s288 = sadd.s32 %s287, 1
      %p291 = scmp.eq.s32.totalorder %s33, 1
      %p292 = scmp.ne.s32.totalorder %s287, %s289
      %p293 = scmp.eq.s32.totalorder %s33, 0
      %p294 = por %p292, %p293
      %p295 = scmp.ne.s32.totalorder %s287, %s289
      %p296 = scmp.eq.s32.totalorder %s38, 1
      %p297 = por %p295, %p296
      %p298 = scmp.ne.s32.totalorder %s289, %s290
      %p299 = scmp.eq.s32.totalorder %s38, 0
      %p300 = por %p298, %p299
      %p301 = scmp.ne.s32.totalorder %s289, %s290
      %p302 = scmp.eq.s32.totalorder %s39, 1
      %p303 = por %p301, %p302
      %p305 = scmp.ne.s32.totalorder %s290, %s304
      %p306 = scmp.eq.s32.totalorder %s39, 0
      %p307 = por %p305, %p306
      %s309 = sadd.s32 %s308, 1
      %p312 = scmp.eq.s32.totalorder %s33, 1
      %p313 = scmp.ne.s32.totalorder %s308, %s310
      %p314 = scmp.eq.s32.totalorder %s33, 0
      %p315 = por %p313, %p314
      %p316 = scmp.ne.s32.totalorder %s308, %s310
      %p317 = scmp.eq.s32.totalorder %s38, 1
      %p318 = por %p316, %p317
      %p319 = scmp.ne.s32.totalorder %s310, %s311
      %p320 = scmp.eq.s32.totalorder %s38, 0
      %p321 = por %p319, %p320
      %p322 = scmp.ne.s32.totalorder %s310, %s311
      %p323 = scmp.eq.s32.totalorder %s39, 1
      %p324 = por %p322, %p323
      %p326 = scmp.ne.s32.totalorder %s311, %s325
      %p327 = scmp.eq.s32.totalorder %s39, 0
      %p328 = por %p326, %p327
      %s330 = sadd.s32 %s329, 1
      %p333 = scmp.eq.s32.totalorder %s33, 1
      %p334 = scmp.ne.s32.totalorder %s329, %s331
      %p335 = scmp.eq.s32.totalorder %s33, 0
      %p336 = por %p334, %p335
      %p337 = scmp.ne.s32.totalorder %s329, %s331
      %p338 = scmp.eq.s32.totalorder %s38, 1
      %p339 = por %p337, %p338
      %p340 = scmp.ne.s32.totalorder %s331, %s332
      %p341 = scmp.eq.s32.totalorder %s38, 0
      %p342 = por %p340, %p341
      %p343 = scmp.ne.s32.totalorder %s331, %s332
      %p344 = scmp.eq.s32.totalorder %s39, 1
      %p345 = por %p343, %p344
      %p347 = scmp.ne.s32.totalorder %s332, %s346
      %p348 = scmp.eq.s32.totalorder %s39, 0
      %p349 = por %p347, %p348
      %s351 = sadd.s32 %s350, 1
      %p354 = scmp.eq.s32.totalorder %s33, 1
      %p355 = scmp.ne.s32.totalorder %s350, %s352
      %p356 = scmp.eq.s32.totalorder %s33, 0
      %p357 = por %p355, %p356
      %p358 = scmp.ne.s32.totalorder %s350, %s352
      %p359 = scmp.eq.s32.totalorder %s38, 1
      %p360 = por %p358, %p359
      %p361 = scmp.ne.s32.totalorder %s352, %s353
      %p362 = scmp.eq.s32.totalorder %s38, 0
      %p363 = por %p361, %p362
      %p364 = scmp.ne.s32.totalorder %s352, %s353
      %p365 = scmp.eq.s32.totalorder %s39, 1
      %p366 = por %p364, %p365
      %p368 = scmp.ne.s32.totalorder %s353, %s367
      %p369 = scmp.eq.s32.totalorder %s39, 0
      %p370 = por %p368, %p369
      %s372 = sadd.s32 %s371, 1
      %p375 = scmp.eq.s32.totalorder %s33, 1
      %p376 = scmp.ne.s32.totalorder %s371, %s373
      %p377 = scmp.eq.s32.totalorder %s33, 0
      %p378 = por %p376, %p377
      %p379 = scmp.ne.s32.totalorder %s371, %s373
      %p380 = scmp.eq.s32.totalorder %s38, 1
      %p381 = por %p379, %p380
      %p382 = scmp.ne.s32.totalorder %s373, %s374
      %p383 = scmp.eq.s32.totalorder %s38, 0
      %p384 = por %p382, %p383
      %p385 = scmp.ne.s32.totalorder %s373, %s374
      %p386 = scmp.eq.s32.totalorder %s39, 1
      %p387 = por %p385, %p386
      %p389 = scmp.ne.s32.totalorder %s374, %s388
      %p390 = scmp.eq.s32.totalorder %s39, 0
      %p391 = por %p389, %p390
      %s392 = ssub.s32 %s33, %s40
      %p393 = scmp.eq.s32.totalorder %s392, 0
      %s395 = sadd.s32 %s394, 1
      %s396 = scalar_select %p393, %s394, %s395
      %p399 = pneg %p393
      %p400 = scmp.eq.s32.totalorder %s33, 1
      %p401 = por %p399, %p400
      %p402 = scmp.ne.s32.totalorder %s394, %s397
      %p403 = scmp.eq.s32.totalorder %s33, 0
      %p404 = por %p402, %p403
      %p405 = scmp.ne.s32.totalorder %s394, %s397
      %p406 = scmp.eq.s32.totalorder %s38, 1
      %p407 = por %p405, %p406
      %p408 = scmp.ne.s32.totalorder %s397, %s398
      %p409 = scmp.eq.s32.totalorder %s38, 0
      %p410 = por %p408, %p409
      %p411 = scmp.ne.s32.totalorder %s397, %s398
      %p412 = scmp.eq.s32.totalorder %s39, 1
      %p413 = por %p411, %p412
      %p415 = scmp.ne.s32.totalorder %s398, %s414
      %p416 = scmp.eq.s32.totalorder %s39, 0
      %p417 = por %p415, %p416
      %p418 = scmp.le.s32.totalorder 1, %s33
      %p419 = scmp.lt.s32.totalorder %s33, 3
      %p420 = pnand %p418, %p419
      %p421 = pneg %p420
      // Predicated region
      $region9: #{tpu_custom_call.1} parent=5 // pred_check
        _
      $region10: #{tpu_custom_call.1} parent=5 // pred_check_branch
        %423 = sbr.rel (%p420) target = $region12
      $region11: #{tpu_custom_call.1} parent=5 // pred_region
        %s424 = ssub.s32 %s33, 1
        // Predicated region
        $region13: #{tpu_custom_call.1} parent=11 // pred_check
          %p425 = pneg %p132
        $region14: #{tpu_custom_call.1} parent=11 // pred_check_branch
          %427 = sbr.rel (%p425) target = $region16
        $region15: #{tpu_custom_call.1} parent=11 // pred_region
          %s429 = ssub.s32 1536, 1536
          %430 = vsyncadd [#allocation9], %s429
          %s431 = sshll.u32 [#allocation8], 4
          %s432 = int_to_ptr.vmem [resolvable:$true] %s431
          %437 = dma.hbm_to_vmem [thread:$0]  %s3, 1536, %s432, [#allocation9], 64, 64, 4
        $region16: #{tpu_custom_call.1} parent=11 // pred_fallthru
          _
        // Predicated region
        $region17: #{tpu_custom_call.1} parent=11 // pred_check
          %p438 = pneg %p153
        $region18: #{tpu_custom_call.1} parent=11 // pred_check_branch
          %440 = sbr.rel (%p438) target = $region20
        $region19: #{tpu_custom_call.1} parent=11 // pred_region
          _
        $region20: #{tpu_custom_call.1} parent=11 // pred_fallthru
          _
        // Predicated region
        $region21: #{tpu_custom_call.1} parent=11 // pred_check
          %p441 = pneg %p174
        $region22: #{tpu_custom_call.1} parent=11 // pred_check_branch
          %443 = sbr.rel (%p441) target = $region24
        $region23: #{tpu_custom_call.1} parent=11 // pred_region
          %s445 = ssub.s32 1536, 1536
          %446 = vsyncadd [#allocation9], %s445
          %s447 = sshll.u32 [#allocation10], 4
          %s448 = int_to_ptr.vmem [resolvable:$true] %s447
          %453 = dma.hbm_to_vmem [thread:$0]  %s5, 1536, %s448, [#allocation9], 64, 64, 4
        $region24: #{tpu_custom_call.1} parent=11 // pred_fallthru
          _
        // Predicated region
        $region25: #{tpu_custom_call.1} parent=11 // pred_check
          %p454 = pneg %p195
        $region26: #{tpu_custom_call.1} parent=11 // pred_check_branch
          %456 = sbr.rel (%p454) target = $region28
        $region27: #{tpu_custom_call.1} parent=11 // pred_region
          _
        $region28: #{tpu_custom_call.1} parent=11 // pred_fallthru
          _
        // Predicated region
        $region29: #{tpu_custom_call.1} parent=11 // pred_check
          %p457 = pneg %p216
        $region30: #{tpu_custom_call.1} parent=11 // pred_check_branch
          %459 = sbr.rel (%p457) target = $region32
        $region31: #{tpu_custom_call.1} parent=11 // pred_region
          _
        $region32: #{tpu_custom_call.1} parent=11 // pred_fallthru
          _
        // Predicated region
        $region33: #{tpu_custom_call.1} parent=11 // pred_check
          %p460 = pneg %p237
        $region34: #{tpu_custom_call.1} parent=11 // pred_check_branch
          %462 = sbr.rel (%p460) target = $region36
        $region35: #{tpu_custom_call.1} parent=11 // pred_region
          _
        $region36: #{tpu_custom_call.1} parent=11 // pred_fallthru
          _
        // Predicated region
        $region37: #{tpu_custom_call.1} parent=11 // pred_check
          %p463 = pneg %p258
        $region38: #{tpu_custom_call.1} parent=11 // pred_check_branch
          %465 = sbr.rel (%p463) target = $region40
        $region39: #{tpu_custom_call.1} parent=11 // pred_region
          %s467 = ssub.s32 1024, 1024
          %468 = vsyncadd [#allocation12], %s467
          %s469 = sshll.u32 [#allocation11], 4
          %s470 = int_to_ptr.vmem [resolvable:$true] %s469
          %475 = dma.hbm_to_vmem [thread:$0]  %s9, 1024, %s470, [#allocation12], 64, 64, 4
        $region40: #{tpu_custom_call.1} parent=11 // pred_fallthru
          _
        // Predicated region
        $region41: #{tpu_custom_call.1} parent=11 // pred_check
          %p476 = pneg %p279
        $region42: #{tpu_custom_call.1} parent=11 // pred_check_branch
          %478 = sbr.rel (%p476) target = $region44
        $region43: #{tpu_custom_call.1} parent=11 // pred_region
          _
        $region44: #{tpu_custom_call.1} parent=11 // pred_fallthru
          _
        // Predicated region
        $region45: #{tpu_custom_call.1} parent=11 // pred_check
          %p479 = pneg %p300
        $region46: #{tpu_custom_call.1} parent=11 // pred_check_branch
          %481 = sbr.rel (%p479) target = $region48
        $region47: #{tpu_custom_call.1} parent=11 // pred_region
          _
        $region48: #{tpu_custom_call.1} parent=11 // pred_fallthru
          _
        // Predicated region
        $region49: #{tpu_custom_call.1} parent=11 // pred_check
          %p482 = pneg %p321
        $region50: #{tpu_custom_call.1} parent=11 // pred_check_branch
          %484 = sbr.rel (%p482) target = $region52
        $region51: #{tpu_custom_call.1} parent=11 // pred_region
          _
        $region52: #{tpu_custom_call.1} parent=11 // pred_fallthru
          _
        // Predicated region
        $region53: #{tpu_custom_call.1} parent=11 // pred_check
          %p485 = pneg %p342
        $region54: #{tpu_custom_call.1} parent=11 // pred_check_branch
          %487 = sbr.rel (%p485) target = $region56
        $region55: #{tpu_custom_call.1} parent=11 // pred_region
          _
        $region56: #{tpu_custom_call.1} parent=11 // pred_fallthru
          _
        // Predicated region
        $region57: #{tpu_custom_call.1} parent=11 // pred_check
          %p488 = pneg %p363
        $region58: #{tpu_custom_call.1} parent=11 // pred_check_branch
          %490 = sbr.rel (%p488) target = $region60
        $region59: #{tpu_custom_call.1} parent=11 // pred_region
          %s492 = ssub.s32 3072, 3072
          %493 = vsyncadd [#allocation12], %s492
          %s494 = sshll.u32 [#allocation13], 4
          %s495 = int_to_ptr.vmem [resolvable:$true] %s494
          %500 = dma.hbm_to_vmem [thread:$0]  %s14, 3072, %s495, [#allocation12], 64, 64, 4
        $region60: #{tpu_custom_call.1} parent=11 // pred_fallthru
          _
        // Predicated region
        $region61: #{tpu_custom_call.1} parent=11 // pred_check
          %p501 = pneg %p384
        $region62: #{tpu_custom_call.1} parent=11 // pred_check_branch
          %503 = sbr.rel (%p501) target = $region64
        $region63: #{tpu_custom_call.1} parent=11 // pred_region
          _
        $region64: #{tpu_custom_call.1} parent=11 // pred_fallthru
          _
      $region12: #{tpu_custom_call.1} parent=5 // pred_fallthru
        _
      %p504 = scmp.lt.s32.totalorder %s33, 2
      // Predicated region
      $region65: #{tpu_custom_call.1} parent=5 // pred_check
        %p505 = pneg %p504
      $region66: #{tpu_custom_call.1} parent=5 // pred_check_branch
        %507 = sbr.rel (%p505) target = $region68
      $region67: #{tpu_custom_call.1} parent=5 // pred_region
        // Predicated region
        $region69: #{tpu_custom_call.1} parent=67 // pred_check
          %p508 = pneg %p53
        $region70: #{tpu_custom_call.1} parent=67 // pred_check_branch
          %510 = sbr.rel (%p508) target = $region72
        $region71: #{tpu_custom_call.1} parent=67 // pred_region
          %s511 = sand.u32 %s43, 1
          %s512 = scalar_lea.sflag [#allocation3], %s511
          %s513 = sand.u32 %s43, 1
          %s514 = smul.addr %s513, 8
          %s515 = scalar_lea.vmem [#allocation2], %s514
          %s517 = ssub.s32 128, 128
          %518 = vsyncadd %s512, %s517
          %s519 = smul.addr %s33, 2
          %s520 = smul.addr %s519, 64
          %s521 = scalar_lea.hbm %s0, %s520
          %s522 = sshll.u32 %s515, 4
          %s523 = int_to_ptr.vmem [resolvable:$true] %s522
          %528 = dma.hbm_to_vmem [thread:$0]  %s521, 128, %s523, %s512, 64, 64, 4
        $region72: #{tpu_custom_call.1} parent=67 // pred_fallthru
          _
        // Predicated region
        $region73: #{tpu_custom_call.1} parent=67 // pred_check
          %p529 = pneg %p79
        $region74: #{tpu_custom_call.1} parent=67 // pred_check_branch
          %531 = sbr.rel (%p529) target = $region76
        $region75: #{tpu_custom_call.1} parent=67 // pred_region
          %s532 = sand.u32 %s33, 1
          %s533 = scalar_lea.sflag [#allocation6], %s532
          %s534 = sand.u32 %s69, 1
          %s535 = smul.addr %s534, 8
          %s536 = scalar_lea.vmem [#allocation5], %s535
          %s538 = ssub.s32 128, 128
          %539 = vsyncadd %s533, %s538
          %s540 = smul.addr %s33, 2
          %s541 = smul.addr %s540, 64
          %s542 = scalar_lea.hbm %s1, %s541
          %s543 = sshll.u32 %s536, 4
          %s544 = int_to_ptr.vmem [resolvable:$true] %s543
          %549 = dma.hbm_to_vmem [thread:$0]  %s542, 128, %s544, %s533, 64, 64, 4
        $region76: #{tpu_custom_call.1} parent=67 // pred_fallthru
          _
        // Predicated region
        $region77: #{tpu_custom_call.1} parent=67 // pred_check
          %p550 = pneg %p105
        $region78: #{tpu_custom_call.1} parent=67 // pred_check_branch
          %552 = sbr.rel (%p550) target = $region80
        $region79: #{tpu_custom_call.1} parent=67 // pred_region
          %s553 = sand.u32 %s33, 1
          %s554 = scalar_lea.sflag [#allocation6], %s553
          %s555 = sand.u32 %s95, 1
          %s556 = smul.addr %s555, 128
          %s557 = scalar_lea.vmem [#allocation7], %s556
          %s559 = ssub.s32 2048, 2048
          %560 = vsyncadd %s554, %s559
          %s561 = smul.addr %s33, 32
          %s562 = smul.addr %s561, 64
          %s563 = scalar_lea.hbm %s2, %s562
          %s564 = sshll.u32 %s557, 4
          %s565 = int_to_ptr.vmem [resolvable:$true] %s564
          %570 = dma.hbm_to_vmem [thread:$0]  %s563, 2048, %s565, %s554, 512, 512, 32
        $region80: #{tpu_custom_call.1} parent=67 // pred_fallthru
          _
      $region68: #{tpu_custom_call.1} parent=5 // pred_fallthru
        _
      %p571 = scmp.le.s32.totalorder 1, %s33
      %p572 = scmp.lt.s32.totalorder %s33, 3
      %p573 = pnand %p571, %p572
      %p574 = pneg %p573
      // Predicated region
      $region81: #{tpu_custom_call.1} parent=5 // pred_check
        _
      $region82: #{tpu_custom_call.1} parent=5 // pred_check_branch
        %576 = sbr.rel (%p573) target = $region84
      $region83: #{tpu_custom_call.1} parent=5 // pred_region
        %s577 = ssub.s32 %s33, 1
        %s578 = sand.u32 %s46, 1
        %s579 = scalar_lea.sflag [#allocation3], %s578
        %s580 = sand.u32 %s46, 1
        %s581 = smul.addr %s580, 8
        %s582 = scalar_lea.vmem [#allocation2], %s581
        // Predicated region
        $region85: #{tpu_custom_call.1} parent=83 // pred_check
          %p583 = pneg %p59
        $region86: #{tpu_custom_call.1} parent=83 // pred_check_branch
          %585 = sbr.rel (%p583) target = $region88
        $region87: #{tpu_custom_call.1} parent=83 // pred_region
          %586 = dma.done %s579, 128
        $region88: #{tpu_custom_call.1} parent=83 // pred_fallthru
          _
        %s587 = sand.u32 %s38, 1
        %s588 = scalar_lea.sflag [#allocation6], %s587
        %s589 = sand.u32 %s72, 1
        %s590 = smul.addr %s589, 8
        %s591 = scalar_lea.vmem [#allocation5], %s590
        // Predicated region
        $region89: #{tpu_custom_call.1} parent=83 // pred_check
          %p592 = pneg %p85
        $region90: #{tpu_custom_call.1} parent=83 // pred_check_branch
          %594 = sbr.rel (%p592) target = $region92
        $region91: #{tpu_custom_call.1} parent=83 // pred_region
          %595 = dma.done %s588, 128
        $region92: #{tpu_custom_call.1} parent=83 // pred_fallthru
          _
        %s596 = sand.u32 %s38, 1
        %s597 = scalar_lea.sflag [#allocation6], %s596
        %s598 = sand.u32 %s98, 1
        %s599 = smul.addr %s598, 128
        %s600 = scalar_lea.vmem [#allocation7], %s599
        // Predicated region
        $region93: #{tpu_custom_call.1} parent=83 // pred_check
          %p601 = pneg %p111
        $region94: #{tpu_custom_call.1} parent=83 // pred_check_branch
          %603 = sbr.rel (%p601) target = $region96
        $region95: #{tpu_custom_call.1} parent=83 // pred_region
          %604 = dma.done %s597, 2048
        $region96: #{tpu_custom_call.1} parent=83 // pred_fallthru
          _
        // Predicated region
        $region97: #{tpu_custom_call.1} parent=83 // pred_check
          %p605 = pneg %p132
        $region98: #{tpu_custom_call.1} parent=83 // pred_check_branch
          %607 = sbr.rel (%p605) target = $region100
        $region99: #{tpu_custom_call.1} parent=83 // pred_region
          %608 = dma.done [#allocation9], 1536
        $region100: #{tpu_custom_call.1} parent=83 // pred_fallthru
          _
        // Predicated region
        $region101: #{tpu_custom_call.1} parent=83 // pred_check
          %p609 = pneg %p174
        $region102: #{tpu_custom_call.1} parent=83 // pred_check_branch
          %611 = sbr.rel (%p609) target = $region104
        $region103: #{tpu_custom_call.1} parent=83 // pred_region
          %612 = dma.done [#allocation9], 1536
        $region104: #{tpu_custom_call.1} parent=83 // pred_fallthru
          _
        // Predicated region
        $region105: #{tpu_custom_call.1} parent=83 // pred_check
          %p613 = pneg %p258
        $region106: #{tpu_custom_call.1} parent=83 // pred_check_branch
          %615 = sbr.rel (%p613) target = $region108
        $region107: #{tpu_custom_call.1} parent=83 // pred_region
          %616 = dma.done [#allocation12], 1024
        $region108: #{tpu_custom_call.1} parent=83 // pred_fallthru
          _
        // Predicated region
        $region109: #{tpu_custom_call.1} parent=83 // pred_check
          %p617 = pneg %p363
        $region110: #{tpu_custom_call.1} parent=83 // pred_check_branch
          %619 = sbr.rel (%p617) target = $region112
        $region111: #{tpu_custom_call.1} parent=83 // pred_region
          %620 = dma.done [#allocation12], 3072
        $region112: #{tpu_custom_call.1} parent=83 // pred_fallthru
          _
        %s621 = sand.u32 %s46, 1
        %s622 = scalar_lea.sflag [#allocation3], %s621
        %s623 = sand.u32 %s46, 1
        %s624 = smul.addr %s623, 8
        %s625 = scalar_lea.vmem [#allocation2], %s624
        %p626 = pneg %p59
        %p627 = pneg %p56
        %s628 = sand.u32 %s38, 1
        %s629 = scalar_lea.sflag [#allocation6], %s628
        %s630 = sand.u32 %s72, 1
        %s631 = smul.addr %s630, 8
        %s632 = scalar_lea.vmem [#allocation5], %s631
        %p633 = pneg %p85
        %p634 = pneg %p82
        %s635 = sand.u32 %s38, 1
        %s636 = scalar_lea.sflag [#allocation6], %s635
        %s637 = sand.u32 %s98, 1
        %s638 = smul.addr %s637, 128
        %s639 = scalar_lea.vmem [#allocation7], %s638
        %p640 = pneg %p111
        %p641 = pneg %p108
        %p642 = pneg %p132
        %p643 = pneg %p129
        %p644 = pneg %p153
        %p645 = pneg %p150
        %p646 = pneg %p174
        %p647 = pneg %p171
        %p648 = pneg %p195
        %p649 = pneg %p192
        %p650 = pneg %p216
        %p651 = pneg %p213
        %p652 = pneg %p237
        %p653 = pneg %p234
        %p654 = pneg %p258
        %p655 = pneg %p255
        %p656 = pneg %p279
        %p657 = pneg %p276
        %p658 = pneg %p300
        %p659 = pneg %p297
        %p660 = pneg %p321
        %p661 = pneg %p318
        %p662 = pneg %p342
        %p663 = pneg %p339
        %p664 = pneg %p363
        %p665 = pneg %p360
        %p666 = pneg %p384
        %p667 = pneg %p381
        %p668 = pneg %p410
        %p669 = pneg %p407
        %s670 = sand.u32 %s397, 1
        %s671 = scalar_lea.sflag [#allocation4], %s670
        %s672 = sand.u32 %s397, 1
        %s673 = smul.addr %s672, 32
        %s674 = scalar_lea.vmem [#allocation14], %s673
        %v676 = vld [vmem:[%s582] sm:$0xf]
        %v677 = vld [vmem:[%s582 + $0x4] sm:$0xf]
        %v678 = vunpack.c.l.bf16 %v676
        %v679 = vunpack.c.l.bf16 %v677
        %v680 = vld [vmem:[%s591] sm:$0xf]
        %v681 = vld [vmem:[%s591 + $0x4] sm:$0xf]
        %v682 = vunpack.c.l.bf16 %v680
        %v683 = vunpack.c.l.bf16 %v681
        %v684 = vmax.f32 %v682, 0.0
        %v685 = vmax.f32 %v683, 0.0
        %v686 = vlaneseq
        %v687 = vshrl.u32 %v686, 7
        %v688 = vadd.s32 %v687, 8
        %vm689 = vcmp.ge.s32.totalorder %v687, 1
        %vm690 = vcmp.ge.s32.totalorder %v688, 1
        %v691 = vrot.slane %v684, 7
        %v692 = vrot.slane %v685, 7
        %vm693 = vcmp.lt.s32.totalorder %v687, 1
        %v694 = vsel %vm693, %v691, %v692
        %v695 = vsel %vm693, %v692, %v691
        %v696 = vsel %vm689, %v695, 0.0
        %v697 = vsel %vm690, %v694, 0.0
        %vm698 = vcmp.lt.s32.totalorder %v687, 15
        %vm699 = vcmp.lt.s32.totalorder %v688, 15
        %v700 = vrot.slane %v684, 1
        %v701 = vrot.slane %v685, 1
        %vm702 = vcmp.lt.s32.totalorder %v687, 7
        %v703 = vsel %vm702, %v700, %v701
        %v704 = vsel %vm702, %v701, %v700
        %v705 = vsel %vm698, %v703, 0.0
        %v706 = vsel %vm699, %v704, 0.0
        %v707 = vpack.c.bf16 %v697, %v696
        %v708 = vld [vmem:[#allocation8] sm:$0xf]
        %v709 = vld [vmem:[#allocation8 + $0x4] sm:$0xf]
        %v710 = vld [vmem:[#allocation8 + $0x8] sm:$0xf]
        %v711 = vld [vmem:[#allocation8 + $0xc] sm:$0xf]
        %v712 = vld [vmem:[#allocation8 + $0x10] sm:$0xf]
        %v713 = vld [vmem:[#allocation8 + $0x14] sm:$0xf]
        %v714 = vld [vmem:[#allocation8 + $0x18] sm:$0xf]
        %v715 = vld [vmem:[#allocation8 + $0x1c] sm:$0xf]
        %v716 = vpack.c.bf16 %v685, %v684
        %s717 = scalar_lea.vmem [#allocation8], 32
        %v718 = vld [vmem:[%s717] sm:$0xf]
        %v719 = vld [vmem:[%s717 + $0x4] sm:$0xf]
        %v720 = vld [vmem:[%s717 + $0x8] sm:$0xf]
        %v721 = vld [vmem:[%s717 + $0xc] sm:$0xf]
        %v722 = vld [vmem:[%s717 + $0x10] sm:$0xf]
        %v723 = vld [vmem:[%s717 + $0x14] sm:$0xf]
        %v724 = vld [vmem:[%s717 + $0x18] sm:$0xf]
        %v725 = vld [vmem:[%s717 + $0x1c] sm:$0xf]
        %v734 = vunpack.c.l.b16 %v718
        %v735 = vunpack.c.l.b16 %v719
        %v736 = vunpack.c.l.b16 %v720
        %v737 = vunpack.c.l.b16 %v721
        %v738 = vunpack.c.l.b16 %v722
        %v739 = vunpack.c.l.b16 %v723
        %v740 = vunpack.c.l.b16 %v724
        %v741 = vunpack.c.l.b16 %v725
        %v742 = vpack.c.b16 %v735, %v734
        %v743 = vpack.c.b16 %v737, %v736
        %v744 = vpack.c.b16 %v739, %v738
        %v745 = vpack.c.b16 %v741, %v740
        %vm750 = vcmask 523264
        %v752 = vsel %vm750, %v716, 0
        %754 = vmatprep.subr.bf16.mxu0 0
        %755 = vmatpush1.bf16.msra.mxu0 %v742
        %756 = vmatprep.subr.bf16.mxu0 0
        %757 = vmatpush1.bf16.msra.mxu0 %v743
        %758 = vmatprep.subr.bf16.mxu0 0
        %759 = vmatpush1.bf16.msra.mxu0 %v744
        %760 = vmatprep.subr.bf16.mxu0 0
        %761 = vmatpush1.bf16.msra.mxu0 %v745
        %762 = vmatprep.subr.bf16.mxu0 0
        %763 = vmatpush1.bf16.msra.mxu0 0
        %764 = vmatprep.subr.bf16.mxu0 0
        %765 = vmatpush1.bf16.msra.mxu0 0
        %766 = vmatprep.subr.bf16.mxu0 0
        %767 = vmatpush1.bf16.msra.mxu0 0
        %768 = vmatprep.subr.bf16.mxu0 0
        %769 = vmatpush1.bf16.msra.mxu0 0
        %770 = vmatprep.subr.bf16.mxu0 0
        %771 = vmatpush1.bf16.msra.mxu0 0
        %772 = vmatprep.subr.bf16.mxu0 0
        %773 = vmatpush1.bf16.msra.mxu0 0
        %774 = vmatprep.subr.bf16.mxu0 0
        %775 = vmatpush1.bf16.msra.mxu0 0
        %776 = vmatprep.subr.bf16.mxu0 0
        %777 = vmatpush1.bf16.msra.mxu0 0
        %778 = vmatprep.subr.bf16.mxu0 0
        %779 = vmatpush1.bf16.msra.mxu0 0
        %780 = vmatprep.subr.bf16.mxu0 0
        %781 = vmatpush1.bf16.msra.mxu0 0
        %782 = vmatprep.subr.bf16.mxu0 0
        %783 = vmatpush1.bf16.msra.mxu0 0
        %784 = vmatprep.subr.bf16.mxu0 0
        %785 = vmatpush1.bf16.msra.mxu0 0
        %786 = vmatprep.mubr.bf16.mxu0 0
        %787 = vmatmul.mubr.bf16.gmra.mrb[0].mxu0 %v752
        %v788 = vpop.f32.mrb[0].mxu0
        %v789 = vadd.f32 0.0, %v788
        %v790 = vpop.f32.mrb[0].mxu0
        %v791 = vpop.f32.mrb[0].mxu0
        %v792 = vadd.f32 0.0, %v791
        %v793 = vpop.f32.mrb[0].mxu0
        %794 = vdwg.mxu0
        %v803 = vunpack.c.l.b16 %v708
        %v804 = vunpack.c.l.b16 %v709
        %v805 = vunpack.c.l.b16 %v710
        %v806 = vunpack.c.l.b16 %v711
        %v807 = vunpack.c.l.b16 %v712
        %v808 = vunpack.c.l.b16 %v713
        %v809 = vunpack.c.l.b16 %v714
        %v810 = vunpack.c.l.b16 %v715
        %v811 = vpack.c.b16 %v804, %v803
        %v812 = vpack.c.b16 %v806, %v805
        %v813 = vpack.c.b16 %v808, %v807
        %v814 = vpack.c.b16 %v810, %v809
        %v820 = vsel %vm750, %v707, 0
        %822 = vmatprep.subr.bf16.mxu0 0
        %823 = vmatpush1.bf16.msra.mxu0 %v811
        %824 = vmatprep.subr.bf16.mxu0 0
        %825 = vmatpush1.bf16.msra.mxu0 %v812
        %826 = vmatprep.subr.bf16.mxu0 0
        %827 = vmatpush1.bf16.msra.mxu0 %v813
        %828 = vmatprep.subr.bf16.mxu0 0
        %829 = vmatpush1.bf16.msra.mxu0 %v814
        %830 = vmatprep.subr.bf16.mxu0 0
        %831 = vmatpush1.bf16.msra.mxu0 0
        %832 = vmatprep.subr.bf16.mxu0 0
        %833 = vmatpush1.bf16.msra.mxu0 0
        %834 = vmatprep.subr.bf16.mxu0 0
        %835 = vmatpush1.bf16.msra.mxu0 0
        %836 = vmatprep.subr.bf16.mxu0 0
        %837 = vmatpush1.bf16.msra.mxu0 0
        %838 = vmatprep.subr.bf16.mxu0 0
        %839 = vmatpush1.bf16.msra.mxu0 0
        %840 = vmatprep.subr.bf16.mxu0 0
        %841 = vmatpush1.bf16.msra.mxu0 0
        %842 = vmatprep.subr.bf16.mxu0 0
        %843 = vmatpush1.bf16.msra.mxu0 0
        %844 = vmatprep.subr.bf16.mxu0 0
        %845 = vmatpush1.bf16.msra.mxu0 0
        %846 = vmatprep.subr.bf16.mxu0 0
        %847 = vmatpush1.bf16.msra.mxu0 0
        %848 = vmatprep.subr.bf16.mxu0 0
        %849 = vmatpush1.bf16.msra.mxu0 0
        %850 = vmatprep.subr.bf16.mxu0 0
        %851 = vmatpush1.bf16.msra.mxu0 0
        %852 = vmatprep.subr.bf16.mxu0 0
        %853 = vmatpush1.bf16.msra.mxu0 0
        %854 = vmatprep.mubr.bf16.mxu0 0
        %855 = vmatmul.mubr.bf16.gmra.mrb[0].mxu0 %v820
        %v856 = vpop.f32.mrb[0].mxu0
        %v857 = vadd.f32 %v789, %v856
        %v858 = vpop.f32.mrb[0].mxu0
        %v859 = vpop.f32.mrb[0].mxu0
        %v860 = vadd.f32 %v792, %v859
        %v861 = vpop.f32.mrb[0].mxu0
        %862 = vdwg.mxu0
        %v863 = vpack.c.bf16 %v706, %v705
        %s864 = scalar_lea.vmem [#allocation8], 64
        %v865 = vld [vmem:[%s864] sm:$0xf]
        %v866 = vld [vmem:[%s864 + $0x4] sm:$0xf]
        %v867 = vld [vmem:[%s864 + $0x8] sm:$0xf]
        %v868 = vld [vmem:[%s864 + $0xc] sm:$0xf]
        %v869 = vld [vmem:[%s864 + $0x10] sm:$0xf]
        %v870 = vld [vmem:[%s864 + $0x14] sm:$0xf]
        %v871 = vld [vmem:[%s864 + $0x18] sm:$0xf]
        %v872 = vld [vmem:[%s864 + $0x1c] sm:$0xf]
        %v881 = vunpack.c.l.b16 %v865
        %v882 = vunpack.c.l.b16 %v866
        %v883 = vunpack.c.l.b16 %v867
        %v884 = vunpack.c.l.b16 %v868
        %v885 = vunpack.c.l.b16 %v869
        %v886 = vunpack.c.l.b16 %v870
        %v887 = vunpack.c.l.b16 %v871
        %v888 = vunpack.c.l.b16 %v872
        %v889 = vpack.c.b16 %v882, %v881
        %v890 = vpack.c.b16 %v884, %v883
        %v891 = vpack.c.b16 %v886, %v885
        %v892 = vpack.c.b16 %v888, %v887
        %v898 = vsel %vm750, %v863, 0
        %900 = vmatprep.subr.bf16.mxu0 0
        %901 = vmatpush1.bf16.msra.mxu0 %v889
        %902 = vmatprep.subr.bf16.mxu0 0
        %903 = vmatpush1.bf16.msra.mxu0 %v890
        %904 = vmatprep.subr.bf16.mxu0 0
        %905 = vmatpush1.bf16.msra.mxu0 %v891
        %906 = vmatprep.subr.bf16.mxu0 0
        %907 = vmatpush1.bf16.msra.mxu0 %v892
        %908 = vmatprep.subr.bf16.mxu0 0
        %909 = vmatpush1.bf16.msra.mxu0 0
        %910 = vmatprep.subr.bf16.mxu0 0
        %911 = vmatpush1.bf16.msra.mxu0 0
        %912 = vmatprep.subr.bf16.mxu0 0
        %913 = vmatpush1.bf16.msra.mxu0 0
        %914 = vmatprep.subr.bf16.mxu0 0
        %915 = vmatpush1.bf16.msra.mxu0 0
        %916 = vmatprep.subr.bf16.mxu0 0
        %917 = vmatpush1.bf16.msra.mxu0 0
        %918 = vmatprep.subr.bf16.mxu0 0
        %919 = vmatpush1.bf16.msra.mxu0 0
        %920 = vmatprep.subr.bf16.mxu0 0
        %921 = vmatpush1.bf16.msra.mxu0 0
        %922 = vmatprep.subr.bf16.mxu0 0
        %923 = vmatpush1.bf16.msra.mxu0 0
        %924 = vmatprep.subr.bf16.mxu0 0
        %925 = vmatpush1.bf16.msra.mxu0 0
        %926 = vmatprep.subr.bf16.mxu0 0
        %927 = vmatpush1.bf16.msra.mxu0 0
        %928 = vmatprep.subr.bf16.mxu0 0
        %929 = vmatpush1.bf16.msra.mxu0 0
        %930 = vmatprep.subr.bf16.mxu0 0
        %931 = vmatpush1.bf16.msra.mxu0 0
        %932 = vmatprep.mubr.bf16.mxu0 0
        %933 = vmatmul.mubr.bf16.gmra.mrb[0].mxu0 %v898
        %v934 = vpop.f32.mrb[0].mxu0
        %v935 = vadd.f32 0.0, %v934
        %v936 = vpop.f32.mrb[0].mxu0
        %v937 = vpop.f32.mrb[0].mxu0
        %v938 = vadd.f32 0.0, %v937
        %v939 = vpop.f32.mrb[0].mxu0
        %940 = vdwg.mxu0
        %v941 = vadd.f32 %v857, %v935
        %v942 = vadd.f32 %v860, %v938
        %v943 = vld [vmem:[%s4] sm:$0x1]
        %v945 = vlaneseq
        %v946 = vshrl.u32 %v945, 7
        %v947 = vsub.s32 0, %v946
        %v948 = vrot.slane %v943, %v947
        %v950 = vadd.f32 %v941, %v948
        %v951 = vadd.f32 %v942, %v948
        %v952 = vmax.f32 %v950, 0.0
        %v953 = vmax.f32 %v951, 0.0
        %v954 = vrot.slane %v952, 7
        %v955 = vrot.slane %v953, 7
        %v956 = vsel %vm693, %v954, %v955
        %v957 = vsel %vm693, %v955, %v954
        %v958 = vsel %vm689, %v957, 0.0
        %v959 = vsel %vm690, %v956, 0.0
        %v960 = vrot.slane %v952, 1
        %v961 = vrot.slane %v953, 1
        %v962 = vsel %vm702, %v960, %v961
        %v963 = vsel %vm702, %v961, %v960
        %v964 = vsel %vm698, %v962, 0.0
        %v965 = vsel %vm699, %v963, 0.0
        %v966 = vpack.c.bf16 %v959, %v958
        %v967 = vld [vmem:[#allocation10] sm:$0xf]
        %v968 = vld [vmem:[#allocation10 + $0x4] sm:$0xf]
        %v969 = vld [vmem:[#allocation10 + $0x8] sm:$0xf]
        %v970 = vld [vmem:[#allocation10 + $0xc] sm:$0xf]
        %v971 = vld [vmem:[#allocation10 + $0x10] sm:$0xf]
        %v972 = vld [vmem:[#allocation10 + $0x14] sm:$0xf]
        %v973 = vld [vmem:[#allocation10 + $0x18] sm:$0xf]
        %v974 = vld [vmem:[#allocation10 + $0x1c] sm:$0xf]
        %v975 = vpack.c.bf16 %v953, %v952
        %s976 = scalar_lea.vmem [#allocation10], 32
        %v977 = vld [vmem:[%s976] sm:$0xf]
        %v978 = vld [vmem:[%s976 + $0x4] sm:$0xf]
        %v979 = vld [vmem:[%s976 + $0x8] sm:$0xf]
        %v980 = vld [vmem:[%s976 + $0xc] sm:$0xf]
        %v981 = vld [vmem:[%s976 + $0x10] sm:$0xf]
        %v982 = vld [vmem:[%s976 + $0x14] sm:$0xf]
        %v983 = vld [vmem:[%s976 + $0x18] sm:$0xf]
        %v984 = vld [vmem:[%s976 + $0x1c] sm:$0xf]
        %v993 = vunpack.c.l.b16 %v977
        %v994 = vunpack.c.l.b16 %v978
        %v995 = vunpack.c.l.b16 %v979
        %v996 = vunpack.c.l.b16 %v980
        %v997 = vunpack.c.l.b16 %v981
        %v998 = vunpack.c.l.b16 %v982
        %v999 = vunpack.c.l.b16 %v983
        %v1000 = vunpack.c.l.b16 %v984
        %v1001 = vpack.c.b16 %v994, %v993
        %v1002 = vpack.c.b16 %v996, %v995
        %v1003 = vpack.c.b16 %v998, %v997
        %v1004 = vpack.c.b16 %v1000, %v999
        %v1010 = vsel %vm750, %v975, 0
        %1012 = vmatprep.subr.bf16.mxu0 0
        %1013 = vmatpush1.bf16.msra.mxu0 %v1001
        %1014 = vmatprep.subr.bf16.mxu0 0
        %1015 = vmatpush1.bf16.msra.mxu0 %v1002
        %1016 = vmatprep.subr.bf16.mxu0 0
        %1017 = vmatpush1.bf16.msra.mxu0 %v1003
        %1018 = vmatprep.subr.bf16.mxu0 0
        %1019 = vmatpush1.bf16.msra.mxu0 %v1004
        %1020 = vmatprep.subr.bf16.mxu0 0
        %1021 = vmatpush1.bf16.msra.mxu0 0
        %1022 = vmatprep.subr.bf16.mxu0 0
        %1023 = vmatpush1.bf16.msra.mxu0 0
        %1024 = vmatprep.subr.bf16.mxu0 0
        %1025 = vmatpush1.bf16.msra.mxu0 0
        %1026 = vmatprep.subr.bf16.mxu0 0
        %1027 = vmatpush1.bf16.msra.mxu0 0
        %1028 = vmatprep.subr.bf16.mxu0 0
        %1029 = vmatpush1.bf16.msra.mxu0 0
        %1030 = vmatprep.subr.bf16.mxu0 0
        %1031 = vmatpush1.bf16.msra.mxu0 0
        %1032 = vmatprep.subr.bf16.mxu0 0
        %1033 = vmatpush1.bf16.msra.mxu0 0
        %1034 = vmatprep.subr.bf16.mxu0 0
        %1035 = vmatpush1.bf16.msra.mxu0 0
        %1036 = vmatprep.subr.bf16.mxu0 0
        %1037 = vmatpush1.bf16.msra.mxu0 0
        %1038 = vmatprep.subr.bf16.mxu0 0
        %1039 = vmatpush1.bf16.msra.mxu0 0
        %1040 = vmatprep.subr.bf16.mxu0 0
        %1041 = vmatpush1.bf16.msra.mxu0 0
        %1042 = vmatprep.subr.bf16.mxu0 0
        %1043 = vmatpush1.bf16.msra.mxu0 0
        %1044 = vmatprep.mubr.bf16.mxu0 0
        %1045 = vmatmul.mubr.bf16.gmra.mrb[0].mxu0 %v1010
        %v1046 = vpop.f32.mrb[0].mxu0
        %v1047 = vadd.f32 0.0, %v1046
        %v1048 = vpop.f32.mrb[0].mxu0
        %v1049 = vpop.f32.mrb[0].mxu0
        %v1050 = vadd.f32 0.0, %v1049
        %v1051 = vpop.f32.mrb[0].mxu0
        %1052 = vdwg.mxu0
        %v1061 = vunpack.c.l.b16 %v967
        %v1062 = vunpack.c.l.b16 %v968
        %v1063 = vunpack.c.l.b16 %v969
        %v1064 = vunpack.c.l.b16 %v970
        %v1065 = vunpack.c.l.b16 %v971
        %v1066 = vunpack.c.l.b16 %v972
        %v1067 = vunpack.c.l.b16 %v973
        %v1068 = vunpack.c.l.b16 %v974
        %v1069 = vpack.c.b16 %v1062, %v1061
        %v1070 = vpack.c.b16 %v1064, %v1063
        %v1071 = vpack.c.b16 %v1066, %v1065
        %v1072 = vpack.c.b16 %v1068, %v1067
        %v1078 = vsel %vm750, %v966, 0
        %1080 = vmatprep.subr.bf16.mxu0 0
        %1081 = vmatpush1.bf16.msra.mxu0 %v1069
        %1082 = vmatprep.subr.bf16.mxu0 0
        %1083 = vmatpush1.bf16.msra.mxu0 %v1070
        %1084 = vmatprep.subr.bf16.mxu0 0
        %1085 = vmatpush1.bf16.msra.mxu0 %v1071
        %1086 = vmatprep.subr.bf16.mxu0 0
        %1087 = vmatpush1.bf16.msra.mxu0 %v1072
        %1088 = vmatprep.subr.bf16.mxu0 0
        %1089 = vmatpush1.bf16.msra.mxu0 0
        %1090 = vmatprep.subr.bf16.mxu0 0
        %1091 = vmatpush1.bf16.msra.mxu0 0
        %1092 = vmatprep.subr.bf16.mxu0 0
        %1093 = vmatpush1.bf16.msra.mxu0 0
        %1094 = vmatprep.subr.bf16.mxu0 0
        %1095 = vmatpush1.bf16.msra.mxu0 0
        %1096 = vmatprep.subr.bf16.mxu0 0
        %1097 = vmatpush1.bf16.msra.mxu0 0
        %1098 = vmatprep.subr.bf16.mxu0 0
        %1099 = vmatpush1.bf16.msra.mxu0 0
        %1100 = vmatprep.subr.bf16.mxu0 0
        %1101 = vmatpush1.bf16.msra.mxu0 0
        %1102 = vmatprep.subr.bf16.mxu0 0
        %1103 = vmatpush1.bf16.msra.mxu0 0
        %1104 = vmatprep.subr.bf16.mxu0 0
        %1105 = vmatpush1.bf16.msra.mxu0 0
        %1106 = vmatprep.subr.bf16.mxu0 0
        %1107 = vmatpush1.bf16.msra.mxu0 0
        %1108 = vmatprep.subr.bf16.mxu0 0
        %1109 = vmatpush1.bf16.msra.mxu0 0
        %1110 = vmatprep.subr.bf16.mxu0 0
        %1111 = vmatpush1.bf16.msra.mxu0 0
        %1112 = vmatprep.mubr.bf16.mxu0 0
        %1113 = vmatmul.mubr.bf16.gmra.mrb[0].mxu0 %v1078
        %v1114 = vpop.f32.mrb[0].mxu0
        %v1115 = vadd.f32 %v1047, %v1114
        %v1116 = vpop.f32.mrb[0].mxu0
        %v1117 = vpop.f32.mrb[0].mxu0
        %v1118 = vadd.f32 %v1050, %v1117
        %v1119 = vpop.f32.mrb[0].mxu0
        %1120 = vdwg.mxu0
        %v1121 = vpack.c.bf16 %v965, %v964
        %s1122 = scalar_lea.vmem [#allocation10], 64
        %v1123 = vld [vmem:[%s1122] sm:$0xf]
        %v1124 = vld [vmem:[%s1122 + $0x4] sm:$0xf]
        %v1125 = vld [vmem:[%s1122 + $0x8] sm:$0xf]
        %v1126 = vld [vmem:[%s1122 + $0xc] sm:$0xf]
        %v1127 = vld [vmem:[%s1122 + $0x10] sm:$0xf]
        %v1128 = vld [vmem:[%s1122 + $0x14] sm:$0xf]
        %v1129 = vld [vmem:[%s1122 + $0x18] sm:$0xf]
        %v1130 = vld [vmem:[%s1122 + $0x1c] sm:$0xf]
        %v1139 = vunpack.c.l.b16 %v1123
        %v1140 = vunpack.c.l.b16 %v1124
        %v1141 = vunpack.c.l.b16 %v1125
        %v1142 = vunpack.c.l.b16 %v1126
        %v1143 = vunpack.c.l.b16 %v1127
        %v1144 = vunpack.c.l.b16 %v1128
        %v1145 = vunpack.c.l.b16 %v1129
        %v1146 = vunpack.c.l.b16 %v1130
        %v1147 = vpack.c.b16 %v1140, %v1139
        %v1148 = vpack.c.b16 %v1142, %v1141
        %v1149 = vpack.c.b16 %v1144, %v1143
        %v1150 = vpack.c.b16 %v1146, %v1145
        %v1156 = vsel %vm750, %v1121, 0
        %1158 = vmatprep.subr.bf16.mxu0 0
        %1159 = vmatpush1.bf16.msra.mxu0 %v1147
        %1160 = vmatprep.subr.bf16.mxu0 0
        %1161 = vmatpush1.bf16.msra.mxu0 %v1148
        %1162 = vmatprep.subr.bf16.mxu0 0
        %1163 = vmatpush1.bf16.msra.mxu0 %v1149
        %1164 = vmatprep.subr.bf16.mxu0 0
        %1165 = vmatpush1.bf16.msra.mxu0 %v1150
        %1166 = vmatprep.subr.bf16.mxu0 0
        %1167 = vmatpush1.bf16.msra.mxu0 0
        %1168 = vmatprep.subr.bf16.mxu0 0
        %1169 = vmatpush1.bf16.msra.mxu0 0
        %1170 = vmatprep.subr.bf16.mxu0 0
        %1171 = vmatpush1.bf16.msra.mxu0 0
        %1172 = vmatprep.subr.bf16.mxu0 0
        %1173 = vmatpush1.bf16.msra.mxu0 0
        %1174 = vmatprep.subr.bf16.mxu0 0
        %1175 = vmatpush1.bf16.msra.mxu0 0
        %1176 = vmatprep.subr.bf16.mxu0 0
        %1177 = vmatpush1.bf16.msra.mxu0 0
        %1178 = vmatprep.subr.bf16.mxu0 0
        %1179 = vmatpush1.bf16.msra.mxu0 0
        %1180 = vmatprep.subr.bf16.mxu0 0
        %1181 = vmatpush1.bf16.msra.mxu0 0
        %1182 = vmatprep.subr.bf16.mxu0 0
        %1183 = vmatpush1.bf16.msra.mxu0 0
        %1184 = vmatprep.subr.bf16.mxu0 0
        %1185 = vmatpush1.bf16.msra.mxu0 0
        %1186 = vmatprep.subr.bf16.mxu0 0
        %1187 = vmatpush1.bf16.msra.mxu0 0
        %1188 = vmatprep.subr.bf16.mxu0 0
        %1189 = vmatpush1.bf16.msra.mxu0 0
        %1190 = vmatprep.mubr.bf16.mxu0 0
        %1191 = vmatmul.mubr.bf16.gmra.mrb[0].mxu0 %v1156
        %v1192 = vpop.f32.mrb[0].mxu0
        %v1193 = vadd.f32 0.0, %v1192
        %v1194 = vpop.f32.mrb[0].mxu0
        %v1195 = vpop.f32.mrb[0].mxu0
        %v1196 = vadd.f32 0.0, %v1195
        %v1197 = vpop.f32.mrb[0].mxu0
        %1198 = vdwg.mxu0
        %v1199 = vadd.f32 %v1115, %v1193
        %v1200 = vadd.f32 %v1118, %v1196
        %v1201 = vld [vmem:[%s6] sm:$0x1]
        %v1203 = vlaneseq
        %v1204 = vshrl.u32 %v1203, 7
        %v1205 = vsub.s32 0, %v1204
        %v1206 = vrot.slane %v1201, %v1205
        %v1208 = vadd.f32 %v1199, %v1206
        %v1209 = vadd.f32 %v1200, %v1206
        %v1210 = vadd.f32 %v1208, %v682
        %v1211 = vadd.f32 %v1209, %v683
        %v1212 = vadd.f32 %v678, %v1210
        %v1213 = vadd.f32 %v679, %v1211
        %v1214 = vld [vmem:[%s7] sm:$0xf]
        %v1215 = vld [vmem:[%s7 + $0x4] sm:$0xf]
        %v1216 = vld [vmem:[%s7 + $0x8] sm:$0xf]
        %v1217 = vld [vmem:[%s7 + $0xc] sm:$0xf]
        %v1218 = vpack.c.bf16 %v1213, %v1212
        %v1223 = vunpack.c.l.b16 %v1214
        %v1224 = vunpack.c.l.b16 %v1215
        %v1225 = vunpack.c.l.b16 %v1216
        %v1226 = vunpack.c.l.b16 %v1217
        %v1227 = vpack.c.b16 %v1224, %v1223
        %v1228 = vpack.c.b16 %v1226, %v1225
        %vm1229 = vcmask 130048
        %v1231 = vsel %vm1229, %v1227, 0
        %v1234 = vsel %vm1229, %v1228, 0
        %1236 = vmatprep.subr.bf16.mxu0 0
        %1237 = vmatpush1.bf16.msra.mxu0 %v1218
        %1238 = vmatprep.subr.bf16.mxu0 0
        %1239 = vmatpush1.bf16.msra.mxu0 0
        %1240 = vmatprep.subr.bf16.mxu0 0
        %1241 = vmatpush1.bf16.msra.mxu0 0
        %1242 = vmatprep.subr.bf16.mxu0 0
        %1243 = vmatpush1.bf16.msra.mxu0 0
        %1244 = vmatprep.subr.bf16.mxu0 0
        %1245 = vmatpush1.bf16.msra.mxu0 0
        %1246 = vmatprep.subr.bf16.mxu0 0
        %1247 = vmatpush1.bf16.msra.mxu0 0
        %1248 = vmatprep.subr.bf16.mxu0 0
        %1249 = vmatpush1.bf16.msra.mxu0 0
        %1250 = vmatprep.subr.bf16.mxu0 0
        %1251 = vmatpush1.bf16.msra.mxu0 0
        %1252 = vmatprep.subr.bf16.mxu0 0
        %1253 = vmatpush1.bf16.msra.mxu0 0
        %1254 = vmatprep.subr.bf16.mxu0 0
        %1255 = vmatpush1.bf16.msra.mxu0 0
        %1256 = vmatprep.subr.bf16.mxu0 0
        %1257 = vmatpush1.bf16.msra.mxu0 0
        %1258 = vmatprep.subr.bf16.mxu0 0
        %1259 = vmatpush1.bf16.msra.mxu0 0
        %1260 = vmatprep.subr.bf16.mxu0 0
        %1261 = vmatpush1.bf16.msra.mxu0 0
        %1262 = vmatprep.subr.bf16.mxu0 0
        %1263 = vmatpush1.bf16.msra.mxu0 0
        %1264 = vmatprep.subr.bf16.mxu0 0
        %1265 = vmatpush1.bf16.msra.mxu0 0
        %1266 = vmatprep.subr.bf16.mxu0 0
        %1267 = vmatpush1.bf16.msra.mxu0 0
        %1268 = vmatprep.mubr.bf16.mxu0 0
        %1269 = vmatmul.mubr.bf16.gmra.mrb[0].mxu0 %v1231
        %v1270 = vpop.f32.mrb[0].mxu0
        %v1271 = vadd.f32 0.0, %v1270
        %v1272 = vpop.f32.mrb[0].mxu0
        %v1273 = vpop.f32.mrb[0].mxu0
        %v1274 = vadd.f32 0.0, %v1273
        %v1275 = vpop.f32.mrb[0].mxu0
        %1276 = vmatprep.mubr.bf16.mxu0 0
        %1277 = vmatmul.mubr.bf16.gmra.mrb[0].mxu0 %v1234
        %v1278 = vpop.f32.mrb[0].mxu0
        %v1279 = vadd.f32 0.0, %v1278
        %v1280 = vpop.f32.mrb[0].mxu0
        %v1281 = vpop.f32.mrb[0].mxu0
        %v1282 = vadd.f32 0.0, %v1281
        %v1283 = vpop.f32.mrb[0].mxu0
        %1284 = vdwg.mxu0
        %v1285 = vpack.c.bf16 %v1274, %v1271
        %v1286 = vpack.c.bf16 %v1282, %v1279
        %v1287 = vld [vmem:[%s8] sm:$0xf]
        %v1288 = vld [vmem:[%s8 + $0x4] sm:$0xf]
        %v1289 = vld [vmem:[%s8 + $0x8] sm:$0xf]
        %v1290 = vld [vmem:[%s8 + $0xc] sm:$0xf]
        %v1291 = vld [vmem:[%s8 + $0x10] sm:$0xf]
        %v1292 = vld [vmem:[%s8 + $0x14] sm:$0xf]
        %v1293 = vld [vmem:[%s8 + $0x18] sm:$0xf]
        %v1294 = vld [vmem:[%s8 + $0x1c] sm:$0xf]
        %v1303 = vunpack.c.l.b16 %v1287
        %v1304 = vunpack.c.l.b16 %v1288
        %v1305 = vunpack.c.l.b16 %v1289
        %v1306 = vunpack.c.l.b16 %v1290
        %v1307 = vunpack.c.l.b16 %v1291
        %v1308 = vunpack.c.l.b16 %v1292
        %v1309 = vunpack.c.l.b16 %v1293
        %v1310 = vunpack.c.l.b16 %v1294
        %v1311 = vpack.c.b16 %v1304, %v1303
        %v1312 = vpack.c.b16 %v1306, %v1305
        %v1313 = vpack.c.b16 %v1308, %v1307
        %v1314 = vpack.c.b16 %v1310, %v1309
        %v1320 = vsel %vm750, %v1285, 0
        %v1323 = vsel %vm750, %v1286, 0
        %1325 = vmatprep.subr.bf16.mxu0 0
        %1326 = vmatpush1.bf16.msra.mxu0 %v1311
        %1327 = vmatprep.subr.bf16.mxu0 0
        %1328 = vmatpush1.bf16.msra.mxu0 %v1312
        %1329 = vmatprep.subr.bf16.mxu0 0
        %1330 = vmatpush1.bf16.msra.mxu0 %v1313
        %1331 = vmatprep.subr.bf16.mxu0 0
        %1332 = vmatpush1.bf16.msra.mxu0 %v1314
        %1333 = vmatprep.subr.bf16.mxu0 0
        %1334 = vmatpush1.bf16.msra.mxu0 0
        %1335 = vmatprep.subr.bf16.mxu0 0
        %1336 = vmatpush1.bf16.msra.mxu0 0
        %1337 = vmatprep.subr.bf16.mxu0 0
        %1338 = vmatpush1.bf16.msra.mxu0 0
        %1339 = vmatprep.subr.bf16.mxu0 0
        %1340 = vmatpush1.bf16.msra.mxu0 0
        %1341 = vmatprep.subr.bf16.mxu0 0
        %1342 = vmatpush1.bf16.msra.mxu0 0
        %1343 = vmatprep.subr.bf16.mxu0 0
        %1344 = vmatpush1.bf16.msra.mxu0 0
        %1345 = vmatprep.subr.bf16.mxu0 0
        %1346 = vmatpush1.bf16.msra.mxu0 0
        %1347 = vmatprep.subr.bf16.mxu0 0
        %1348 = vmatpush1.bf16.msra.mxu0 0
        %1349 = vmatprep.subr.bf16.mxu0 0
        %1350 = vmatpush1.bf16.msra.mxu0 0
        %1351 = vmatprep.subr.bf16.mxu0 0
        %1352 = vmatpush1.bf16.msra.mxu0 0
        %1353 = vmatprep.subr.bf16.mxu0 0
        %1354 = vmatpush1.bf16.msra.mxu0 0
        %1355 = vmatprep.subr.bf16.mxu0 0
        %1356 = vmatpush1.bf16.msra.mxu0 0
        %1357 = vmatprep.mubr.bf16.mxu0 0
        %1358 = vmatmul.mubr.bf16.gmra.mrb[0].mxu0 %v1320
        %v1359 = vpop.f32.mrb[0].mxu0
        %v1360 = vadd.f32 0.0, %v1359
        %v1361 = vpop.f32.mrb[0].mxu0
        %v1362 = vpop.f32.mrb[0].mxu0
        %v1363 = vadd.f32 0.0, %v1362
        %v1364 = vpop.f32.mrb[0].mxu0
        %1365 = vmatprep.mubr.bf16.mxu0 0
        %1366 = vmatmul.mubr.bf16.gmra.mrb[0].mxu0 %v1323
        %v1367 = vpop.f32.mrb[0].mxu0
        %v1368 = vadd.f32 0.0, %v1367
        %v1369 = vpop.f32.mrb[0].mxu0
        %v1370 = vpop.f32.mrb[0].mxu0
        %v1371 = vadd.f32 0.0, %v1370
        %v1372 = vpop.f32.mrb[0].mxu0
        %1373 = vdwg.mxu0
        %v1374 = vmax.f32 %v1360, 0.0
        %v1375 = vmax.f32 %v1363, 0.0
        %v1376 = vmax.f32 %v1368, 0.0
        %v1377 = vmax.f32 %v1371, 0.0
        %v1378 = vpack.c.bf16 %v1375, %v1374
        %v1379 = vpack.c.bf16 %v1377, %v1376
        %v1380 = vld [vmem:[#allocation11] sm:$0xf]
        %v1381 = vld [vmem:[#allocation11 + $0x4] sm:$0xf]
        %v1382 = vld [vmem:[#allocation11 + $0x8] sm:$0xf]
        %v1383 = vld [vmem:[#allocation11 + $0xc] sm:$0xf]
        %v1384 = vld [vmem:[#allocation11 + $0x10] sm:$0xf]
        %v1385 = vld [vmem:[#allocation11 + $0x14] sm:$0xf]
        %v1386 = vld [vmem:[#allocation11 + $0x18] sm:$0xf]
        %v1387 = vld [vmem:[#allocation11 + $0x1c] sm:$0xf]
        %v1388 = vld [vmem:[#allocation11 + $0x20] sm:$0xf]
        %v1389 = vld [vmem:[#allocation11 + $0x24] sm:$0xf]
        %v1390 = vld [vmem:[#allocation11 + $0x28] sm:$0xf]
        %v1391 = vld [vmem:[#allocation11 + $0x2c] sm:$0xf]
        %v1392 = vld [vmem:[#allocation11 + $0x30] sm:$0xf]
        %v1393 = vld [vmem:[#allocation11 + $0x34] sm:$0xf]
        %v1394 = vld [vmem:[#allocation11 + $0x38] sm:$0xf]
        %v1395 = vld [vmem:[#allocation11 + $0x3c] sm:$0xf]
        %v1396 = vld [vmem:[%s600] sm:$0xff]
        %v1397 = vld [vmem:[%s600 + $0x20] sm:$0xff]
        %v1398 = vld [vmem:[%s600 + $0x40] sm:$0xff]
        %v1399 = vld [vmem:[%s600 + $0x60] sm:$0xff]
        %v1400 = vmax.bf16 %v1396, 0
        %v1401 = vmax.bf16 %v1397, 0
        %v1402 = vmax.bf16 %v1398, 0
        %v1403 = vmax.bf16 %v1399, 0
        %v1404 = vld [vmem:[%s10] sm:$0xf]
        %v1405 = vld [vmem:[%s10 + $0x4] sm:$0xf]
        %v1406 = vld [vmem:[%s10 + $0x8] sm:$0xf]
        %v1407 = vld [vmem:[%s10 + $0xc] sm:$0xf]
        %v1408 = vld [vmem:[%s10 + $0x10] sm:$0xf]
        %v1409 = vld [vmem:[%s10 + $0x14] sm:$0xf]
        %v1410 = vld [vmem:[%s10 + $0x18] sm:$0xf]
        %v1411 = vld [vmem:[%s10 + $0x1c] sm:$0xf]
        %v1412 = vld [vmem:[%s10 + $0x20] sm:$0xf]
        %v1413 = vld [vmem:[%s10 + $0x24] sm:$0xf]
        %v1414 = vld [vmem:[%s10 + $0x28] sm:$0xf]
        %v1415 = vld [vmem:[%s10 + $0x2c] sm:$0xf]
        %v1416 = vld [vmem:[%s10 + $0x30] sm:$0xf]
        %v1417 = vld [vmem:[%s10 + $0x34] sm:$0xf]
        %v1418 = vld [vmem:[%s10 + $0x38] sm:$0xf]
        %v1419 = vld [vmem:[%s10 + $0x3c] sm:$0xf]
        %v1420 = vld [vmem:[%s10 + $0x40] sm:$0xf]
        %v1421 = vld [vmem:[%s10 + $0x44] sm:$0xf]
        %v1422 = vld [vmem:[%s10 + $0x48] sm:$0xf]
        %v1423 = vld [vmem:[%s10 + $0x4c] sm:$0xf]
        %v1424 = vld [vmem:[%s10 + $0x50] sm:$0xf]
        %v1425 = vld [vmem:[%s10 + $0x54] sm:$0xf]
        %v1426 = vld [vmem:[%s10 + $0x58] sm:$0xf]
        %v1427 = vld [vmem:[%s10 + $0x5c] sm:$0xf]
        %v1428 = vld [vmem:[%s10 + $0x60] sm:$0xf]
        %v1429 = vld [vmem:[%s10 + $0x64] sm:$0xf]
        %v1430 = vld [vmem:[%s10 + $0x68] sm:$0xf]
        %v1431 = vld [vmem:[%s10 + $0x6c] sm:$0xf]
        %v1432 = vld [vmem:[%s10 + $0x70] sm:$0xf]
        %v1433 = vld [vmem:[%s10 + $0x74] sm:$0xf]
        %v1434 = vld [vmem:[%s10 + $0x78] sm:$0xf]
        %v1435 = vld [vmem:[%s10 + $0x7c] sm:$0xf]
        %v1440 = vunpack.c.l.b16 %v1400
        %v1441 = vunpack.c.h.b16 %v1400
        %v1442 = vunpack.c.l.b16 %v1401
        %v1443 = vunpack.c.h.b16 %v1401
        %v1444 = vunpack.c.l.b16 %v1402
        %v1445 = vunpack.c.h.b16 %v1402
        %v1446 = vunpack.c.l.b16 %v1403
        %v1447 = vunpack.c.h.b16 %v1403
        %v1448 = vpack.c.b16 %v1442, %v1440
        %v1449 = vpack.c.b16 %v1443, %v1441
        %v1450 = vpack.c.b16 %v1446, %v1444
        %v1451 = vpack.c.b16 %v1447, %v1445
        %v1488 = vunpack.c.l.b16 %v1404
        %v1489 = vunpack.c.l.b16 %v1405
        %v1490 = vunpack.c.l.b16 %v1406
        %v1491 = vunpack.c.l.b16 %v1407
        %v1492 = vunpack.c.l.b16 %v1408
        %v1493 = vunpack.c.l.b16 %v1409
        %v1494 = vunpack.c.l.b16 %v1410
        %v1495 = vunpack.c.l.b16 %v1411
        %v1496 = vunpack.c.l.b16 %v1412
        %v1497 = vunpack.c.l.b16 %v1413
        %v1498 = vunpack.c.l.b16 %v1414
        %v1499 = vunpack.c.l.b16 %v1415
        %v1500 = vunpack.c.l.b16 %v1416
        %v1501 = vunpack.c.l.b16 %v1417
        %v1502 = vunpack.c.l.b16 %v1418
        %v1503 = vunpack.c.l.b16 %v1419
        %v1504 = vunpack.c.l.b16 %v1420
        %v1505 = vunpack.c.l.b16 %v1421
        %v1506 = vunpack.c.l.b16 %v1422
        %v1507 = vunpack.c.l.b16 %v1423
        %v1508 = vunpack.c.l.b16 %v1424
        %v1509 = vunpack.c.l.b16 %v1425
        %v1510 = vunpack.c.l.b16 %v1426
        %v1511 = vunpack.c.l.b16 %v1427
        %v1512 = vunpack.c.l.b16 %v1428
        %v1513 = vunpack.c.l.b16 %v1429
        %v1514 = vunpack.c.l.b16 %v1430
        %v1515 = vunpack.c.l.b16 %v1431
        %v1516 = vunpack.c.l.b16 %v1432
        %v1517 = vunpack.c.l.b16 %v1433
        %v1518 = vunpack.c.l.b16 %v1434
        %v1519 = vunpack.c.l.b16 %v1435
        %v1520 = vpack.c.b16 %v1489, %v1488
        %v1521 = vpack.c.b16 %v1491, %v1490
        %v1522 = vpack.c.b16 %v1493, %v1492
        %v1523 = vpack.c.b16 %v1495, %v1494
        %v1524 = vpack.c.b16 %v1497, %v1496
        %v1525 = vpack.c.b16 %v1499, %v1498
        %v1526 = vpack.c.b16 %v1501, %v1500
        %v1527 = vpack.c.b16 %v1503, %v1502
        %v1528 = vpack.c.b16 %v1505, %v1504
        %v1529 = vpack.c.b16 %v1507, %v1506
        %v1530 = vpack.c.b16 %v1509, %v1508
        %v1531 = vpack.c.b16 %v1511, %v1510
        %v1532 = vpack.c.b16 %v1513, %v1512
        %v1533 = vpack.c.b16 %v1515, %v1514
        %v1534 = vpack.c.b16 %v1517, %v1516
        %v1535 = vpack.c.b16 %v1519, %v1518
        %1552 = vmatprep.subr.bf16.mxu0 0
        %1553 = vmatpush1.bf16.msra.mxu0 %v1520
        %1554 = vmatprep.subr.bf16.mxu0 0
        %1555 = vmatpush1.bf16.msra.mxu0 %v1521
        %1556 = vmatprep.subr.bf16.mxu0 0
        %1557 = vmatpush1.bf16.msra.mxu0 %v1522
        %1558 = vmatprep.subr.bf16.mxu0 0
        %1559 = vmatpush1.bf16.msra.mxu0 %v1523
        %1560 = vmatprep.subr.bf16.mxu0 0
        %1561 = vmatpush1.bf16.msra.mxu0 %v1524
        %1562 = vmatprep.subr.bf16.mxu0 0
        %1563 = vmatpush1.bf16.msra.mxu0 %v1525
        %1564 = vmatprep.subr.bf16.mxu0 0
        %1565 = vmatpush1.bf16.msra.mxu0 %v1526
        %1566 = vmatprep.subr.bf16.mxu0 0
        %1567 = vmatpush1.bf16.msra.mxu0 %v1527
        %1568 = vmatprep.subr.bf16.mxu0 0
        %1569 = vmatpush1.bf16.msra.mxu0 %v1528
        %1570 = vmatprep.subr.bf16.mxu0 0
        %1571 = vmatpush1.bf16.msra.mxu0 %v1529
        %1572 = vmatprep.subr.bf16.mxu0 0
        %1573 = vmatpush1.bf16.msra.mxu0 %v1530
        %1574 = vmatprep.subr.bf16.mxu0 0
        %1575 = vmatpush1.bf16.msra.mxu0 %v1531
        %1576 = vmatprep.subr.bf16.mxu0 0
        %1577 = vmatpush1.bf16.msra.mxu0 %v1532
        %1578 = vmatprep.subr.bf16.mxu0 0
        %1579 = vmatpush1.bf16.msra.mxu0 %v1533
        %1580 = vmatprep.subr.bf16.mxu0 0
        %1581 = vmatpush1.bf16.msra.mxu0 %v1534
        %1582 = vmatprep.subr.bf16.mxu0 0
        %1583 = vmatpush1.bf16.msra.mxu0 %v1535
        %1584 = vmatprep.mubr.bf16.mxu0 %v1449
        %1585 = vmatmul.mubr.bf16.gmra.mrb[0].mxu0 %v1448
        %v1586 = vpop.f32.mrb[0].mxu0
        %v1587 = vadd.f32 0.0, %v1586
        %v1588 = vpop.f32.mrb[0].mxu0
        %v1589 = vpop.f32.mrb[0].mxu0
        %v1590 = vadd.f32 0.0, %v1589
        %v1591 = vpop.f32.mrb[0].mxu0
        %1592 = vmatprep.mubr.bf16.mxu0 %v1451
        %1593 = vmatmul.mubr.bf16.gmra.mrb[0].mxu0 %v1450
        %v1594 = vpop.f32.mrb[0].mxu0
        %v1595 = vadd.f32 0.0, %v1594
        %v1596 = vpop.f32.mrb[0].mxu0
        %v1597 = vpop.f32.mrb[0].mxu0
        %v1598 = vadd.f32 0.0, %v1597
        %v1599 = vpop.f32.mrb[0].mxu0
        %1600 = vdwg.mxu0
        %v1601 = vld [vmem:[%s600 + $0x8] sm:$0xff]
        %v1602 = vld [vmem:[%s600 + $0x28] sm:$0xff]
        %v1603 = vld [vmem:[%s600 + $0x48] sm:$0xff]
        %v1604 = vld [vmem:[%s600 + $0x68] sm:$0xff]
        %v1605 = vmax.bf16 %v1601, 0
        %v1606 = vmax.bf16 %v1602, 0
        %v1607 = vmax.bf16 %v1603, 0
        %v1608 = vmax.bf16 %v1604, 0
        %v1613 = vunpack.c.l.b16 %v1605
        %v1614 = vunpack.c.h.b16 %v1605
        %v1615 = vunpack.c.l.b16 %v1606
        %v1616 = vunpack.c.h.b16 %v1606
        %v1617 = vunpack.c.l.b16 %v1607
        %v1618 = vunpack.c.h.b16 %v1607
        %v1619 = vunpack.c.l.b16 %v1608
        %v1620 = vunpack.c.h.b16 %v1608
        %v1621 = vpack.c.b16 %v1615, %v1613
        %v1622 = vpack.c.b16 %v1616, %v1614
        %v1623 = vpack.c.b16 %v1619, %v1617
        %v1624 = vpack.c.b16 %v1620, %v1618
        %1629 = vmatprep.subr.bf16.mxu0 0
        %1630 = vmatpush1.bf16.msra.mxu0 %v1520
        %1631 = vmatprep.subr.bf16.mxu0 0
        %1632 = vmatpush1.bf16.msra.mxu0 %v1521
        %1633 = vmatprep.subr.bf16.mxu0 0
        %1634 = vmatpush1.bf16.msra.mxu0 %v1522
        %1635 = vmatprep.subr.bf16.mxu0 0
        %1636 = vmatpush1.bf16.msra.mxu0 %v1523
        %1637 = vmatprep.subr.bf16.mxu0 0
        %1638 = vmatpush1.bf16.msra.mxu0 %v1524
        %1639 = vmatprep.subr.bf16.mxu0 0
        %1640 = vmatpush1.bf16.msra.mxu0 %v1525
        %1641 = vmatprep.subr.bf16.mxu0 0
        %1642 = vmatpush1.bf16.msra.mxu0 %v1526
        %1643 = vmatprep.subr.bf16.mxu0 0
        %1644 = vmatpush1.bf16.msra.mxu0 %v1527
        %1645 = vmatprep.subr.bf16.mxu0 0
        %1646 = vmatpush1.bf16.msra.mxu0 %v1528
        %1647 = vmatprep.subr.bf16.mxu0 0
        %1648 = vmatpush1.bf16.msra.mxu0 %v1529
        %1649 = vmatprep.subr.bf16.mxu0 0
        %1650 = vmatpush1.bf16.msra.mxu0 %v1530
        %1651 = vmatprep.subr.bf16.mxu0 0
        %1652 = vmatpush1.bf16.msra.mxu0 %v1531
        %1653 = vmatprep.subr.bf16.mxu0 0
        %1654 = vmatpush1.bf16.msra.mxu0 %v1532
        %1655 = vmatprep.subr.bf16.mxu0 0
        %1656 = vmatpush1.bf16.msra.mxu0 %v1533
        %1657 = vmatprep.subr.bf16.mxu0 0
        %1658 = vmatpush1.bf16.msra.mxu0 %v1534
        %1659 = vmatprep.subr.bf16.mxu0 0
        %1660 = vmatpush1.bf16.msra.mxu0 %v1535
        %1661 = vmatprep.mubr.bf16.mxu0 %v1622
        %1662 = vmatmul.mubr.bf16.gmra.mrb[0].mxu0 %v1621
        %v1663 = vpop.f32.mrb[0].mxu0
        %v1664 = vadd.f32 0.0, %v1663
        %v1665 = vpop.f32.mrb[0].mxu0
        %v1666 = vpop.f32.mrb[0].mxu0
        %v1667 = vadd.f32 0.0, %v1666
        %v1668 = vpop.f32.mrb[0].mxu0
        %1669 = vmatprep.mubr.bf16.mxu0 %v1624
        %1670 = vmatmul.mubr.bf16.gmra.mrb[0].mxu0 %v1623
        %v1671 = vpop.f32.mrb[0].mxu0
        %v1672 = vadd.f32 0.0, %v1671
        %v1673 = vpop.f32.mrb[0].mxu0
        %v1674 = vpop.f32.mrb[0].mxu0
        %v1675 = vadd.f32 0.0, %v1674
        %v1676 = vpop.f32.mrb[0].mxu0
        %1677 = vdwg.mxu0
        %v1678 = vld [vmem:[%s600 + $0x10] sm:$0xff]
        %v1679 = vld [vmem:[%s600 + $0x30] sm:$0xff]
        %v1680 = vld [vmem:[%s600 + $0x50] sm:$0xff]
        %v1681 = vld [vmem:[%s600 + $0x70] sm:$0xff]
        %v1682 = vmax.bf16 %v1678, 0
        %v1683 = vmax.bf16 %v1679, 0
        %v1684 = vmax.bf16 %v1680, 0
        %v1685 = vmax.bf16 %v1681, 0
        %v1690 = vunpack.c.l.b16 %v1682
        %v1691 = vunpack.c.h.b16 %v1682
        %v1692 = vunpack.c.l.b16 %v1683
        %v1693 = vunpack.c.h.b16 %v1683
        %v1694 = vunpack.c.l.b16 %v1684
        %v1695 = vunpack.c.h.b16 %v1684
        %v1696 = vunpack.c.l.b16 %v1685
        %v1697 = vunpack.c.h.b16 %v1685
        %v1698 = vpack.c.b16 %v1692, %v1690
        %v1699 = vpack.c.b16 %v1693, %v1691
        %v1700 = vpack.c.b16 %v1696, %v1694
        %v1701 = vpack.c.b16 %v1697, %v1695
        %1706 = vmatprep.subr.bf16.mxu0 0
        %1707 = vmatpush1.bf16.msra.mxu0 %v1520
        %1708 = vmatprep.subr.bf16.mxu0 0
        %1709 = vmatpush1.bf16.msra.mxu0 %v1521
        %1710 = vmatprep.subr.bf16.mxu0 0
        %1711 = vmatpush1.bf16.msra.mxu0 %v1522
        %1712 = vmatprep.subr.bf16.mxu0 0
        %1713 = vmatpush1.bf16.msra.mxu0 %v1523
        %1714 = vmatprep.subr.bf16.mxu0 0
        %1715 = vmatpush1.bf16.msra.mxu0 %v1524
        %1716 = vmatprep.subr.bf16.mxu0 0
        %1717 = vmatpush1.bf16.msra.mxu0 %v1525
        %1718 = vmatprep.subr.bf16.mxu0 0
        %1719 = vmatpush1.bf16.msra.mxu0 %v1526
        %1720 = vmatprep.subr.bf16.mxu0 0
        %1721 = vmatpush1.bf16.msra.mxu0 %v1527
        %1722 = vmatprep.subr.bf16.mxu0 0
        %1723 = vmatpush1.bf16.msra.mxu0 %v1528
        %1724 = vmatprep.subr.bf16.mxu0 0
        %1725 = vmatpush1.bf16.msra.mxu0 %v1529
        %1726 = vmatprep.subr.bf16.mxu0 0
        %1727 = vmatpush1.bf16.msra.mxu0 %v1530
        %1728 = vmatprep.subr.bf16.mxu0 0
        %1729 = vmatpush1.bf16.msra.mxu0 %v1531
        %1730 = vmatprep.subr.bf16.mxu0 0
        %1731 = vmatpush1.bf16.msra.mxu0 %v1532
        %1732 = vmatprep.subr.bf16.mxu0 0
        %1733 = vmatpush1.bf16.msra.mxu0 %v1533
        %1734 = vmatprep.subr.bf16.mxu0 0
        %1735 = vmatpush1.bf16.msra.mxu0 %v1534
        %1736 = vmatprep.subr.bf16.mxu0 0
        %1737 = vmatpush1.bf16.msra.mxu0 %v1535
        %1738 = vmatprep.mubr.bf16.mxu0 %v1699
        %1739 = vmatmul.mubr.bf16.gmra.mrb[0].mxu0 %v1698
        %v1740 = vpop.f32.mrb[0].mxu0
        %v1741 = vadd.f32 0.0, %v1740
        %v1742 = vpop.f32.mrb[0].mxu0
        %v1743 = vpop.f32.mrb[0].mxu0
        %v1744 = vadd.f32 0.0, %v1743
        %v1745 = vpop.f32.mrb[0].mxu0
        %1746 = vmatprep.mubr.bf16.mxu0 %v1701
        %1747 = vmatmul.mubr.bf16.gmra.mrb[0].mxu0 %v1700
        %v1748 = vpop.f32.mrb[0].mxu0
        %v1749 = vadd.f32 0.0, %v1748
        %v1750 = vpop.f32.mrb[0].mxu0
        %v1751 = vpop.f32.mrb[0].mxu0
        %v1752 = vadd.f32 0.0, %v1751
        %v1753 = vpop.f32.mrb[0].mxu0
        %1754 = vdwg.mxu0
        %v1755 = vld [vmem:[%s600 + $0x18] sm:$0xff]
        %v1756 = vld [vmem:[%s600 + $0x38] sm:$0xff]
        %v1757 = vld [vmem:[%s600 + $0x58] sm:$0xff]
        %v1758 = vld [vmem:[%s600 + $0x78] sm:$0xff]
        %v1759 = vmax.bf16 %v1755, 0
        %v1760 = vmax.bf16 %v1756, 0
        %v1761 = vmax.bf16 %v1757, 0
        %v1762 = vmax.bf16 %v1758, 0
        %v1767 = vunpack.c.l.b16 %v1759
        %v1768 = vunpack.c.h.b16 %v1759
        %v1769 = vunpack.c.l.b16 %v1760
        %v1770 = vunpack.c.h.b16 %v1760
        %v1771 = vunpack.c.l.b16 %v1761
        %v1772 = vunpack.c.h.b16 %v1761
        %v1773 = vunpack.c.l.b16 %v1762
        %v1774 = vunpack.c.h.b16 %v1762
        %v1775 = vpack.c.b16 %v1769, %v1767
        %v1776 = vpack.c.b16 %v1770, %v1768
        %v1777 = vpack.c.b16 %v1773, %v1771
        %v1778 = vpack.c.b16 %v1774, %v1772
        %1783 = vmatprep.subr.bf16.mxu0 0
        %1784 = vmatpush1.bf16.msra.mxu0 %v1520
        %1785 = vmatprep.subr.bf16.mxu0 0
        %1786 = vmatpush1.bf16.msra.mxu0 %v1521
        %1787 = vmatprep.subr.bf16.mxu0 0
        %1788 = vmatpush1.bf16.msra.mxu0 %v1522
        %1789 = vmatprep.subr.bf16.mxu0 0
        %1790 = vmatpush1.bf16.msra.mxu0 %v1523
        %1791 = vmatprep.subr.bf16.mxu0 0
        %1792 = vmatpush1.bf16.msra.mxu0 %v1524
        %1793 = vmatprep.subr.bf16.mxu0 0
        %1794 = vmatpush1.bf16.msra.mxu0 %v1525
        %1795 = vmatprep.subr.bf16.mxu0 0
        %1796 = vmatpush1.bf16.msra.mxu0 %v1526
        %1797 = vmatprep.subr.bf16.mxu0 0
        %1798 = vmatpush1.bf16.msra.mxu0 %v1527
        %1799 = vmatprep.subr.bf16.mxu0 0
        %1800 = vmatpush1.bf16.msra.mxu0 %v1528
        %1801 = vmatprep.subr.bf16.mxu0 0
        %1802 = vmatpush1.bf16.msra.mxu0 %v1529
        %1803 = vmatprep.subr.bf16.mxu0 0
        %1804 = vmatpush1.bf16.msra.mxu0 %v1530
        %1805 = vmatprep.subr.bf16.mxu0 0
        %1806 = vmatpush1.bf16.msra.mxu0 %v1531
        %1807 = vmatprep.subr.bf16.mxu0 0
        %1808 = vmatpush1.bf16.msra.mxu0 %v1532
        %1809 = vmatprep.subr.bf16.mxu0 0
        %1810 = vmatpush1.bf16.msra.mxu0 %v1533
        %1811 = vmatprep.subr.bf16.mxu0 0
        %1812 = vmatpush1.bf16.msra.mxu0 %v1534
        %1813 = vmatprep.subr.bf16.mxu0 0
        %1814 = vmatpush1.bf16.msra.mxu0 %v1535
        %1815 = vmatprep.mubr.bf16.mxu0 %v1776
        %1816 = vmatmul.mubr.bf16.gmra.mrb[0].mxu0 %v1775
        %v1817 = vpop.f32.mrb[0].mxu0
        %v1818 = vadd.f32 0.0, %v1817
        %v1819 = vpop.f32.mrb[0].mxu0
        %v1820 = vpop.f32.mrb[0].mxu0
        %v1821 = vadd.f32 0.0, %v1820
        %v1822 = vpop.f32.mrb[0].mxu0
        %1823 = vmatprep.mubr.bf16.mxu0 %v1778
        %1824 = vmatmul.mubr.bf16.gmra.mrb[0].mxu0 %v1777
        %v1825 = vpop.f32.mrb[0].mxu0
        %v1826 = vadd.f32 0.0, %v1825
        %v1827 = vpop.f32.mrb[0].mxu0
        %v1828 = vpop.f32.mrb[0].mxu0
        %v1829 = vadd.f32 0.0, %v1828
        %v1830 = vpop.f32.mrb[0].mxu0
        %1831 = vdwg.mxu0
        %1836 = vrot.lane.b32.xlu0 %v1664, 32
        %v1837 = vpop.permute.xlu0 %1836
        %1838 = vrot.lane.b32.xlu0 %v1667, 32
        %v1839 = vpop.permute.xlu0 %1838
        %1840 = vrot.lane.b32.xlu0 %v1672, 32
        %v1841 = vpop.permute.xlu0 %1840
        %1842 = vrot.lane.b32.xlu0 %v1675, 32
        %v1843 = vpop.permute.xlu0 %1842
        %1852 = vrot.lane.b32.xlu0 %v1741, 64
        %v1853 = vpop.permute.xlu0 %1852
        %1854 = vrot.lane.b32.xlu0 %v1744, 64
        %v1855 = vpop.permute.xlu0 %1854
        %1856 = vrot.lane.b32.xlu0 %v1749, 64
        %v1857 = vpop.permute.xlu0 %1856
        %1858 = vrot.lane.b32.xlu0 %v1752, 64
        %v1859 = vpop.permute.xlu0 %1858
        %1868 = vrot.lane.b32.xlu0 %v1818, 96
        %v1869 = vpop.permute.xlu0 %1868
        %1870 = vrot.lane.b32.xlu0 %v1821, 96
        %v1871 = vpop.permute.xlu0 %1870
        %1872 = vrot.lane.b32.xlu0 %v1826, 96
        %v1873 = vpop.permute.xlu0 %1872
        %1874 = vrot.lane.b32.xlu0 %v1829, 96
        %v1875 = vpop.permute.xlu0 %1874
        %vm1880 = vcmask 261120
        %v1881 = vsel %vm1880, %v1587, %v1837
        %v1882 = vsel %vm1880, %v1590, %v1839
        %v1883 = vsel %vm1880, %v1595, %v1841
        %v1884 = vsel %vm1880, %v1598, %v1843
        %v1885 = vsel %vm750, %v1881, %v1853
        %v1886 = vsel %vm750, %v1882, %v1855
        %v1887 = vsel %vm750, %v1883, %v1857
        %v1888 = vsel %vm750, %v1884, %v1859
        %vm1889 = vcmask 785408
        %v1890 = vsel %vm1889, %v1885, %v1869
        %v1891 = vsel %vm1889, %v1886, %v1871
        %v1892 = vsel %vm1889, %v1887, %v1873
        %v1893 = vsel %vm1889, %v1888, %v1875
        %v1910 = vunpack.c.l.b16 %v1380
        %v1911 = vunpack.c.l.b16 %v1381
        %v1912 = vunpack.c.l.b16 %v1382
        %v1913 = vunpack.c.l.b16 %v1383
        %v1914 = vunpack.c.l.b16 %v1384
        %v1915 = vunpack.c.l.b16 %v1385
        %v1916 = vunpack.c.l.b16 %v1386
        %v1917 = vunpack.c.l.b16 %v1387
        %v1918 = vunpack.c.l.b16 %v1388
        %v1919 = vunpack.c.l.b16 %v1389
        %v1920 = vunpack.c.l.b16 %v1390
        %v1921 = vunpack.c.l.b16 %v1391
        %v1922 = vunpack.c.l.b16 %v1392
        %v1923 = vunpack.c.l.b16 %v1393
        %v1924 = vunpack.c.l.b16 %v1394
        %v1925 = vunpack.c.l.b16 %v1395
        %v1926 = vpack.c.b16 %v1911, %v1910
        %v1927 = vpack.c.b16 %v1913, %v1912
        %v1928 = vpack.c.b16 %v1915, %v1914
        %v1929 = vpack.c.b16 %v1917, %v1916
        %v1930 = vpack.c.b16 %v1919, %v1918
        %v1931 = vpack.c.b16 %v1921, %v1920
        %v1932 = vpack.c.b16 %v1923, %v1922
        %v1933 = vpack.c.b16 %v1925, %v1924
        %1942 = vmatprep.subr.bf16.mxu0 0
        %1943 = vmatpush1.bf16.msra.mxu0 %v1926
        %1944 = vmatprep.subr.bf16.mxu0 0
        %1945 = vmatpush1.bf16.msra.mxu0 %v1927
        %1946 = vmatprep.subr.bf16.mxu0 0
        %1947 = vmatpush1.bf16.msra.mxu0 %v1928
        %1948 = vmatprep.subr.bf16.mxu0 0
        %1949 = vmatpush1.bf16.msra.mxu0 %v1929
        %1950 = vmatprep.subr.bf16.mxu0 0
        %1951 = vmatpush1.bf16.msra.mxu0 %v1930
        %1952 = vmatprep.subr.bf16.mxu0 0
        %1953 = vmatpush1.bf16.msra.mxu0 %v1931
        %1954 = vmatprep.subr.bf16.mxu0 0
        %1955 = vmatpush1.bf16.msra.mxu0 %v1932
        %1956 = vmatprep.subr.bf16.mxu0 0
        %1957 = vmatpush1.bf16.msra.mxu0 %v1933
        %1958 = vmatprep.subr.bf16.mxu0 0
        %1959 = vmatpush1.bf16.msra.mxu0 0
        %1960 = vmatprep.subr.bf16.mxu0 0
        %1961 = vmatpush1.bf16.msra.mxu0 0
        %1962 = vmatprep.subr.bf16.mxu0 0
        %1963 = vmatpush1.bf16.msra.mxu0 0
        %1964 = vmatprep.subr.bf16.mxu0 0
        %1965 = vmatpush1.bf16.msra.mxu0 0
        %1966 = vmatprep.subr.bf16.mxu0 0
        %1967 = vmatpush1.bf16.msra.mxu0 0
        %1968 = vmatprep.subr.bf16.mxu0 0
        %1969 = vmatpush1.bf16.msra.mxu0 0
        %1970 = vmatprep.subr.bf16.mxu0 0
        %1971 = vmatpush1.bf16.msra.mxu0 0
        %1972 = vmatprep.subr.bf16.mxu0 0
        %1973 = vmatpush1.bf16.msra.mxu0 0
        %1974 = vmatprep.mubr.bf16.mxu0 0
        %1975 = vmatmul.mubr.bf16.gmra.mrb[0].mxu0 %v1378
        %v1976 = vpop.f32.mrb[0].mxu0
        %v1977 = vadd.f32 %v1890, %v1976
        %v1978 = vpop.f32.mrb[0].mxu0
        %v1979 = vpop.f32.mrb[0].mxu0
        %v1980 = vadd.f32 %v1891, %v1979
        %v1981 = vpop.f32.mrb[0].mxu0
        %1982 = vmatprep.mubr.bf16.mxu0 0
        %1983 = vmatmul.mubr.bf16.gmra.mrb[0].mxu0 %v1379
        %v1984 = vpop.f32.mrb[0].mxu0
        %v1985 = vadd.f32 %v1892, %v1984
        %v1986 = vpop.f32.mrb[0].mxu0
        %v1987 = vpop.f32.mrb[0].mxu0
        %v1988 = vadd.f32 %v1893, %v1987
        %v1989 = vpop.f32.mrb[0].mxu0
        %1990 = vdwg.mxu0
        %v1991 = vld [vmem:[%s11] sm:$0x1]
        %v1993 = vlaneseq
        %v1994 = vshrl.u32 %v1993, 7
        %v1995 = vsub.s32 0, %v1994
        %v1996 = vrot.slane %v1991, %v1995
        %v1998 = vadd.f32 %v1977, %v1996
        %v1999 = vadd.f32 %v1980, %v1996
        %v2000 = vadd.f32 %v1985, %v1996
        %v2001 = vadd.f32 %v1988, %v1996
        %v2002 = vmax.f32 %v1998, 0.0
        %v2003 = vmax.f32 %v1999, 0.0
        %v2004 = vmax.f32 %v2000, 0.0
        %v2005 = vmax.f32 %v2001, 0.0
        %v2006 = vadd.s32 %v687, 16
        %v2007 = vadd.s32 %v687, 24
        %vm2008 = vcmp.ge.s32.totalorder %v2006, 1
        %vm2009 = vcmp.ge.s32.totalorder %v2007, 1
        %v2010 = vrot.slane %v2002, 7
        %v2011 = vrot.slane %v2003, 7
        %v2012 = vrot.slane %v2004, 7
        %v2013 = vrot.slane %v2005, 7
        %v2014 = vsel %vm693, %v2012, %v2013
        %v2015 = vsel %vm693, %v2011, %v2012
        %v2016 = vsel %vm693, %v2010, %v2011
        %v2017 = vsel %vm693, %v2013, %v2010
        %v2018 = vsel %vm689, %v2017, 0.0
        %v2019 = vsel %vm690, %v2016, 0.0
        %v2020 = vsel %vm2008, %v2015, 0.0
        %v2021 = vsel %vm2009, %v2014, 0.0
        %vm2022 = vcmp.lt.s32.totalorder %v687, 31
        %vm2023 = vcmp.lt.s32.totalorder %v688, 31
        %vm2024 = vcmp.lt.s32.totalorder %v2006, 31
        %vm2025 = vcmp.lt.s32.totalorder %v2007, 31
        %v2026 = vrot.slane %v2002, 1
        %v2027 = vrot.slane %v2003, 1
        %v2028 = vrot.slane %v2004, 1
        %v2029 = vrot.slane %v2005, 1
        %v2030 = vsel %vm702, %v2028, %v2029
        %v2031 = vsel %vm702, %v2027, %v2028
        %v2032 = vsel %vm702, %v2026, %v2027
        %v2033 = vsel %vm702, %v2029, %v2026
        %v2034 = vsel %vm2022, %v2032, 0.0
        %v2035 = vsel %vm2023, %v2031, 0.0
        %v2036 = vsel %vm2024, %v2030, 0.0
        %v2037 = vsel %vm2025, %v2033, 0.0
        %v2038 = vpack.c.bf16 %v2019, %v2018
        %v2039 = vpack.c.bf16 %v2021, %v2020
        %v2040 = vld [vmem:[%s12] sm:$0xf]
        %v2041 = vld [vmem:[%s12 + $0x4] sm:$0xf]
        %v2042 = vld [vmem:[%s12 + $0x8] sm:$0xf]
        %v2043 = vld [vmem:[%s12 + $0xc] sm:$0xf]
        %v2044 = vld [vmem:[%s12 + $0x10] sm:$0xf]
        %v2045 = vld [vmem:[%s12 + $0x14] sm:$0xf]
        %v2046 = vld [vmem:[%s12 + $0x18] sm:$0xf]
        %v2047 = vld [vmem:[%s12 + $0x1c] sm:$0xf]
        %v2048 = vld [vmem:[%s12 + $0x20] sm:$0xf]
        %v2049 = vld [vmem:[%s12 + $0x24] sm:$0xf]
        %v2050 = vld [vmem:[%s12 + $0x28] sm:$0xf]
        %v2051 = vld [vmem:[%s12 + $0x2c] sm:$0xf]
        %v2052 = vld [vmem:[%s12 + $0x30] sm:$0xf]
        %v2053 = vld [vmem:[%s12 + $0x34] sm:$0xf]
        %v2054 = vld [vmem:[%s12 + $0x38] sm:$0xf]
        %v2055 = vld [vmem:[%s12 + $0x3c] sm:$0xf]
        %v2056 = vpack.c.bf16 %v2003, %v2002
        %v2057 = vpack.c.bf16 %v2005, %v2004
        %s2058 = scalar_lea.vmem %s12, 64
        %v2059 = vld [vmem:[%s2058] sm:$0xf]
        %v2060 = vld [vmem:[%s2058 + $0x4] sm:$0xf]
        %v2061 = vld [vmem:[%s2058 + $0x8] sm:$0xf]
        %v2062 = vld [vmem:[%s2058 + $0xc] sm:$0xf]
        %v2063 = vld [vmem:[%s2058 + $0x10] sm:$0xf]
        %v2064 = vld [vmem:[%s2058 + $0x14] sm:$0xf]
        %v2065 = vld [vmem:[%s2058 + $0x18] sm:$0xf]
        %v2066 = vld [vmem:[%s2058 + $0x1c] sm:$0xf]
        %v2067 = vld [vmem:[%s2058 + $0x20] sm:$0xf]
        %v2068 = vld [vmem:[%s2058 + $0x24] sm:$0xf]
        %v2069 = vld [vmem:[%s2058 + $0x28] sm:$0xf]
        %v2070 = vld [vmem:[%s2058 + $0x2c] sm:$0xf]
        %v2071 = vld [vmem:[%s2058 + $0x30] sm:$0xf]
        %v2072 = vld [vmem:[%s2058 + $0x34] sm:$0xf]
        %v2073 = vld [vmem:[%s2058 + $0x38] sm:$0xf]
        %v2074 = vld [vmem:[%s2058 + $0x3c] sm:$0xf]
        %v2091 = vunpack.c.l.b16 %v2059
        %v2092 = vunpack.c.l.b16 %v2060
        %v2093 = vunpack.c.l.b16 %v2061
        %v2094 = vunpack.c.l.b16 %v2062
        %v2095 = vunpack.c.l.b16 %v2063
        %v2096 = vunpack.c.l.b16 %v2064
        %v2097 = vunpack.c.l.b16 %v2065
        %v2098 = vunpack.c.l.b16 %v2066
        %v2099 = vunpack.c.l.b16 %v2067
        %v2100 = vunpack.c.l.b16 %v2068
        %v2101 = vunpack.c.l.b16 %v2069
        %v2102 = vunpack.c.l.b16 %v2070
        %v2103 = vunpack.c.l.b16 %v2071
        %v2104 = vunpack.c.l.b16 %v2072
        %v2105 = vunpack.c.l.b16 %v2073
        %v2106 = vunpack.c.l.b16 %v2074
        %v2107 = vpack.c.b16 %v2092, %v2091
        %v2108 = vpack.c.b16 %v2094, %v2093
        %v2109 = vpack.c.b16 %v2096, %v2095
        %v2110 = vpack.c.b16 %v2098, %v2097
        %v2111 = vpack.c.b16 %v2100, %v2099
        %v2112 = vpack.c.b16 %v2102, %v2101
        %v2113 = vpack.c.b16 %v2104, %v2103
        %v2114 = vpack.c.b16 %v2106, %v2105
        %2123 = vmatprep.subr.bf16.mxu0 0
        %2124 = vmatpush1.bf16.msra.mxu0 %v2107
        %2125 = vmatprep.subr.bf16.mxu0 0
        %2126 = vmatpush1.bf16.msra.mxu0 %v2108
        %2127 = vmatprep.subr.bf16.mxu0 0
        %2128 = vmatpush1.bf16.msra.mxu0 %v2109
        %2129 = vmatprep.subr.bf16.mxu0 0
        %2130 = vmatpush1.bf16.msra.mxu0 %v2110
        %2131 = vmatprep.subr.bf16.mxu0 0
        %2132 = vmatpush1.bf16.msra.mxu0 %v2111
        %2133 = vmatprep.subr.bf16.mxu0 0
        %2134 = vmatpush1.bf16.msra.mxu0 %v2112
        %2135 = vmatprep.subr.bf16.mxu0 0
        %2136 = vmatpush1.bf16.msra.mxu0 %v2113
        %2137 = vmatprep.subr.bf16.mxu0 0
        %2138 = vmatpush1.bf16.msra.mxu0 %v2114
        %2139 = vmatprep.subr.bf16.mxu0 0
        %2140 = vmatpush1.bf16.msra.mxu0 0
        %2141 = vmatprep.subr.bf16.mxu0 0
        %2142 = vmatpush1.bf16.msra.mxu0 0
        %2143 = vmatprep.subr.bf16.mxu0 0
        %2144 = vmatpush1.bf16.msra.mxu0 0
        %2145 = vmatprep.subr.bf16.mxu0 0
        %2146 = vmatpush1.bf16.msra.mxu0 0
        %2147 = vmatprep.subr.bf16.mxu0 0
        %2148 = vmatpush1.bf16.msra.mxu0 0
        %2149 = vmatprep.subr.bf16.mxu0 0
        %2150 = vmatpush1.bf16.msra.mxu0 0
        %2151 = vmatprep.subr.bf16.mxu0 0
        %2152 = vmatpush1.bf16.msra.mxu0 0
        %2153 = vmatprep.subr.bf16.mxu0 0
        %2154 = vmatpush1.bf16.msra.mxu0 0
        %2155 = vmatprep.mubr.bf16.mxu0 0
        %2156 = vmatmul.mubr.bf16.gmra.mrb[0].mxu0 %v2056
        %v2157 = vpop.f32.mrb[0].mxu0
        %v2158 = vadd.f32 0.0, %v2157
        %v2159 = vpop.f32.mrb[0].mxu0
        %v2160 = vpop.f32.mrb[0].mxu0
        %v2161 = vadd.f32 0.0, %v2160
        %v2162 = vpop.f32.mrb[0].mxu0
        %2163 = vmatprep.mubr.bf16.mxu0 0
        %2164 = vmatmul.mubr.bf16.gmra.mrb[0].mxu0 %v2057
        %v2165 = vpop.f32.mrb[0].mxu0
        %v2166 = vadd.f32 0.0, %v2165
        %v2167 = vpop.f32.mrb[0].mxu0
        %v2168 = vpop.f32.mrb[0].mxu0
        %v2169 = vadd.f32 0.0, %v2168
        %v2170 = vpop.f32.mrb[0].mxu0
        %2171 = vdwg.mxu0
        %v2188 = vunpack.c.l.b16 %v2040
        %v2189 = vunpack.c.l.b16 %v2041
        %v2190 = vunpack.c.l.b16 %v2042
        %v2191 = vunpack.c.l.b16 %v2043
        %v2192 = vunpack.c.l.b16 %v2044
        %v2193 = vunpack.c.l.b16 %v2045
        %v2194 = vunpack.c.l.b16 %v2046
        %v2195 = vunpack.c.l.b16 %v2047
        %v2196 = vunpack.c.l.b16 %v2048
        %v2197 = vunpack.c.l.b16 %v2049
        %v2198 = vunpack.c.l.b16 %v2050
        %v2199 = vunpack.c.l.b16 %v2051
        %v2200 = vunpack.c.l.b16 %v2052
        %v2201 = vunpack.c.l.b16 %v2053
        %v2202 = vunpack.c.l.b16 %v2054
        %v2203 = vunpack.c.l.b16 %v2055
        %v2204 = vpack.c.b16 %v2189, %v2188
        %v2205 = vpack.c.b16 %v2191, %v2190
        %v2206 = vpack.c.b16 %v2193, %v2192
        %v2207 = vpack.c.b16 %v2195, %v2194
        %v2208 = vpack.c.b16 %v2197, %v2196
        %v2209 = vpack.c.b16 %v2199, %v2198
        %v2210 = vpack.c.b16 %v2201, %v2200
        %v2211 = vpack.c.b16 %v2203, %v2202
        %2220 = vmatprep.subr.bf16.mxu0 0
        %2221 = vmatpush1.bf16.msra.mxu0 %v2204
        %2222 = vmatprep.subr.bf16.mxu0 0
        %2223 = vmatpush1.bf16.msra.mxu0 %v2205
        %2224 = vmatprep.subr.bf16.mxu0 0
        %2225 = vmatpush1.bf16.msra.mxu0 %v2206
        %2226 = vmatprep.subr.bf16.mxu0 0
        %2227 = vmatpush1.bf16.msra.mxu0 %v2207
        %2228 = vmatprep.subr.bf16.mxu0 0
        %2229 = vmatpush1.bf16.msra.mxu0 %v2208
        %2230 = vmatprep.subr.bf16.mxu0 0
        %2231 = vmatpush1.bf16.msra.mxu0 %v2209
        %2232 = vmatprep.subr.bf16.mxu0 0
        %2233 = vmatpush1.bf16.msra.mxu0 %v2210
        %2234 = vmatprep.subr.bf16.mxu0 0
        %2235 = vmatpush1.bf16.msra.mxu0 %v2211
        %2236 = vmatprep.subr.bf16.mxu0 0
        %2237 = vmatpush1.bf16.msra.mxu0 0
        %2238 = vmatprep.subr.bf16.mxu0 0
        %2239 = vmatpush1.bf16.msra.mxu0 0
        %2240 = vmatprep.subr.bf16.mxu0 0
        %2241 = vmatpush1.bf16.msra.mxu0 0
        %2242 = vmatprep.subr.bf16.mxu0 0
        %2243 = vmatpush1.bf16.msra.mxu0 0
        %2244 = vmatprep.subr.bf16.mxu0 0
        %2245 = vmatpush1.bf16.msra.mxu0 0
        %2246 = vmatprep.subr.bf16.mxu0 0
        %2247 = vmatpush1.bf16.msra.mxu0 0
        %2248 = vmatprep.subr.bf16.mxu0 0
        %2249 = vmatpush1.bf16.msra.mxu0 0
        %2250 = vmatprep.subr.bf16.mxu0 0
        %2251 = vmatpush1.bf16.msra.mxu0 0
        %2252 = vmatprep.mubr.bf16.mxu0 0
        %2253 = vmatmul.mubr.bf16.gmra.mrb[0].mxu0 %v2038
        %v2254 = vpop.f32.mrb[0].mxu0
        %v2255 = vadd.f32 %v2158, %v2254
        %v2256 = vpop.f32.mrb[0].mxu0
        %v2257 = vpop.f32.mrb[0].mxu0
        %v2258 = vadd.f32 %v2161, %v2257
        %v2259 = vpop.f32.mrb[0].mxu0
        %2260 = vmatprep.mubr.bf16.mxu0 0
        %2261 = vmatmul.mubr.bf16.gmra.mrb[0].mxu0 %v2039
        %v2262 = vpop.f32.mrb[0].mxu0
        %v2263 = vadd.f32 %v2166, %v2262
        %v2264 = vpop.f32.mrb[0].mxu0
        %v2265 = vpop.f32.mrb[0].mxu0
        %v2266 = vadd.f32 %v2169, %v2265
        %v2267 = vpop.f32.mrb[0].mxu0
        %2268 = vdwg.mxu0
        %v2269 = vpack.c.bf16 %v2035, %v2034
        %v2270 = vpack.c.bf16 %v2037, %v2036
        %s2271 = scalar_lea.vmem %s12, 128
        %v2272 = vld [vmem:[%s2271] sm:$0xf]
        %v2273 = vld [vmem:[%s2271 + $0x4] sm:$0xf]
        %v2274 = vld [vmem:[%s2271 + $0x8] sm:$0xf]
        %v2275 = vld [vmem:[%s2271 + $0xc] sm:$0xf]
        %v2276 = vld [vmem:[%s2271 + $0x10] sm:$0xf]
        %v2277 = vld [vmem:[%s2271 + $0x14] sm:$0xf]
        %v2278 = vld [vmem:[%s2271 + $0x18] sm:$0xf]
        %v2279 = vld [vmem:[%s2271 + $0x1c] sm:$0xf]
        %v2280 = vld [vmem:[%s2271 + $0x20] sm:$0xf]
        %v2281 = vld [vmem:[%s2271 + $0x24] sm:$0xf]
        %v2282 = vld [vmem:[%s2271 + $0x28] sm:$0xf]
        %v2283 = vld [vmem:[%s2271 + $0x2c] sm:$0xf]
        %v2284 = vld [vmem:[%s2271 + $0x30] sm:$0xf]
        %v2285 = vld [vmem:[%s2271 + $0x34] sm:$0xf]
        %v2286 = vld [vmem:[%s2271 + $0x38] sm:$0xf]
        %v2287 = vld [vmem:[%s2271 + $0x3c] sm:$0xf]
        %v2304 = vunpack.c.l.b16 %v2272
        %v2305 = vunpack.c.l.b16 %v2273
        %v2306 = vunpack.c.l.b16 %v2274
        %v2307 = vunpack.c.l.b16 %v2275
        %v2308 = vunpack.c.l.b16 %v2276
        %v2309 = vunpack.c.l.b16 %v2277
        %v2310 = vunpack.c.l.b16 %v2278
        %v2311 = vunpack.c.l.b16 %v2279
        %v2312 = vunpack.c.l.b16 %v2280
        %v2313 = vunpack.c.l.b16 %v2281
        %v2314 = vunpack.c.l.b16 %v2282
        %v2315 = vunpack.c.l.b16 %v2283
        %v2316 = vunpack.c.l.b16 %v2284
        %v2317 = vunpack.c.l.b16 %v2285
        %v2318 = vunpack.c.l.b16 %v2286
        %v2319 = vunpack.c.l.b16 %v2287
        %v2320 = vpack.c.b16 %v2305, %v2304
        %v2321 = vpack.c.b16 %v2307, %v2306
        %v2322 = vpack.c.b16 %v2309, %v2308
        %v2323 = vpack.c.b16 %v2311, %v2310
        %v2324 = vpack.c.b16 %v2313, %v2312
        %v2325 = vpack.c.b16 %v2315, %v2314
        %v2326 = vpack.c.b16 %v2317, %v2316
        %v2327 = vpack.c.b16 %v2319, %v2318
        %2336 = vmatprep.subr.bf16.mxu0 0
        %2337 = vmatpush1.bf16.msra.mxu0 %v2320
        %2338 = vmatprep.subr.bf16.mxu0 0
        %2339 = vmatpush1.bf16.msra.mxu0 %v2321
        %2340 = vmatprep.subr.bf16.mxu0 0
        %2341 = vmatpush1.bf16.msra.mxu0 %v2322
        %2342 = vmatprep.subr.bf16.mxu0 0
        %2343 = vmatpush1.bf16.msra.mxu0 %v2323
        %2344 = vmatprep.subr.bf16.mxu0 0
        %2345 = vmatpush1.bf16.msra.mxu0 %v2324
        %2346 = vmatprep.subr.bf16.mxu0 0
        %2347 = vmatpush1.bf16.msra.mxu0 %v2325
        %2348 = vmatprep.subr.bf16.mxu0 0
        %2349 = vmatpush1.bf16.msra.mxu0 %v2326
        %2350 = vmatprep.subr.bf16.mxu0 0
        %2351 = vmatpush1.bf16.msra.mxu0 %v2327
        %2352 = vmatprep.subr.bf16.mxu0 0
        %2353 = vmatpush1.bf16.msra.mxu0 0
        %2354 = vmatprep.subr.bf16.mxu0 0
        %2355 = vmatpush1.bf16.msra.mxu0 0
        %2356 = vmatprep.subr.bf16.mxu0 0
        %2357 = vmatpush1.bf16.msra.mxu0 0
        %2358 = vmatprep.subr.bf16.mxu0 0
        %2359 = vmatpush1.bf16.msra.mxu0 0
        %2360 = vmatprep.subr.bf16.mxu0 0
        %2361 = vmatpush1.bf16.msra.mxu0 0
        %2362 = vmatprep.subr.bf16.mxu0 0
        %2363 = vmatpush1.bf16.msra.mxu0 0
        %2364 = vmatprep.subr.bf16.mxu0 0
        %2365 = vmatpush1.bf16.msra.mxu0 0
        %2366 = vmatprep.subr.bf16.mxu0 0
        %2367 = vmatpush1.bf16.msra.mxu0 0
        %2368 = vmatprep.mubr.bf16.mxu0 0
        %2369 = vmatmul.mubr.bf16.gmra.mrb[0].mxu0 %v2269
        %v2370 = vpop.f32.mrb[0].mxu0
        %v2371 = vadd.f32 0.0, %v2370
        %v2372 = vpop.f32.mrb[0].mxu0
        %v2373 = vpop.f32.mrb[0].mxu0
        %v2374 = vadd.f32 0.0, %v2373
        %v2375 = vpop.f32.mrb[0].mxu0
        %2376 = vmatprep.mubr.bf16.mxu0 0
        %2377 = vmatmul.mubr.bf16.gmra.mrb[0].mxu0 %v2270
        %v2378 = vpop.f32.mrb[0].mxu0
        %v2379 = vadd.f32 0.0, %v2378
        %v2380 = vpop.f32.mrb[0].mxu0
        %v2381 = vpop.f32.mrb[0].mxu0
        %v2382 = vadd.f32 0.0, %v2381
        %v2383 = vpop.f32.mrb[0].mxu0
        %2384 = vdwg.mxu0
        %v2385 = vadd.f32 %v2255, %v2371
        %v2386 = vadd.f32 %v2258, %v2374
        %v2387 = vadd.f32 %v2263, %v2379
        %v2388 = vadd.f32 %v2266, %v2382
        %v2389 = vld [vmem:[%s13] sm:$0x1]
        %v2391 = vlaneseq
        %v2392 = vshrl.u32 %v2391, 7
        %v2393 = vsub.s32 0, %v2392
        %v2394 = vrot.slane %v2389, %v2393
        %v2396 = vadd.f32 %v2385, %v2394
        %v2397 = vadd.f32 %v2386, %v2394
        %v2398 = vadd.f32 %v2387, %v2394
        %v2399 = vadd.f32 %v2388, %v2394
        %v2400 = vmax.f32 %v2396, 0.0
        %v2401 = vmax.f32 %v2397, 0.0
        %v2402 = vmax.f32 %v2398, 0.0
        %v2403 = vmax.f32 %v2399, 0.0
        %v2404 = vrot.slane %v2400, 7
        %v2405 = vrot.slane %v2401, 7
        %v2406 = vrot.slane %v2402, 7
        %v2407 = vrot.slane %v2403, 7
        %v2408 = vsel %vm693, %v2406, %v2407
        %v2409 = vsel %vm693, %v2405, %v2406
        %v2410 = vsel %vm693, %v2404, %v2405
        %v2411 = vsel %vm693, %v2407, %v2404
        %v2412 = vsel %vm689, %v2411, 0.0
        %v2413 = vsel %vm690, %v2410, 0.0
        %v2414 = vsel %vm2008, %v2409, 0.0
        %v2415 = vsel %vm2009, %v2408, 0.0
        %v2416 = vrot.slane %v2400, 1
        %v2417 = vrot.slane %v2401, 1
        %v2418 = vrot.slane %v2402, 1
        %v2419 = vrot.slane %v2403, 1
        %v2420 = vsel %vm702, %v2418, %v2419
        %v2421 = vsel %vm702, %v2417, %v2418
        %v2422 = vsel %vm702, %v2416, %v2417
        %v2423 = vsel %vm702, %v2419, %v2416
        %v2424 = vsel %vm2022, %v2422, 0.0
        %v2425 = vsel %vm2023, %v2421, 0.0
        %v2426 = vsel %vm2024, %v2420, 0.0
        %v2427 = vsel %vm2025, %v2423, 0.0
        %v2428 = vpack.c.bf16 %v2413, %v2412
        %v2429 = vpack.c.bf16 %v2415, %v2414
        %v2430 = vld [vmem:[#allocation13] sm:$0xf]
        %v2431 = vld [vmem:[#allocation13 + $0x4] sm:$0xf]
        %v2432 = vld [vmem:[#allocation13 + $0x8] sm:$0xf]
        %v2433 = vld [vmem:[#allocation13 + $0xc] sm:$0xf]
        %v2434 = vld [vmem:[#allocation13 + $0x10] sm:$0xf]
        %v2435 = vld [vmem:[#allocation13 + $0x14] sm:$0xf]
        %v2436 = vld [vmem:[#allocation13 + $0x18] sm:$0xf]
        %v2437 = vld [vmem:[#allocation13 + $0x1c] sm:$0xf]
        %v2438 = vld [vmem:[#allocation13 + $0x20] sm:$0xf]
        %v2439 = vld [vmem:[#allocation13 + $0x24] sm:$0xf]
        %v2440 = vld [vmem:[#allocation13 + $0x28] sm:$0xf]
        %v2441 = vld [vmem:[#allocation13 + $0x2c] sm:$0xf]
        %v2442 = vld [vmem:[#allocation13 + $0x30] sm:$0xf]
        %v2443 = vld [vmem:[#allocation13 + $0x34] sm:$0xf]
        %v2444 = vld [vmem:[#allocation13 + $0x38] sm:$0xf]
        %v2445 = vld [vmem:[#allocation13 + $0x3c] sm:$0xf]
        %v2446 = vpack.c.bf16 %v2401, %v2400
        %v2447 = vpack.c.bf16 %v2403, %v2402
        %s2448 = scalar_lea.vmem [#allocation13], 64
        %v2449 = vld [vmem:[%s2448] sm:$0xf]
        %v2450 = vld [vmem:[%s2448 + $0x4] sm:$0xf]
        %v2451 = vld [vmem:[%s2448 + $0x8] sm:$0xf]
        %v2452 = vld [vmem:[%s2448 + $0xc] sm:$0xf]
        %v2453 = vld [vmem:[%s2448 + $0x10] sm:$0xf]
        %v2454 = vld [vmem:[%s2448 + $0x14] sm:$0xf]
        %v2455 = vld [vmem:[%s2448 + $0x18] sm:$0xf]
        %v2456 = vld [vmem:[%s2448 + $0x1c] sm:$0xf]
        %v2457 = vld [vmem:[%s2448 + $0x20] sm:$0xf]
        %v2458 = vld [vmem:[%s2448 + $0x24] sm:$0xf]
        %v2459 = vld [vmem:[%s2448 + $0x28] sm:$0xf]
        %v2460 = vld [vmem:[%s2448 + $0x2c] sm:$0xf]
        %v2461 = vld [vmem:[%s2448 + $0x30] sm:$0xf]
        %v2462 = vld [vmem:[%s2448 + $0x34] sm:$0xf]
        %v2463 = vld [vmem:[%s2448 + $0x38] sm:$0xf]
        %v2464 = vld [vmem:[%s2448 + $0x3c] sm:$0xf]
        %v2481 = vunpack.c.l.b16 %v2449
        %v2482 = vunpack.c.l.b16 %v2450
        %v2483 = vunpack.c.l.b16 %v2451
        %v2484 = vunpack.c.l.b16 %v2452
        %v2485 = vunpack.c.l.b16 %v2453
        %v2486 = vunpack.c.l.b16 %v2454
        %v2487 = vunpack.c.l.b16 %v2455
        %v2488 = vunpack.c.l.b16 %v2456
        %v2489 = vunpack.c.l.b16 %v2457
        %v2490 = vunpack.c.l.b16 %v2458
        %v2491 = vunpack.c.l.b16 %v2459
        %v2492 = vunpack.c.l.b16 %v2460
        %v2493 = vunpack.c.l.b16 %v2461
        %v2494 = vunpack.c.l.b16 %v2462
        %v2495 = vunpack.c.l.b16 %v2463
        %v2496 = vunpack.c.l.b16 %v2464
        %v2497 = vpack.c.b16 %v2482, %v2481
        %v2498 = vpack.c.b16 %v2484, %v2483
        %v2499 = vpack.c.b16 %v2486, %v2485
        %v2500 = vpack.c.b16 %v2488, %v2487
        %v2501 = vpack.c.b16 %v2490, %v2489
        %v2502 = vpack.c.b16 %v2492, %v2491
        %v2503 = vpack.c.b16 %v2494, %v2493
        %v2504 = vpack.c.b16 %v2496, %v2495
        %2513 = vmatprep.subr.bf16.mxu0 0
        %2514 = vmatpush1.bf16.msra.mxu0 %v2497
        %2515 = vmatprep.subr.bf16.mxu0 0
        %2516 = vmatpush1.bf16.msra.mxu0 %v2498
        %2517 = vmatprep.subr.bf16.mxu0 0
        %2518 = vmatpush1.bf16.msra.mxu0 %v2499
        %2519 = vmatprep.subr.bf16.mxu0 0
        %2520 = vmatpush1.bf16.msra.mxu0 %v2500
        %2521 = vmatprep.subr.bf16.mxu0 0
        %2522 = vmatpush1.bf16.msra.mxu0 %v2501
        %2523 = vmatprep.subr.bf16.mxu0 0
        %2524 = vmatpush1.bf16.msra.mxu0 %v2502
        %2525 = vmatprep.subr.bf16.mxu0 0
        %2526 = vmatpush1.bf16.msra.mxu0 %v2503
        %2527 = vmatprep.subr.bf16.mxu0 0
        %2528 = vmatpush1.bf16.msra.mxu0 %v2504
        %2529 = vmatprep.subr.bf16.mxu0 0
        %2530 = vmatpush1.bf16.msra.mxu0 0
        %2531 = vmatprep.subr.bf16.mxu0 0
        %2532 = vmatpush1.bf16.msra.mxu0 0
        %2533 = vmatprep.subr.bf16.mxu0 0
        %2534 = vmatpush1.bf16.msra.mxu0 0
        %2535 = vmatprep.subr.bf16.mxu0 0
        %2536 = vmatpush1.bf16.msra.mxu0 0
        %2537 = vmatprep.subr.bf16.mxu0 0
        %2538 = vmatpush1.bf16.msra.mxu0 0
        %2539 = vmatprep.subr.bf16.mxu0 0
        %2540 = vmatpush1.bf16.msra.mxu0 0
        %2541 = vmatprep.subr.bf16.mxu0 0
        %2542 = vmatpush1.bf16.msra.mxu0 0
        %2543 = vmatprep.subr.bf16.mxu0 0
        %2544 = vmatpush1.bf16.msra.mxu0 0
        %2545 = vmatprep.mubr.bf16.mxu0 0
        %2546 = vmatmul.mubr.bf16.gmra.mrb[0].mxu0 %v2446
        %v2547 = vpop.f32.mrb[0].mxu0
        %v2548 = vadd.f32 0.0, %v2547
        %v2549 = vpop.f32.mrb[0].mxu0
        %v2550 = vpop.f32.mrb[0].mxu0
        %v2551 = vadd.f32 0.0, %v2550
        %v2552 = vpop.f32.mrb[0].mxu0
        %2553 = vmatprep.mubr.bf16.mxu0 0
        %2554 = vmatmul.mubr.bf16.gmra.mrb[0].mxu0 %v2447
        %v2555 = vpop.f32.mrb[0].mxu0
        %v2556 = vadd.f32 0.0, %v2555
        %v2557 = vpop.f32.mrb[0].mxu0
        %v2558 = vpop.f32.mrb[0].mxu0
        %v2559 = vadd.f32 0.0, %v2558
        %v2560 = vpop.f32.mrb[0].mxu0
        %2561 = vdwg.mxu0
        %v2578 = vunpack.c.l.b16 %v2430
        %v2579 = vunpack.c.l.b16 %v2431
        %v2580 = vunpack.c.l.b16 %v2432
        %v2581 = vunpack.c.l.b16 %v2433
        %v2582 = vunpack.c.l.b16 %v2434
        %v2583 = vunpack.c.l.b16 %v2435
        %v2584 = vunpack.c.l.b16 %v2436
        %v2585 = vunpack.c.l.b16 %v2437
        %v2586 = vunpack.c.l.b16 %v2438
        %v2587 = vunpack.c.l.b16 %v2439
        %v2588 = vunpack.c.l.b16 %v2440
        %v2589 = vunpack.c.l.b16 %v2441
        %v2590 = vunpack.c.l.b16 %v2442
        %v2591 = vunpack.c.l.b16 %v2443
        %v2592 = vunpack.c.l.b16 %v2444
        %v2593 = vunpack.c.l.b16 %v2445
        %v2594 = vpack.c.b16 %v2579, %v2578
        %v2595 = vpack.c.b16 %v2581, %v2580
        %v2596 = vpack.c.b16 %v2583, %v2582
        %v2597 = vpack.c.b16 %v2585, %v2584
        %v2598 = vpack.c.b16 %v2587, %v2586
        %v2599 = vpack.c.b16 %v2589, %v2588
        %v2600 = vpack.c.b16 %v2591, %v2590
        %v2601 = vpack.c.b16 %v2593, %v2592
        %2610 = vmatprep.subr.bf16.mxu0 0
        %2611 = vmatpush1.bf16.msra.mxu0 %v2594
        %2612 = vmatprep.subr.bf16.mxu0 0
        %2613 = vmatpush1.bf16.msra.mxu0 %v2595
        %2614 = vmatprep.subr.bf16.mxu0 0
        %2615 = vmatpush1.bf16.msra.mxu0 %v2596
        %2616 = vmatprep.subr.bf16.mxu0 0
        %2617 = vmatpush1.bf16.msra.mxu0 %v2597
        %2618 = vmatprep.subr.bf16.mxu0 0
        %2619 = vmatpush1.bf16.msra.mxu0 %v2598
        %2620 = vmatprep.subr.bf16.mxu0 0
        %2621 = vmatpush1.bf16.msra.mxu0 %v2599
        %2622 = vmatprep.subr.bf16.mxu0 0
        %2623 = vmatpush1.bf16.msra.mxu0 %v2600
        %2624 = vmatprep.subr.bf16.mxu0 0
        %2625 = vmatpush1.bf16.msra.mxu0 %v2601
        %2626 = vmatprep.subr.bf16.mxu0 0
        %2627 = vmatpush1.bf16.msra.mxu0 0
        %2628 = vmatprep.subr.bf16.mxu0 0
        %2629 = vmatpush1.bf16.msra.mxu0 0
        %2630 = vmatprep.subr.bf16.mxu0 0
        %2631 = vmatpush1.bf16.msra.mxu0 0
        %2632 = vmatprep.subr.bf16.mxu0 0
        %2633 = vmatpush1.bf16.msra.mxu0 0
        %2634 = vmatprep.subr.bf16.mxu0 0
        %2635 = vmatpush1.bf16.msra.mxu0 0
        %2636 = vmatprep.subr.bf16.mxu0 0
        %2637 = vmatpush1.bf16.msra.mxu0 0
        %2638 = vmatprep.subr.bf16.mxu0 0
        %2639 = vmatpush1.bf16.msra.mxu0 0
        %2640 = vmatprep.subr.bf16.mxu0 0
        %2641 = vmatpush1.bf16.msra.mxu0 0
        %2642 = vmatprep.mubr.bf16.mxu0 0
        %2643 = vmatmul.mubr.bf16.gmra.mrb[0].mxu0 %v2428
        %v2644 = vpop.f32.mrb[0].mxu0
        %v2645 = vadd.f32 %v2548, %v2644
        %v2646 = vpop.f32.mrb[0].mxu0
        %v2647 = vpop.f32.mrb[0].mxu0
        %v2648 = vadd.f32 %v2551, %v2647
        %v2649 = vpop.f32.mrb[0].mxu0
        %2650 = vmatprep.mubr.bf16.mxu0 0
        %2651 = vmatmul.mubr.bf16.gmra.mrb[0].mxu0 %v2429
        %v2652 = vpop.f32.mrb[0].mxu0
        %v2653 = vadd.f32 %v2556, %v2652
        %v2654 = vpop.f32.mrb[0].mxu0
        %v2655 = vpop.f32.mrb[0].mxu0
        %v2656 = vadd.f32 %v2559, %v2655
        %v2657 = vpop.f32.mrb[0].mxu0
        %2658 = vdwg.mxu0
        %v2659 = vpack.c.bf16 %v2425, %v2424
        %v2660 = vpack.c.bf16 %v2427, %v2426
        %s2661 = scalar_lea.vmem [#allocation13], 128
        %v2662 = vld [vmem:[%s2661] sm:$0xf]
        %v2663 = vld [vmem:[%s2661 + $0x4] sm:$0xf]
        %v2664 = vld [vmem:[%s2661 + $0x8] sm:$0xf]
        %v2665 = vld [vmem:[%s2661 + $0xc] sm:$0xf]
        %v2666 = vld [vmem:[%s2661 + $0x10] sm:$0xf]
        %v2667 = vld [vmem:[%s2661 + $0x14] sm:$0xf]
        %v2668 = vld [vmem:[%s2661 + $0x18] sm:$0xf]
        %v2669 = vld [vmem:[%s2661 + $0x1c] sm:$0xf]
        %v2670 = vld [vmem:[%s2661 + $0x20] sm:$0xf]
        %v2671 = vld [vmem:[%s2661 + $0x24] sm:$0xf]
        %v2672 = vld [vmem:[%s2661 + $0x28] sm:$0xf]
        %v2673 = vld [vmem:[%s2661 + $0x2c] sm:$0xf]
        %v2674 = vld [vmem:[%s2661 + $0x30] sm:$0xf]
        %v2675 = vld [vmem:[%s2661 + $0x34] sm:$0xf]
        %v2676 = vld [vmem:[%s2661 + $0x38] sm:$0xf]
        %v2677 = vld [vmem:[%s2661 + $0x3c] sm:$0xf]
        %v2694 = vunpack.c.l.b16 %v2662
        %v2695 = vunpack.c.l.b16 %v2663
        %v2696 = vunpack.c.l.b16 %v2664
        %v2697 = vunpack.c.l.b16 %v2665
        %v2698 = vunpack.c.l.b16 %v2666
        %v2699 = vunpack.c.l.b16 %v2667
        %v2700 = vunpack.c.l.b16 %v2668
        %v2701 = vunpack.c.l.b16 %v2669
        %v2702 = vunpack.c.l.b16 %v2670
        %v2703 = vunpack.c.l.b16 %v2671
        %v2704 = vunpack.c.l.b16 %v2672
        %v2705 = vunpack.c.l.b16 %v2673
        %v2706 = vunpack.c.l.b16 %v2674
        %v2707 = vunpack.c.l.b16 %v2675
        %v2708 = vunpack.c.l.b16 %v2676
        %v2709 = vunpack.c.l.b16 %v2677
        %v2710 = vpack.c.b16 %v2695, %v2694
        %v2711 = vpack.c.b16 %v2697, %v2696
        %v2712 = vpack.c.b16 %v2699, %v2698
        %v2713 = vpack.c.b16 %v2701, %v2700
        %v2714 = vpack.c.b16 %v2703, %v2702
        %v2715 = vpack.c.b16 %v2705, %v2704
        %v2716 = vpack.c.b16 %v2707, %v2706
        %v2717 = vpack.c.b16 %v2709, %v2708
        %2726 = vmatprep.subr.bf16.mxu0 0
        %2727 = vmatpush1.bf16.msra.mxu0 %v2710
        %2728 = vmatprep.subr.bf16.mxu0 0
        %2729 = vmatpush1.bf16.msra.mxu0 %v2711
        %2730 = vmatprep.subr.bf16.mxu0 0
        %2731 = vmatpush1.bf16.msra.mxu0 %v2712
        %2732 = vmatprep.subr.bf16.mxu0 0
        %2733 = vmatpush1.bf16.msra.mxu0 %v2713
        %2734 = vmatprep.subr.bf16.mxu0 0
        %2735 = vmatpush1.bf16.msra.mxu0 %v2714
        %2736 = vmatprep.subr.bf16.mxu0 0
        %2737 = vmatpush1.bf16.msra.mxu0 %v2715
        %2738 = vmatprep.subr.bf16.mxu0 0
        %2739 = vmatpush1.bf16.msra.mxu0 %v2716
        %2740 = vmatprep.subr.bf16.mxu0 0
        %2741 = vmatpush1.bf16.msra.mxu0 %v2717
        %2742 = vmatprep.subr.bf16.mxu0 0
        %2743 = vmatpush1.bf16.msra.mxu0 0
        %2744 = vmatprep.subr.bf16.mxu0 0
        %2745 = vmatpush1.bf16.msra.mxu0 0
        %2746 = vmatprep.subr.bf16.mxu0 0
        %2747 = vmatpush1.bf16.msra.mxu0 0
        %2748 = vmatprep.subr.bf16.mxu0 0
        %2749 = vmatpush1.bf16.msra.mxu0 0
        %2750 = vmatprep.subr.bf16.mxu0 0
        %2751 = vmatpush1.bf16.msra.mxu0 0
        %2752 = vmatprep.subr.bf16.mxu0 0
        %2753 = vmatpush1.bf16.msra.mxu0 0
        %2754 = vmatprep.subr.bf16.mxu0 0
        %2755 = vmatpush1.bf16.msra.mxu0 0
        %2756 = vmatprep.subr.bf16.mxu0 0
        %2757 = vmatpush1.bf16.msra.mxu0 0
        %2758 = vmatprep.mubr.bf16.mxu0 0
        %2759 = vmatmul.mubr.bf16.gmra.mrb[0].mxu0 %v2659
        %v2760 = vpop.f32.mrb[0].mxu0
        %v2761 = vadd.f32 0.0, %v2760
        %v2762 = vpop.f32.mrb[0].mxu0
        %v2763 = vpop.f32.mrb[0].mxu0
        %v2764 = vadd.f32 0.0, %v2763
        %v2765 = vpop.f32.mrb[0].mxu0
        %2766 = vmatprep.mubr.bf16.mxu0 0
        %2767 = vmatmul.mubr.bf16.gmra.mrb[0].mxu0 %v2660
        %v2768 = vpop.f32.mrb[0].mxu0
        %v2769 = vadd.f32 0.0, %v2768
        %v2770 = vpop.f32.mrb[0].mxu0
        %v2771 = vpop.f32.mrb[0].mxu0
        %v2772 = vadd.f32 0.0, %v2771
        %v2773 = vpop.f32.mrb[0].mxu0
        %2774 = vdwg.mxu0
        %v2775 = vadd.f32 %v2645, %v2761
        %v2776 = vadd.f32 %v2648, %v2764
        %v2777 = vadd.f32 %v2653, %v2769
        %v2778 = vadd.f32 %v2656, %v2772
        %v2779 = vld [vmem:[%s15] sm:$0x1]
        %v2781 = vlaneseq
        %v2782 = vshrl.u32 %v2781, 7
        %v2783 = vsub.s32 0, %v2782
        %v2784 = vrot.slane %v2779, %v2783
        %v2786 = vadd.f32 %v2775, %v2784
        %v2787 = vadd.f32 %v2776, %v2784
        %v2788 = vadd.f32 %v2777, %v2784
        %v2789 = vadd.f32 %v2778, %v2784
        %v2790 = vadd.f32 %v2786, %v1998
        %v2791 = vadd.f32 %v2787, %v1999
        %v2792 = vadd.f32 %v2788, %v2000
        %v2793 = vadd.f32 %v2789, %v2001
        %2794 = vst [vmem:[%s674] sm:$0xff] %v2790
        %2795 = vst [vmem:[%s674 + $0x8] sm:$0xff] %v2791
        %2796 = vst [vmem:[%s674 + $0x10] sm:$0xff] %v2792
        %2797 = vst [vmem:[%s674 + $0x18] sm:$0xff] %v2793
        %s2798 = sand.u32 %s397, 1
        %s2799 = scalar_lea.sflag [#allocation4], %s2798
        %s2800 = sand.u32 %s397, 1
        %s2801 = smul.addr %s2800, 32
        %s2802 = scalar_lea.vmem [#allocation14], %s2801
        // Predicated region
        $region113: #{tpu_custom_call.1} parent=83 // pred_check
          %p2803 = pneg %p407
        $region114: #{tpu_custom_call.1} parent=83 // pred_check_branch
          %2805 = sbr.rel (%p2803) target = $region116
        $region115: #{tpu_custom_call.1} parent=83 // pred_region
          %s2807 = ssub.s32 512, 512
          %2808 = vsyncadd %s2799, %s2807
          %s2809 = smul.addr %s38, 4
          %s2810 = smul.addr %s2809, 128
          %s2811 = scalar_lea.hbm %s16, %s2810
          %s2812 = sshll.u32 %s2802, 4
          %s2813 = int_to_ptr.vmem [resolvable:$true] %s2812
          %2818 = dma.vmem_to_hbm [thread:$0]  %s2813, 512, %s2811, %s2799, 128, 128, 8
        $region116: #{tpu_custom_call.1} parent=83 // pred_fallthru
          _
      $region84: #{tpu_custom_call.1} parent=5 // pred_fallthru
        _
      %p2819 = scmp.le.s32.totalorder 2, %s33
      // Predicated region
      $region117: #{tpu_custom_call.1} parent=5 // pred_check
        %p2820 = pneg %p2819
      $region118: #{tpu_custom_call.1} parent=5 // pred_check_branch
        %2822 = sbr.rel (%p2820) target = $region120
      $region119: #{tpu_custom_call.1} parent=5 // pred_region
        %s2823 = ssub.s32 %s33, 2
        // Predicated region
        $region121: #{tpu_custom_call.1} parent=119 // pred_check
          %p2824 = pneg %p413
        $region122: #{tpu_custom_call.1} parent=119 // pred_check_branch
          %2826 = sbr.rel (%p2824) target = $region124
        $region123: #{tpu_custom_call.1} parent=119 // pred_region
          %s2827 = sand.u32 %s398, 1
          %s2828 = scalar_lea.sflag [#allocation4], %s2827
          %s2829 = sand.u32 %s398, 1
          %s2830 = smul.addr %s2829, 32
          %s2831 = scalar_lea.vmem [#allocation14], %s2830
          %2832 = dma.done %s2828, 512
        $region124: #{tpu_custom_call.1} parent=119 // pred_fallthru
          _
      $region120: #{tpu_custom_call.1} parent=5 // pred_fallthru
        _
    $region6: #{tpu_custom_call.1} parent=1 // loop_footer
      %s37 = sadd.s32 1, %s33
    $region7: #{tpu_custom_call.1} parent=1 // loop_footer_branch
      %32 = sbr.rel target = $region3
    $region8: #{tpu_custom_call.1} parent=1 // loop_exit
      _
    %2833 = vsyncpa [#allocation3], 1
    %s2834 = scalar_lea.sflag [#allocation3], 1
    %2835 = vsyncpa %s2834, 1
    %2836 = vsyncpa [#allocation6], 1
    %s2837 = scalar_lea.sflag [#allocation6], 1
    %2838 = vsyncpa %s2837, 1
    %2839 = vsyncpa [#allocation9], 1
    %2840 = vsyncpa [#allocation12], 1
    %2841 = vsyncpa [#allocation4], 1
    %s2842 = scalar_lea.sflag [#allocation4], 1
    %2843 = vsyncpa %s2842, 1

</llo_original>
